<compile_context>
chip_gen: v6e
topology: v6e:2x2x1
jax: 0.10.0
libtpu: 0.0.40
codegen_flags: <defaults>
</compile_context>

<pallas_src>
import math
import jax
import jax.numpy as jnp
from jax.experimental import pallas as pl
from jax.experimental.pallas import tpu as pltpu

# ----------------------------- small config ---------------------------------
BATCH = 2
IMG = 16
IN_CHANS = 3
PATCH = 4
EMBED = 32
NUM_BLOCKS = 2
NUM_CLASSES = 10
MLP_RATIO = (0.5, 4.0)
HIDDEN_RATIO = 1.0
N_POWER_ITER = 8
N_REPEAT = 2
LN_EPS = 1e-6
COEFF = 0.9
USE_TANH_GELU = True           # True: EUP-friendly tanh GELU; False: exact-erf polynomial (VPU)
USE_BF16_MATMUL = True         # bf16 MXU operands (v6e/v7x native); elementwise math stays f32

SEQ = (IMG // PATCH) ** 2                # 16 patches
TOK_DIM = int(MLP_RATIO[0] * EMBED)      # 16
HID_DIM = int(TOK_DIM * HIDDEN_RATIO)    # 16
CH_DIM = int(MLP_RATIO[1] * EMBED)       # 128
PATCH_DIM = IN_CHANS * PATCH * PATCH     # 48
BD = BATCH * EMBED                       # 64 : lane width of the sequence-major residual stream
MXU_DT = jnp.bfloat16 if USE_BF16_MATMUL else jnp.float32

_LANES = 128                             # slab width (one lane tile)
_ROW_ALIGN = 16                          # sublane-tile alignment (covers f32 (8,·) and bf16 (16,·))


# --------------------------- elementwise helpers ------------------------------
def _erf(x):
    # Abramowitz & Stegun 7.1.26 (|err| < 1.5e-7) -- exp/poly only, lowers on Mosaic.
    a1, a2, a3, a4, a5 = 0.254829592, -0.284496736, 1.421413741, -1.453152027, 1.061405429
    p = 0.3275911
    s = jnp.sign(x)
    ax = jnp.abs(x)
    t = 1.0 / (1.0 + p * ax)
    y = 1.0 - (((((a5 * t + a4) * t) + a3) * t + a2) * t + a1) * t * jnp.exp(-ax * ax)
    return s * y


def _gelu(x):
    if USE_TANH_GELU:
        # tanh lands on the EUP slot; ~1e-3 max abs deviation from exact-erf GELU.
        return 0.5 * x * (1.0 + jnp.tanh(0.7978845608028654 * (x + 0.044715 * x * x * x)))
    return 0.5 * x * (1.0 + _erf(x * 0.7071067811865476))


def _layernorm_raw(x):
    # LayerNorm without affine (used by the pure-JAX reference).
    mu = jnp.mean(x, axis=-1, keepdims=True)
    xc = x - mu
    var = jnp.mean(xc * xc, axis=-1, keepdims=True)
    return xc * jax.lax.rsqrt(var + LN_EPS)


# ------------------------------ slab packing ----------------------------------
def _block_diag(m, n):
    r, c = m.shape
    out = jnp.zeros((n * r, n * c), m.dtype)
    for b in range(n):
        out = out.at[b * r:(b + 1) * r, b * c:(b + 1) * c].set(m)
    return out


class _SlabPacker:
    """Packs many small parameter arrays into one (rows, 128) slab -> a single input DMA.
    Row offsets are static Python ints baked into the kernel as slab views."""

    def __init__(self, dtype):
        self.dtype = dtype
        self.entries = []
        self.index = {}            # name -> (row_offset, rows, cols)
        self.rows = 0

    def add(self, name, arr):
        arr = jnp.asarray(arr, jnp.float32)
        r, c = arr.shape
        assert c <= _LANES, (name, arr.shape)
        self.index[name] = (self.rows, r, c)
        self.entries.append((self.rows, arr))
        self.rows += -(-r // _ROW_ALIGN) * _ROW_ALIGN

    def build(self):
        slab = jnp.zeros((self.rows, _LANES), self.dtype)
        for off, arr in self.entries:
            r, c = arr.shape
            slab = slab.at[off:off + r, :c].set(arr.astype(self.dtype))
        return slab


def pack_params(params):
    """Fold LN affines where exact, re-lay out for the sequence-major kernel, and pack into two
    slabs: matmul weights (MXU_DT) and f32 biases / LN constants."""
    stem_w, stem_b, blocks, norm_g, norm_b, head_w, head_b = params
    wp = _SlabPacker(MXU_DT)
    vp = _SlabPacker(jnp.float32)

    # segmented-LN averaging matrix: block-diag(ones(D,D)/D) over the batch lane segments.
    seg = jnp.repeat(jnp.arange(BATCH), EMBED)
    lnmask = (seg[:, None] == seg[None, :]).astype(jnp.float32) / EMBED
    vp.add('lnmask', lnmask)

    # stem, block-diagonal over batch: (SEQ, B*P) @ (B*P, B*D)
    wp.add('stem', _block_diag(stem_w, BATCH))
    vp.add('stem_b', jnp.tile(stem_b, (1, BATCH)))

    for i, bp in enumerate(blocks):
        (n1g, n1b, tw1, tb1, tws1, tbs1, tws2, tbs2, tw2, tb2,
         n2g, n2b, cw1, cb1, cw2, cb2) = bp
        # norm1 affine cannot be folded (token matmul contracts over SEQ) -> applied in-kernel.
        vp.add(f'n1g{i}', jnp.tile(n1g, (1, BATCH)))
        vp.add(f'n1b{i}', jnp.tile(n1b, (1, BATCH)))
        # token-mixing weights; biases pre-broadcast so the unrolled loop emits no broadcasts.
        wp.add(f'tw1{i}', tw1)
        wp.add(f'tws1{i}', tws1)
        wp.add(f'tws2{i}', tws2)
        wp.add(f'tw2{i}', tw2)
        vp.add(f'tb1{i}', jnp.broadcast_to(tb1, (TOK_DIM, BD)))
        vp.add(f'tbs1{i}', jnp.broadcast_to(tbs1, (HID_DIM, BD)))
        vp.add(f'tbs2{i}', jnp.broadcast_to(tbs2, (TOK_DIM, BD)))
        vp.add(f'tb2{i}', jnp.broadcast_to(tb2, (SEQ, BD)))
        # channel mixing: fold norm2 affine into fc1 (exact), then split per batch lane segment.
        cw1_f = n2g.reshape(-1, 1) * cw1                            # (D, C)
        cb1_f = n2b @ cw1 + cb1                                     # (1, C)
        zd = jnp.zeros_like(cw1_f)
        wp.add(f'cw1a{i}', jnp.concatenate([cw1_f, zd], axis=0))    # (B*D, C): batch-0 rows live
        wp.add(f'cw1b{i}', jnp.concatenate([zd, cw1_f], axis=0))    # (B*D, C): batch-1 rows live
        vp.add(f'cb1{i}', cb1_f)
        zc = jnp.zeros_like(cw2)
        wp.add(f'cw2a{i}', jnp.concatenate([cw2, zc], axis=1))      # (C, B*D): batch-0 lanes live
        wp.add(f'cw2b{i}', jnp.concatenate([zc, cw2], axis=1))      # (C, B*D): batch-1 lanes live
        vp.add(f'cb2{i}', jnp.tile(cb2, (1, BATCH)))

    # final norm folds exactly into the head (mean-pool commutes with the per-channel affine).
    head_w_f = norm_g.reshape(-1, 1) * head_w                       # (D, NC)
    head_b_f = norm_b @ head_w + head_b                             # (1, NC)
    head_bd = _block_diag(head_w_f, BATCH)                          # (B*D, B*NC)
    pad = _LANES - BATCH * NUM_CLASSES
    wp.add('head', jnp.pad(head_bd, ((0, 0), (0, pad))))            # lane-dense (B*D, 128)
    vp.add('head_b', jnp.pad(jnp.tile(head_b_f, (1, BATCH)), ((0, 0), (0, pad))))

    return wp.build(), vp.build(), wp.index, vp.index


# ------------------------------ fused kernel ----------------------------------
def make_mixer_kernel(w_index, v_index):
    """Build the fused kernel; slab row offsets are baked in as static Python ints."""

    def kernel(p_ref, w_ref, v_ref, out_ref):
        def W(name):                               # point-of-use weight view (MXU dtype)
            off, r, c = w_index[name]
            return w_ref[off:off + r, :c]

        def V(name):                               # point-of-use f32 bias / LN constant view
            off, r, c = v_index[name]
            return v_ref[off:off + r, :c]

        def dot_rw(a, name):                       # f32 activation @ slab weight, f32 accumulate
            return jnp.dot(a.astype(MXU_DT), W(name), preferred_element_type=jnp.float32)

        def dot_lw(name, a):                       # slab weight @ f32 activation (contracts over SEQ)
            return jnp.dot(W(name), a.astype(MXU_DT), preferred_element_type=jnp.float32)

        def seg_layernorm(x):
            # LayerNorm over each batch's EMBED-lane segment of the (SEQ, B*D) layout.
            # Per-segment mean/var come from an exact f32 matmul with a constant block-diagonal
            # averaging matrix -> no lane slicing / XLU relayout.
            m = V('lnmask')                                        # (B*D, B*D) f32
            mu = jnp.dot(x, m, preferred_element_type=jnp.float32)
            xc = x - mu
            var = jnp.dot(xc * xc, m, preferred_element_type=jnp.float32)
            return xc * jax.lax.rsqrt(var + LN_EPS)

        # ---- stem: block-diagonal patch embedding -> residual stream (SEQ, B*D) ----
        x = dot_rw(p_ref[...], 'stem') + V('stem_b')

        for i in range(NUM_BLOCKS):
            # ---- token mixing: iMlp over the sequence axis (no transpose needed) ----
            xn = seg_layernorm(x) * V(f'n1g{i}') + V(f'n1b{i}')    # (SEQ, B*D)
            h = dot_lw(f'tw1{i}', xn) + V(f'tb1{i}')               # (TOK, B*D)
            tws1 = W(f'tws1{i}')
            tws2 = W(f'tws2{i}')
            tbs1 = V(f'tbs1{i}')                                   # pre-broadcast (HID, B*D)
            tbs2 = V(f'tbs2{i}')                                   # pre-broadcast (TOK, B*D)
            h_in = h
            for _ in range(N_REPEAT):                              # fixed-point iterations (unrolled)
                u = jnp.dot(tws1, _gelu(h).astype(MXU_DT),
                            preferred_element_type=jnp.float32) + tbs1
                h = jnp.dot(tws2, _gelu(u).astype(MXU_DT),
                            preferred_element_type=jnp.float32) + tbs2 + h_in
            tok = dot_lw(f'tw2{i}', _gelu(h)) + V(f'tb2{i}')       # (SEQ, B*D)
            x = x + tok                                            # residual

            # ---- channel mixing (norm2 affine pre-folded into cw1/cb1) ----
            xn2 = seg_layernorm(x)
            g0 = _gelu(dot_rw(xn2, f'cw1a{i}') + V(f'cb1{i}'))     # (SEQ, CH): batch 0
            g1 = _gelu(dot_rw(xn2, f'cw1b{i}') + V(f'cb1{i}'))     # (SEQ, CH): batch 1
            x = x + dot_rw(g0, f'cw2a{i}') + dot_rw(g1, f'cw2b{i}') + V(f'cb2{i}')

        # ---- final norm (affine folded into head) + global average pool + head ----
        pooled = jnp.mean(seg_layernorm(x), axis=0, keepdims=True)  # (1, B*D)
        logits = dot_rw(pooled, 'head') + V('head_b')               # (1, 128); lanes >= B*NC are 0
        out_ref[...] = jnp.broadcast_to(logits, (8, _LANES))        # lane-dense unmasked store

    return kernel


def _cost_estimate(patches_bytes, w_bytes, v_bytes, out_bytes):
    macs = SEQ * (BATCH * PATCH_DIM) * BD                                     # stem
    macs += (2 * NUM_BLOCKS + 1) * 2 * SEQ * BD * BD                          # segmented-LN matmuls
    per_block = (2 * SEQ * TOK_DIM + 2 * N_REPEAT * HID_DIM * TOK_DIM) * BD   # token mixing
    per_block += 2 * SEQ * BD * CH_DIM + 2 * SEQ * CH_DIM * BD                # channel mixing
    macs += NUM_BLOCKS * per_block
    macs += BD * _LANES                                                       # head
    gelus = NUM_BLOCKS * ((2 * N_REPEAT + 1) * TOK_DIM * BD + 2 * SEQ * CH_DIM)
    rsqrts = (2 * NUM_BLOCKS + 1) * SEQ * BD
    return pl.CostEstimate(flops=2 * macs, transcendentals=gelus + rsqrts,
                           bytes_accessed=patches_bytes + w_bytes + v_bytes + out_bytes)


# ------------------------------ wrapper / glue ---------------------------------
def patchify(x):
    # NCHW -> (B, num_patches, C*ph*pw), channel-major inside a patch (== im2col of Conv2d).
    B, C, H, W_ = x.shape
    hp, wp = H // PATCH, W_ // PATCH
    x = x.reshape(B, C, hp, PATCH, wp, PATCH)
    x = jnp.transpose(x, (0, 2, 4, 1, 3, 5))
    return x.reshape(B, hp * wp, C * PATCH * PATCH)


def patchify_seq_major(x):
    # NCHW -> (SEQ, BATCH*PATCH_DIM): sequence-major layout matching the block-diagonal stem.
    B, C, H, W_ = x.shape
    hp, wp = H // PATCH, W_ // PATCH
    x = x.reshape(B, C, hp, PATCH, wp, PATCH)
    x = jnp.transpose(x, (2, 4, 0, 1, 3, 5))
    return x.reshape(hp * wp, B * C * PATCH * PATCH)


def build_forward(params):
    w_slab, v_slab, w_idx, v_idx = pack_params(params)
    cost = _cost_estimate(SEQ * BATCH * PATCH_DIM * 4,
                          w_slab.size * w_slab.dtype.itemsize,
                          v_slab.size * 4,
                          8 * _LANES * 4)
    fused = pl.pallas_call(
        make_mixer_kernel(w_idx, v_idx),
        out_shape=jax.ShapeDtypeStruct((8, _LANES), jnp.float32),
        in_specs=[pl.BlockSpec(memory_space=pltpu.MemorySpace.VMEM)] * 3,
        out_specs=pl.BlockSpec(memory_space=pltpu.MemorySpace.VMEM),
        cost_estimate=cost,
    )

    @jax.jit
    def forward(x, w_slab, v_slab):
        patches = patchify_seq_major(x)                          # (SEQ, BATCH*PATCH_DIM)
        out = fused(patches, w_slab, v_slab)
        return out[0, :BATCH * NUM_CLASSES].reshape(BATCH, NUM_CLASSES)

    return forward, w_slab, v_slab


# --------------------------- parameter initialization --------------------------
def _xavier_uniform(key, shape):
    fan_out, fan_in = shape
    a = math.sqrt(6.0 / (fan_in + fan_out))
    return jax.random.uniform(key, shape, jnp.float32, -a, a)


def _lecun_normal(key, shape, fan_in):
    return jax.random.normal(key, shape, jnp.float32) * math.sqrt(1.0 / fan_in)


def _mlp_bias(key, shape):
    # nn.init.normal_(bias, std=1e-6) for 'mlp'-named linears
    return 1e-6 * jax.random.normal(key, shape, jnp.float32)


def _spectral_scale(w, coeff=COEFF, n_iter=N_POWER_ITER):
    # spectral_norm_fc: power-iteration sigma estimate, scale W by 1/max(1, sigma/coeff).
    # TODO(synk): done once on the weights in glue; PyTorch re-estimates per forward (training).
    out_f, _ = w.shape
    u = jnp.ones((out_f,), jnp.float32) / math.sqrt(out_f)
    v = None
    for _ in range(n_iter):
        v = w.T @ u
        v = v / (jnp.linalg.norm(v) + 1e-12)
        u = w @ v
        u = u / (jnp.linalg.norm(u) + 1e-12)
    sigma = u @ (w @ v)
    factor = jnp.maximum(1.0, sigma / coeff)
    return w / factor


def init_block_params(key):
    ks = jax.random.split(key, 12)
    n1g = jnp.ones((1, EMBED), jnp.float32)
    n1b = jnp.zeros((1, EMBED), jnp.float32)
    # token-mixing iMlp (Linear weights stored (out, in))
    tw1 = _xavier_uniform(ks[0], (TOK_DIM, SEQ))
    tb1 = _mlp_bias(ks[1], (TOK_DIM, 1))
    tws1 = _spectral_scale(_xavier_uniform(ks[2], (HID_DIM, TOK_DIM)))
    tbs1 = _mlp_bias(ks[3], (HID_DIM, 1))
    tws2 = _spectral_scale(_xavier_uniform(ks[4], (TOK_DIM, HID_DIM)))
    tbs2 = _mlp_bias(ks[5], (TOK_DIM, 1))
    tw2 = _xavier_uniform(ks[6], (SEQ, TOK_DIM))
    tb2 = _mlp_bias(ks[7], (SEQ, 1))
    n2g = jnp.ones((1, EMBED), jnp.float32)
    n2b = jnp.zeros((1, EMBED), jnp.float32)
    # channel-mixing Mlp (pre-transposed to (in, out) for x @ W form)
    cw1 = _xavier_uniform(ks[8], (CH_DIM, EMBED)).T        # (D, C)
    cb1 = _mlp_bias(ks[9], (1, CH_DIM))
    cw2 = _xavier_uniform(ks[10], (EMBED, CH_DIM)).T       # (C, D)
    cb2 = _mlp_bias(ks[11], (1, EMBED))
    return [n1g, n1b, tw1, tb1, tws1, tbs1, tws2, tbs2, tw2, tb2,
            n2g, n2b, cw1, cb1, cw2, cb2]


def init_params(key):
    k_stem, k_blocks, k_head = jax.random.split(key, 3)
    # stem: Conv2d(IN_CHANS, EMBED, PATCH, stride=PATCH) == patch matmul; lecun_normal, zero bias
    stem_w = _lecun_normal(k_stem, (EMBED, PATCH_DIM), PATCH_DIM).T   # (P, D)
    stem_b = jnp.zeros((1, EMBED), jnp.float32)
    block_keys = jax.random.split(k_blocks, NUM_BLOCKS)
    blocks = [init_block_params(block_keys[i]) for i in range(NUM_BLOCKS)]
    norm_g = jnp.ones((1, EMBED), jnp.float32)
    norm_b = jnp.zeros((1, EMBED), jnp.float32)
    # NOTE: _init_weights zero-inits the head; use small random head weights here so the
    # end-to-end numerical check can actually detect errors (review correctness concern).
    head_w = 0.5 * jax.random.normal(k_head, (EMBED, NUM_CLASSES), jnp.float32)
    head_b = jnp.zeros((1, NUM_CLASSES), jnp.float32)
    return (stem_w, stem_b, blocks, norm_g, norm_b, head_w, head_b)


# --------------------------- pure-JAX reference --------------------------------
def _ref_dot(a, b):
    # same MXU-boundary dtype policy as the kernel so the comparison isolates kernel plumbing
    return jnp.dot(a.astype(MXU_DT), b.astype(MXU_DT), preferred_element_type=jnp.float32)


def reference_forward(x, params):
    """Pure-JAX forward in the original module's layout (unfolded params, per-batch tensors)."""
    stem_w, stem_b, blocks, norm_g, norm_b, head_w, head_b = params
    p = patchify(x)                                              # (B, S, P)
    h = _ref_dot(p, stem_w) + stem_b                             # (B, S, D)
    for bp in blocks:
        (n1g, n1b, tw1, tb1, tws1, tbs1, tws2, tbs2, tw2, tb2,
         n2g, n2b, cw1, cb1, cw2, cb2) = bp
        xn = _layernorm_raw(h) * n1g + n1b
        t = _ref_dot(jnp.swapaxes(xn, 1, 2), tw1.T) + tb1.reshape(1, 1, -1)   # (B, D, T)
        t_in = t
        for _ in range(N_REPEAT):
            u = _ref_dot(_gelu(t), tws1.T) + tbs1.reshape(1, 1, -1)
            t = _ref_dot(_gelu(u), tws2.T) + tbs2.reshape(1, 1, -1) + t_in
        t = _ref_dot(_gelu(t), tw2.T) + tb2.reshape(1, 1, -1)                 # (B, D, S)
        h = h + jnp.swapaxes(t, 1, 2)
        xn2 = _layernorm_raw(h) * n2g + n2b
        c = _gelu(_ref_dot(xn2, cw1) + cb1)
        h = h + _ref_dot(c, cw2) + cb2
    h = _layernorm_raw(h) * norm_g + norm_b
    pooled = jnp.mean(h, axis=1)                                 # (B, D)
    return _ref_dot(pooled, head_w) + head_b


# TODO(synk): Dropout / DropPath are identity at drop_rate=0.0 (the defaults) and are omitted.

if __name__ == "__main__":
    key = jax.random.PRNGKey(0)
    k_in, k_params = jax.random.split(key)
    x = jax.random.normal(k_in, (BATCH, IN_CHANS, IMG, IMG), jnp.float32)
    params = init_params(k_params)

    forward, w_slab, v_slab = build_forward(params)
    out = forward(x, w_slab, v_slab)
    jax.block_until_ready(out)
    assert out.shape == (BATCH, NUM_CLASSES)

    ref = jax.jit(reference_forward)(x, params)
    jax.block_until_ready(ref)
    err = float(jnp.max(jnp.abs(out - ref)))
    assert err < 5e-2, f"kernel vs reference mismatch: max abs err = {err}"
    print("KERNEL_OK")
</pallas_src>

<mosaic_0001>
module attributes {stable_mosaic.version = 11 : i64} {
  func.func @kernel(%arg0: memref<16x96xf32, #tpu.memory_space<vmem>>, %arg1: memref<1056x128xbf16, #tpu.memory_space<vmem>>, %arg2: memref<352x128xf32, #tpu.memory_space<vmem>>, %arg3: memref<8x128xf32, #tpu.memory_space<vmem>>) attributes {dimension_semantics = [], scalar_prefetch = 0 : i64, scratch_operands = 0 : i64, tpu.core_type = #tpu.core_type<tc>} {
    %c0 = arith.constant 0 : index
    %c0_0 = arith.constant 0 : index
    %0 = vector.load %arg0[%c0, %c0_0] : memref<16x96xf32, #tpu.memory_space<vmem>>, vector<16x96xf32>
    %1 = arith.truncf %0 : vector<16x96xf32> to vector<16x96xbf16>
    %c0_1 = arith.constant 0 : index
    %c0_2 = arith.constant 0 : index
    %2 = vector.load %arg1[%c0_1, %c0_2] : memref<1056x128xbf16, #tpu.memory_space<vmem>>, vector<96x64xbf16>
    %cst = arith.constant dense<0.000000e+00> : vector<16x64xf32>
    %3 = tpu.matmul %1, %2, %cst {dimension_numbers = #tpu.dot_dimension_numbers<[1], [0], [0], [1], [0, 0, 1, 1], [], []>} : vector<16x96xbf16>, vector<96x64xbf16>, vector<16x64xf32> -> vector<16x64xf32>
    %c64 = arith.constant 64 : index
    %c0_3 = arith.constant 0 : index
    %4 = vector.load %arg2[%c64, %c0_3] : memref<352x128xf32, #tpu.memory_space<vmem>>, vector<1x64xf32>
    %5 = vector.broadcast %4 : vector<1x64xf32> to vector<16x64xf32>
    %6 = arith.addf %3, %5 : vector<16x64xf32>
    %c0_4 = arith.constant 0 : index
    %c0_5 = arith.constant 0 : index
    %7 = vector.load %arg2[%c0_4, %c0_5] : memref<352x128xf32, #tpu.memory_space<vmem>>, vector<64x64xf32>
    %cst_6 = arith.constant dense<0.000000e+00> : vector<16x64xf32>
    %8 = tpu.matmul %6, %7, %cst_6 {dimension_numbers = #tpu.dot_dimension_numbers<[1], [0], [0], [1], [0, 0, 1, 1], [], []>} : vector<16x64xf32>, vector<64x64xf32>, vector<16x64xf32> -> vector<16x64xf32>
    %9 = arith.subf %6, %8 : vector<16x64xf32>
    %10 = arith.mulf %9, %9 : vector<16x64xf32>
    %cst_7 = arith.constant dense<0.000000e+00> : vector<16x64xf32>
    %11 = tpu.matmul %10, %7, %cst_7 {dimension_numbers = #tpu.dot_dimension_numbers<[1], [0], [0], [1], [0, 0, 1, 1], [], []>} : vector<16x64xf32>, vector<64x64xf32>, vector<16x64xf32> -> vector<16x64xf32>
    %cst_8 = arith.constant 9.99999997E-7 : f32
    %12 = vector.broadcast %cst_8 : f32 to vector<16x64xf32>
    %13 = arith.addf %11, %12 : vector<16x64xf32>
    %14 = math.rsqrt %13 : vector<16x64xf32>
    %15 = arith.mulf %9, %14 : vector<16x64xf32>
    %c80 = arith.constant 80 : index
    %c0_9 = arith.constant 0 : index
    %16 = vector.load %arg2[%c80, %c0_9] : memref<352x128xf32, #tpu.memory_space<vmem>>, vector<1x64xf32>
    %17 = vector.broadcast %16 : vector<1x64xf32> to vector<16x64xf32>
    %18 = arith.mulf %15, %17 : vector<16x64xf32>
    %c96 = arith.constant 96 : index
    %c0_10 = arith.constant 0 : index
    %19 = vector.load %arg2[%c96, %c0_10] : memref<352x128xf32, #tpu.memory_space<vmem>>, vector<1x64xf32>
    %20 = vector.broadcast %19 : vector<1x64xf32> to vector<16x64xf32>
    %21 = arith.addf %18, %20 : vector<16x64xf32>
    %c96_11 = arith.constant 96 : index
    %c0_12 = arith.constant 0 : index
    %22 = vector.load %arg1[%c96_11, %c0_12] : memref<1056x128xbf16, #tpu.memory_space<vmem>>, vector<16x16xbf16>
    %23 = arith.truncf %21 : vector<16x64xf32> to vector<16x64xbf16>
    %cst_13 = arith.constant dense<0.000000e+00> : vector<16x64xf32>
    %24 = tpu.matmul %22, %23, %cst_13 {dimension_numbers = #tpu.dot_dimension_numbers<[1], [0], [0], [1], [0, 0, 1, 1], [], []>} : vector<16x16xbf16>, vector<16x64xbf16>, vector<16x64xf32> -> vector<16x64xf32>
    %c112 = arith.constant 112 : index
    %c0_14 = arith.constant 0 : index
    %25 = vector.load %arg2[%c112, %c0_14] : memref<352x128xf32, #tpu.memory_space<vmem>>, vector<16x64xf32>
    %26 = arith.addf %24, %25 : vector<16x64xf32>
    %c112_15 = arith.constant 112 : index
    %c0_16 = arith.constant 0 : index
    %27 = vector.load %arg1[%c112_15, %c0_16] : memref<1056x128xbf16, #tpu.memory_space<vmem>>, vector<16x16xbf16>
    %c128 = arith.constant 128 : index
    %c0_17 = arith.constant 0 : index
    %28 = vector.load %arg1[%c128, %c0_17] : memref<1056x128xbf16, #tpu.memory_space<vmem>>, vector<16x16xbf16>
    %c128_18 = arith.constant 128 : index
    %c0_19 = arith.constant 0 : index
    %29 = vector.load %arg2[%c128_18, %c0_19] : memref<352x128xf32, #tpu.memory_space<vmem>>, vector<16x64xf32>
    %c144 = arith.constant 144 : index
    %c0_20 = arith.constant 0 : index
    %30 = vector.load %arg2[%c144, %c0_20] : memref<352x128xf32, #tpu.memory_space<vmem>>, vector<16x64xf32>
    %cst_21 = arith.constant 5.000000e-01 : f32
    %31 = vector.broadcast %cst_21 : f32 to vector<16x64xf32>
    %32 = arith.mulf %31, %26 : vector<16x64xf32>
    %cst_22 = arith.constant 4.471500e-02 : f32
    %33 = vector.broadcast %cst_22 : f32 to vector<16x64xf32>
    %34 = arith.mulf %33, %26 : vector<16x64xf32>
    %35 = arith.mulf %34, %26 : vector<16x64xf32>
    %36 = arith.mulf %35, %26 : vector<16x64xf32>
    %37 = arith.addf %26, %36 : vector<16x64xf32>
    %cst_23 = arith.constant 0.797884583 : f32
    %38 = vector.broadcast %cst_23 : f32 to vector<16x64xf32>
    %39 = arith.mulf %38, %37 : vector<16x64xf32>
    %40 = math.tanh %39 : vector<16x64xf32>
    %cst_24 = arith.constant 1.000000e+00 : f32
    %41 = vector.broadcast %cst_24 : f32 to vector<16x64xf32>
    %42 = arith.addf %41, %40 : vector<16x64xf32>
    %43 = arith.mulf %32, %42 : vector<16x64xf32>
    %44 = arith.truncf %43 : vector<16x64xf32> to vector<16x64xbf16>
    %cst_25 = arith.constant dense<0.000000e+00> : vector<16x64xf32>
    %45 = tpu.matmul %27, %44, %cst_25 {dimension_numbers = #tpu.dot_dimension_numbers<[1], [0], [0], [1], [0, 0, 1, 1], [], []>} : vector<16x16xbf16>, vector<16x64xbf16>, vector<16x64xf32> -> vector<16x64xf32>
    %46 = arith.addf %45, %29 : vector<16x64xf32>
    %cst_26 = arith.constant 5.000000e-01 : f32
    %47 = vector.broadcast %cst_26 : f32 to vector<16x64xf32>
    %48 = arith.mulf %47, %46 : vector<16x64xf32>
    %cst_27 = arith.constant 4.471500e-02 : f32
    %49 = vector.broadcast %cst_27 : f32 to vector<16x64xf32>
    %50 = arith.mulf %49, %46 : vector<16x64xf32>
    %51 = arith.mulf %50, %46 : vector<16x64xf32>
    %52 = arith.mulf %51, %46 : vector<16x64xf32>
    %53 = arith.addf %46, %52 : vector<16x64xf32>
    %cst_28 = arith.constant 0.797884583 : f32
    %54 = vector.broadcast %cst_28 : f32 to vector<16x64xf32>
    %55 = arith.mulf %54, %53 : vector<16x64xf32>
    %56 = math.tanh %55 : vector<16x64xf32>
    %cst_29 = arith.constant 1.000000e+00 : f32
    %57 = vector.broadcast %cst_29 : f32 to vector<16x64xf32>
    %58 = arith.addf %57, %56 : vector<16x64xf32>
    %59 = arith.mulf %48, %58 : vector<16x64xf32>
    %60 = arith.truncf %59 : vector<16x64xf32> to vector<16x64xbf16>
    %cst_30 = arith.constant dense<0.000000e+00> : vector<16x64xf32>
    %61 = tpu.matmul %28, %60, %cst_30 {dimension_numbers = #tpu.dot_dimension_numbers<[1], [0], [0], [1], [0, 0, 1, 1], [], []>} : vector<16x16xbf16>, vector<16x64xbf16>, vector<16x64xf32> -> vector<16x64xf32>
    %62 = arith.addf %61, %30 : vector<16x64xf32>
    %63 = arith.addf %62, %26 : vector<16x64xf32>
    %cst_31 = arith.constant 5.000000e-01 : f32
    %64 = vector.broadcast %cst_31 : f32 to vector<16x64xf32>
    %65 = arith.mulf %64, %63 : vector<16x64xf32>
    %cst_32 = arith.constant 4.471500e-02 : f32
    %66 = vector.broadcast %cst_32 : f32 to vector<16x64xf32>
    %67 = arith.mulf %66, %63 : vector<16x64xf32>
    %68 = arith.mulf %67, %63 : vector<16x64xf32>
    %69 = arith.mulf %68, %63 : vector<16x64xf32>
    %70 = arith.addf %63, %69 : vector<16x64xf32>
    %cst_33 = arith.constant 0.797884583 : f32
    %71 = vector.broadcast %cst_33 : f32 to vector<16x64xf32>
    %72 = arith.mulf %71, %70 : vector<16x64xf32>
    %73 = math.tanh %72 : vector<16x64xf32>
    %cst_34 = arith.constant 1.000000e+00 : f32
    %74 = vector.broadcast %cst_34 : f32 to vector<16x64xf32>
    %75 = arith.addf %74, %73 : vector<16x64xf32>
    %76 = arith.mulf %65, %75 : vector<16x64xf32>
    %77 = arith.truncf %76 : vector<16x64xf32> to vector<16x64xbf16>
    %cst_35 = arith.constant dense<0.000000e+00> : vector<16x64xf32>
    %78 = tpu.matmul %27, %77, %cst_35 {dimension_numbers = #tpu.dot_dimension_numbers<[1], [0], [0], [1], [0, 0, 1, 1], [], []>} : vector<16x16xbf16>, vector<16x64xbf16>, vector<16x64xf32> -> vector<16x64xf32>
    %79 = arith.addf %78, %29 : vector<16x64xf32>
    %cst_36 = arith.constant 5.000000e-01 : f32
    %80 = vector.broadcast %cst_36 : f32 to vector<16x64xf32>
    %81 = arith.mulf %80, %79 : vector<16x64xf32>
    %cst_37 = arith.constant 4.471500e-02 : f32
    %82 = vector.broadcast %cst_37 : f32 to vector<16x64xf32>
    %83 = arith.mulf %82, %79 : vector<16x64xf32>
    %84 = arith.mulf %83, %79 : vector<16x64xf32>
    %85 = arith.mulf %84, %79 : vector<16x64xf32>
    %86 = arith.addf %79, %85 : vector<16x64xf32>
    %cst_38 = arith.constant 0.797884583 : f32
    %87 = vector.broadcast %cst_38 : f32 to vector<16x64xf32>
    %88 = arith.mulf %87, %86 : vector<16x64xf32>
    %89 = math.tanh %88 : vector<16x64xf32>
    %cst_39 = arith.constant 1.000000e+00 : f32
    %90 = vector.broadcast %cst_39 : f32 to vector<16x64xf32>
    %91 = arith.addf %90, %89 : vector<16x64xf32>
    %92 = arith.mulf %81, %91 : vector<16x64xf32>
    %93 = arith.truncf %92 : vector<16x64xf32> to vector<16x64xbf16>
    %cst_40 = arith.constant dense<0.000000e+00> : vector<16x64xf32>
    %94 = tpu.matmul %28, %93, %cst_40 {dimension_numbers = #tpu.dot_dimension_numbers<[1], [0], [0], [1], [0, 0, 1, 1], [], []>} : vector<16x16xbf16>, vector<16x64xbf16>, vector<16x64xf32> -> vector<16x64xf32>
    %95 = arith.addf %94, %30 : vector<16x64xf32>
    %96 = arith.addf %95, %26 : vector<16x64xf32>
    %cst_41 = arith.constant 5.000000e-01 : f32
    %97 = vector.broadcast %cst_41 : f32 to vector<16x64xf32>
    %98 = arith.mulf %97, %96 : vector<16x64xf32>
    %cst_42 = arith.constant 4.471500e-02 : f32
    %99 = vector.broadcast %cst_42 : f32 to vector<16x64xf32>
    %100 = arith.mulf %99, %96 : vector<16x64xf32>
    %101 = arith.mulf %100, %96 : vector<16x64xf32>
    %102 = arith.mulf %101, %96 : vector<16x64xf32>
    %103 = arith.addf %96, %102 : vector<16x64xf32>
    %cst_43 = arith.constant 0.797884583 : f32
    %104 = vector.broadcast %cst_43 : f32 to vector<16x64xf32>
    %105 = arith.mulf %104, %103 : vector<16x64xf32>
    %106 = math.tanh %105 : vector<16x64xf32>
    %cst_44 = arith.constant 1.000000e+00 : f32
    %107 = vector.broadcast %cst_44 : f32 to vector<16x64xf32>
    %108 = arith.addf %107, %106 : vector<16x64xf32>
    %109 = arith.mulf %98, %108 : vector<16x64xf32>
    %c144_45 = arith.constant 144 : index
    %c0_46 = arith.constant 0 : index
    %110 = vector.load %arg1[%c144_45, %c0_46] : memref<1056x128xbf16, #tpu.memory_space<vmem>>, vector<16x16xbf16>
    %111 = arith.truncf %109 : vector<16x64xf32> to vector<16x64xbf16>
    %cst_47 = arith.constant dense<0.000000e+00> : vector<16x64xf32>
    %112 = tpu.matmul %110, %111, %cst_47 {dimension_numbers = #tpu.dot_dimension_numbers<[1], [0], [0], [1], [0, 0, 1, 1], [], []>} : vector<16x16xbf16>, vector<16x64xbf16>, vector<16x64xf32> -> vector<16x64xf32>
    %c160 = arith.constant 160 : index
    %c0_48 = arith.constant 0 : index
    %113 = vector.load %arg2[%c160, %c0_48] : memref<352x128xf32, #tpu.memory_space<vmem>>, vector<16x64xf32>
    %114 = arith.addf %112, %113 : vector<16x64xf32>
    %115 = arith.addf %6, %114 : vector<16x64xf32>
    %c0_49 = arith.constant 0 : index
    %c0_50 = arith.constant 0 : index
    %116 = vector.load %arg2[%c0_49, %c0_50] : memref<352x128xf32, #tpu.memory_space<vmem>>, vector<64x64xf32>
    %cst_51 = arith.constant dense<0.000000e+00> : vector<16x64xf32>
    %117 = tpu.matmul %115, %116, %cst_51 {dimension_numbers = #tpu.dot_dimension_numbers<[1], [0], [0], [1], [0, 0, 1, 1], [], []>} : vector<16x64xf32>, vector<64x64xf32>, vector<16x64xf32> -> vector<16x64xf32>
    %118 = arith.subf %115, %117 : vector<16x64xf32>
    %119 = arith.mulf %118, %118 : vector<16x64xf32>
    %cst_52 = arith.constant dense<0.000000e+00> : vector<16x64xf32>
    %120 = tpu.matmul %119, %116, %cst_52 {dimension_numbers = #tpu.dot_dimension_numbers<[1], [0], [0], [1], [0, 0, 1, 1], [], []>} : vector<16x64xf32>, vector<64x64xf32>, vector<16x64xf32> -> vector<16x64xf32>
    %cst_53 = arith.constant 9.99999997E-7 : f32
    %121 = vector.broadcast %cst_53 : f32 to vector<16x64xf32>
    %122 = arith.addf %120, %121 : vector<16x64xf32>
    %123 = math.rsqrt %122 : vector<16x64xf32>
    %124 = arith.mulf %118, %123 : vector<16x64xf32>
    %125 = arith.truncf %124 : vector<16x64xf32> to vector<16x64xbf16>
    %c160_54 = arith.constant 160 : index
    %c0_55 = arith.constant 0 : index
    %126 = vector.load %arg1[%c160_54, %c0_55] : memref<1056x128xbf16, #tpu.memory_space<vmem>>, vector<64x128xbf16>
    %cst_56 = arith.constant dense<0.000000e+00> : vector<16x128xf32>
    %127 = tpu.matmul %125, %126, %cst_56 {dimension_numbers = #tpu.dot_dimension_numbers<[1], [0], [0], [1], [0, 0, 1, 1], [], []>} : vector<16x64xbf16>, vector<64x128xbf16>, vector<16x128xf32> -> vector<16x128xf32>
    %c176 = arith.constant 176 : index
    %c0_57 = arith.constant 0 : index
    %128 = vector.load %arg2[%c176, %c0_57] : memref<352x128xf32, #tpu.memory_space<vmem>>, vector<1x128xf32>
    %129 = vector.broadcast %128 : vector<1x128xf32> to vector<16x128xf32>
    %130 = arith.addf %127, %129 : vector<16x128xf32>
    %cst_58 = arith.constant 5.000000e-01 : f32
    %131 = vector.broadcast %cst_58 : f32 to vector<16x128xf32>
    %132 = arith.mulf %131, %130 : vector<16x128xf32>
    %cst_59 = arith.constant 4.471500e-02 : f32
    %133 = vector.broadcast %cst_59 : f32 to vector<16x128xf32>
    %134 = arith.mulf %133, %130 : vector<16x128xf32>
    %135 = arith.mulf %134, %130 : vector<16x128xf32>
    %136 = arith.mulf %135, %130 : vector<16x128xf32>
    %137 = arith.addf %130, %136 : vector<16x128xf32>
    %cst_60 = arith.constant 0.797884583 : f32
    %138 = vector.broadcast %cst_60 : f32 to vector<16x128xf32>
    %139 = arith.mulf %138, %137 : vector<16x128xf32>
    %140 = math.tanh %139 : vector<16x128xf32>
    %cst_61 = arith.constant 1.000000e+00 : f32
    %141 = vector.broadcast %cst_61 : f32 to vector<16x128xf32>
    %142 = arith.addf %141, %140 : vector<16x128xf32>
    %143 = arith.mulf %132, %142 : vector<16x128xf32>
    %144 = arith.truncf %124 : vector<16x64xf32> to vector<16x64xbf16>
    %c224 = arith.constant 224 : index
    %c0_62 = arith.constant 0 : index
    %145 = vector.load %arg1[%c224, %c0_62] : memref<1056x128xbf16, #tpu.memory_space<vmem>>, vector<64x128xbf16>
    %cst_63 = arith.constant dense<0.000000e+00> : vector<16x128xf32>
    %146 = tpu.matmul %144, %145, %cst_63 {dimension_numbers = #tpu.dot_dimension_numbers<[1], [0], [0], [1], [0, 0, 1, 1], [], []>} : vector<16x64xbf16>, vector<64x128xbf16>, vector<16x128xf32> -> vector<16x128xf32>
    %c176_64 = arith.constant 176 : index
    %c0_65 = arith.constant 0 : index
    %147 = vector.load %arg2[%c176_64, %c0_65] : memref<352x128xf32, #tpu.memory_space<vmem>>, vector<1x128xf32>
    %148 = vector.broadcast %147 : vector<1x128xf32> to vector<16x128xf32>
    %149 = arith.addf %146, %148 : vector<16x128xf32>
    %cst_66 = arith.constant 5.000000e-01 : f32
    %150 = vector.broadcast %cst_66 : f32 to vector<16x128xf32>
    %151 = arith.mulf %150, %149 : vector<16x128xf32>
    %cst_67 = arith.constant 4.471500e-02 : f32
    %152 = vector.broadcast %cst_67 : f32 to vector<16x128xf32>
    %153 = arith.mulf %152, %149 : vector<16x128xf32>
    %154 = arith.mulf %153, %149 : vector<16x128xf32>
    %155 = arith.mulf %154, %149 : vector<16x128xf32>
    %156 = arith.addf %149, %155 : vector<16x128xf32>
    %cst_68 = arith.constant 0.797884583 : f32
    %157 = vector.broadcast %cst_68 : f32 to vector<16x128xf32>
    %158 = arith.mulf %157, %156 : vector<16x128xf32>
    %159 = math.tanh %158 : vector<16x128xf32>
    %cst_69 = arith.constant 1.000000e+00 : f32
    %160 = vector.broadcast %cst_69 : f32 to vector<16x128xf32>
    %161 = arith.addf %160, %159 : vector<16x128xf32>
    %162 = arith.mulf %151, %161 : vector<16x128xf32>
    %163 = arith.truncf %143 : vector<16x128xf32> to vector<16x128xbf16>
    %c288 = arith.constant 288 : index
    %c0_70 = arith.constant 0 : index
    %164 = vector.load %arg1[%c288, %c0_70] : memref<1056x128xbf16, #tpu.memory_space<vmem>>, vector<128x64xbf16>
    %cst_71 = arith.constant dense<0.000000e+00> : vector<16x64xf32>
    %165 = tpu.matmul %163, %164, %cst_71 {dimension_numbers = #tpu.dot_dimension_numbers<[1], [0], [0], [1], [0, 0, 1, 1], [], []>} : vector<16x128xbf16>, vector<128x64xbf16>, vector<16x64xf32> -> vector<16x64xf32>
    %166 = arith.addf %115, %165 : vector<16x64xf32>
    %167 = arith.truncf %162 : vector<16x128xf32> to vector<16x128xbf16>
    %c416 = arith.constant 416 : index
    %c0_72 = arith.constant 0 : index
    %168 = vector.load %arg1[%c416, %c0_72] : memref<1056x128xbf16, #tpu.memory_space<vmem>>, vector<128x64xbf16>
    %cst_73 = arith.constant dense<0.000000e+00> : vector<16x64xf32>
    %169 = tpu.matmul %167, %168, %cst_73 {dimension_numbers = #tpu.dot_dimension_numbers<[1], [0], [0], [1], [0, 0, 1, 1], [], []>} : vector<16x128xbf16>, vector<128x64xbf16>, vector<16x64xf32> -> vector<16x64xf32>
    %170 = arith.addf %166, %169 : vector<16x64xf32>
    %c192 = arith.constant 192 : index
    %c0_74 = arith.constant 0 : index
    %171 = vector.load %arg2[%c192, %c0_74] : memref<352x128xf32, #tpu.memory_space<vmem>>, vector<1x64xf32>
    %172 = vector.broadcast %171 : vector<1x64xf32> to vector<16x64xf32>
    %173 = arith.addf %170, %172 : vector<16x64xf32>
    %c0_75 = arith.constant 0 : index
    %c0_76 = arith.constant 0 : index
    %174 = vector.load %arg2[%c0_75, %c0_76] : memref<352x128xf32, #tpu.memory_space<vmem>>, vector<64x64xf32>
    %cst_77 = arith.constant dense<0.000000e+00> : vector<16x64xf32>
    %175 = tpu.matmul %173, %174, %cst_77 {dimension_numbers = #tpu.dot_dimension_numbers<[1], [0], [0], [1], [0, 0, 1, 1], [], []>} : vector<16x64xf32>, vector<64x64xf32>, vector<16x64xf32> -> vector<16x64xf32>
    %176 = arith.subf %173, %175 : vector<16x64xf32>
    %177 = arith.mulf %176, %176 : vector<16x64xf32>
    %cst_78 = arith.constant dense<0.000000e+00> : vector<16x64xf32>
    %178 = tpu.matmul %177, %174, %cst_78 {dimension_numbers = #tpu.dot_dimension_numbers<[1], [0], [0], [1], [0, 0, 1, 1], [], []>} : vector<16x64xf32>, vector<64x64xf32>, vector<16x64xf32> -> vector<16x64xf32>
    %cst_79 = arith.constant 9.99999997E-7 : f32
    %179 = vector.broadcast %cst_79 : f32 to vector<16x64xf32>
    %180 = arith.addf %178, %179 : vector<16x64xf32>
    %181 = math.rsqrt %180 : vector<16x64xf32>
    %182 = arith.mulf %176, %181 : vector<16x64xf32>
    %c208 = arith.constant 208 : index
    %c0_80 = arith.constant 0 : index
    %183 = vector.load %arg2[%c208, %c0_80] : memref<352x128xf32, #tpu.memory_space<vmem>>, vector<1x64xf32>
    %184 = vector.broadcast %183 : vector<1x64xf32> to vector<16x64xf32>
    %185 = arith.mulf %182, %184 : vector<16x64xf32>
    %c224_81 = arith.constant 224 : index
    %c0_82 = arith.constant 0 : index
    %186 = vector.load %arg2[%c224_81, %c0_82] : memref<352x128xf32, #tpu.memory_space<vmem>>, vector<1x64xf32>
    %187 = vector.broadcast %186 : vector<1x64xf32> to vector<16x64xf32>
    %188 = arith.addf %185, %187 : vector<16x64xf32>
    %c544 = arith.constant 544 : index
    %c0_83 = arith.constant 0 : index
    %189 = vector.load %arg1[%c544, %c0_83] : memref<1056x128xbf16, #tpu.memory_space<vmem>>, vector<16x16xbf16>
    %190 = arith.truncf %188 : vector<16x64xf32> to vector<16x64xbf16>
    %cst_84 = arith.constant dense<0.000000e+00> : vector<16x64xf32>
    %191 = tpu.matmul %189, %190, %cst_84 {dimension_numbers = #tpu.dot_dimension_numbers<[1], [0], [0], [1], [0, 0, 1, 1], [], []>} : vector<16x16xbf16>, vector<16x64xbf16>, vector<16x64xf32> -> vector<16x64xf32>
    %c240 = arith.constant 240 : index
    %c0_85 = arith.constant 0 : index
    %192 = vector.load %arg2[%c240, %c0_85] : memref<352x128xf32, #tpu.memory_space<vmem>>, vector<16x64xf32>
    %193 = arith.addf %191, %192 : vector<16x64xf32>
    %c560 = arith.constant 560 : index
    %c0_86 = arith.constant 0 : index
    %194 = vector.load %arg1[%c560, %c0_86] : memref<1056x128xbf16, #tpu.memory_space<vmem>>, vector<16x16xbf16>
    %c576 = arith.constant 576 : index
    %c0_87 = arith.constant 0 : index
    %195 = vector.load %arg1[%c576, %c0_87] : memref<1056x128xbf16, #tpu.memory_space<vmem>>, vector<16x16xbf16>
    %c256 = arith.constant 256 : index
    %c0_88 = arith.constant 0 : index
    %196 = vector.load %arg2[%c256, %c0_88] : memref<352x128xf32, #tpu.memory_space<vmem>>, vector<16x64xf32>
    %c272 = arith.constant 272 : index
    %c0_89 = arith.constant 0 : index
    %197 = vector.load %arg2[%c272, %c0_89] : memref<352x128xf32, #tpu.memory_space<vmem>>, vector<16x64xf32>
    %cst_90 = arith.constant 5.000000e-01 : f32
    %198 = vector.broadcast %cst_90 : f32 to vector<16x64xf32>
    %199 = arith.mulf %198, %193 : vector<16x64xf32>
    %cst_91 = arith.constant 4.471500e-02 : f32
    %200 = vector.broadcast %cst_91 : f32 to vector<16x64xf32>
    %201 = arith.mulf %200, %193 : vector<16x64xf32>
    %202 = arith.mulf %201, %193 : vector<16x64xf32>
    %203 = arith.mulf %202, %193 : vector<16x64xf32>
    %204 = arith.addf %193, %203 : vector<16x64xf32>
    %cst_92 = arith.constant 0.797884583 : f32
    %205 = vector.broadcast %cst_92 : f32 to vector<16x64xf32>
    %206 = arith.mulf %205, %204 : vector<16x64xf32>
    %207 = math.tanh %206 : vector<16x64xf32>
    %cst_93 = arith.constant 1.000000e+00 : f32
    %208 = vector.broadcast %cst_93 : f32 to vector<16x64xf32>
    %209 = arith.addf %208, %207 : vector<16x64xf32>
    %210 = arith.mulf %199, %209 : vector<16x64xf32>
    %211 = arith.truncf %210 : vector<16x64xf32> to vector<16x64xbf16>
    %cst_94 = arith.constant dense<0.000000e+00> : vector<16x64xf32>
    %212 = tpu.matmul %194, %211, %cst_94 {dimension_numbers = #tpu.dot_dimension_numbers<[1], [0], [0], [1], [0, 0, 1, 1], [], []>} : vector<16x16xbf16>, vector<16x64xbf16>, vector<16x64xf32> -> vector<16x64xf32>
    %213 = arith.addf %212, %196 : vector<16x64xf32>
    %cst_95 = arith.constant 5.000000e-01 : f32
    %214 = vector.broadcast %cst_95 : f32 to vector<16x64xf32>
    %215 = arith.mulf %214, %213 : vector<16x64xf32>
    %cst_96 = arith.constant 4.471500e-02 : f32
    %216 = vector.broadcast %cst_96 : f32 to vector<16x64xf32>
    %217 = arith.mulf %216, %213 : vector<16x64xf32>
    %218 = arith.mulf %217, %213 : vector<16x64xf32>
    %219 = arith.mulf %218, %213 : vector<16x64xf32>
    %220 = arith.addf %213, %219 : vector<16x64xf32>
    %cst_97 = arith.constant 0.797884583 : f32
    %221 = vector.broadcast %cst_97 : f32 to vector<16x64xf32>
    %222 = arith.mulf %221, %220 : vector<16x64xf32>
    %223 = math.tanh %222 : vector<16x64xf32>
    %cst_98 = arith.constant 1.000000e+00 : f32
    %224 = vector.broadcast %cst_98 : f32 to vector<16x64xf32>
    %225 = arith.addf %224, %223 : vector<16x64xf32>
    %226 = arith.mulf %215, %225 : vector<16x64xf32>
    %227 = arith.truncf %226 : vector<16x64xf32> to vector<16x64xbf16>
    %cst_99 = arith.constant dense<0.000000e+00> : vector<16x64xf32>
    %228 = tpu.matmul %195, %227, %cst_99 {dimension_numbers = #tpu.dot_dimension_numbers<[1], [0], [0], [1], [0, 0, 1, 1], [], []>} : vector<16x16xbf16>, vector<16x64xbf16>, vector<16x64xf32> -> vector<16x64xf32>
    %229 = arith.addf %228, %197 : vector<16x64xf32>
    %230 = arith.addf %229, %193 : vector<16x64xf32>
    %cst_100 = arith.constant 5.000000e-01 : f32
    %231 = vector.broadcast %cst_100 : f32 to vector<16x64xf32>
    %232 = arith.mulf %231, %230 : vector<16x64xf32>
    %cst_101 = arith.constant 4.471500e-02 : f32
    %233 = vector.broadcast %cst_101 : f32 to vector<16x64xf32>
    %234 = arith.mulf %233, %230 : vector<16x64xf32>
    %235 = arith.mulf %234, %230 : vector<16x64xf32>
    %236 = arith.mulf %235, %230 : vector<16x64xf32>
    %237 = arith.addf %230, %236 : vector<16x64xf32>
    %cst_102 = arith.constant 0.797884583 : f32
    %238 = vector.broadcast %cst_102 : f32 to vector<16x64xf32>
    %239 = arith.mulf %238, %237 : vector<16x64xf32>
    %240 = math.tanh %239 : vector<16x64xf32>
    %cst_103 = arith.constant 1.000000e+00 : f32
    %241 = vector.broadcast %cst_103 : f32 to vector<16x64xf32>
    %242 = arith.addf %241, %240 : vector<16x64xf32>
    %243 = arith.mulf %232, %242 : vector<16x64xf32>
    %244 = arith.truncf %243 : vector<16x64xf32> to vector<16x64xbf16>
    %cst_104 = arith.constant dense<0.000000e+00> : vector<16x64xf32>
    %245 = tpu.matmul %194, %244, %cst_104 {dimension_numbers = #tpu.dot_dimension_numbers<[1], [0], [0], [1], [0, 0, 1, 1], [], []>} : vector<16x16xbf16>, vector<16x64xbf16>, vector<16x64xf32> -> vector<16x64xf32>
    %246 = arith.addf %245, %196 : vector<16x64xf32>
    %cst_105 = arith.constant 5.000000e-01 : f32
    %247 = vector.broadcast %cst_105 : f32 to vector<16x64xf32>
    %248 = arith.mulf %247, %246 : vector<16x64xf32>
    %cst_106 = arith.constant 4.471500e-02 : f32
    %249 = vector.broadcast %cst_106 : f32 to vector<16x64xf32>
    %250 = arith.mulf %249, %246 : vector<16x64xf32>
    %251 = arith.mulf %250, %246 : vector<16x64xf32>
    %252 = arith.mulf %251, %246 : vector<16x64xf32>
    %253 = arith.addf %246, %252 : vector<16x64xf32>
    %cst_107 = arith.constant 0.797884583 : f32
    %254 = vector.broadcast %cst_107 : f32 to vector<16x64xf32>
    %255 = arith.mulf %254, %253 : vector<16x64xf32>
    %256 = math.tanh %255 : vector<16x64xf32>
    %cst_108 = arith.constant 1.000000e+00 : f32
    %257 = vector.broadcast %cst_108 : f32 to vector<16x64xf32>
    %258 = arith.addf %257, %256 : vector<16x64xf32>
    %259 = arith.mulf %248, %258 : vector<16x64xf32>
    %260 = arith.truncf %259 : vector<16x64xf32> to vector<16x64xbf16>
    %cst_109 = arith.constant dense<0.000000e+00> : vector<16x64xf32>
    %261 = tpu.matmul %195, %260, %cst_109 {dimension_numbers = #tpu.dot_dimension_numbers<[1], [0], [0], [1], [0, 0, 1, 1], [], []>} : vector<16x16xbf16>, vector<16x64xbf16>, vector<16x64xf32> -> vector<16x64xf32>
    %262 = arith.addf %261, %197 : vector<16x64xf32>
    %263 = arith.addf %262, %193 : vector<16x64xf32>
    %cst_110 = arith.constant 5.000000e-01 : f32
    %264 = vector.broadcast %cst_110 : f32 to vector<16x64xf32>
    %265 = arith.mulf %264, %263 : vector<16x64xf32>
    %cst_111 = arith.constant 4.471500e-02 : f32
    %266 = vector.broadcast %cst_111 : f32 to vector<16x64xf32>
    %267 = arith.mulf %266, %263 : vector<16x64xf32>
    %268 = arith.mulf %267, %263 : vector<16x64xf32>
    %269 = arith.mulf %268, %263 : vector<16x64xf32>
    %270 = arith.addf %263, %269 : vector<16x64xf32>
    %cst_112 = arith.constant 0.797884583 : f32
    %271 = vector.broadcast %cst_112 : f32 to vector<16x64xf32>
    %272 = arith.mulf %271, %270 : vector<16x64xf32>
    %273 = math.tanh %272 : vector<16x64xf32>
    %cst_113 = arith.constant 1.000000e+00 : f32
    %274 = vector.broadcast %cst_113 : f32 to vector<16x64xf32>
    %275 = arith.addf %274, %273 : vector<16x64xf32>
    %276 = arith.mulf %265, %275 : vector<16x64xf32>
    %c592 = arith.constant 592 : index
    %c0_114 = arith.constant 0 : index
    %277 = vector.load %arg1[%c592, %c0_114] : memref<1056x128xbf16, #tpu.memory_space<vmem>>, vector<16x16xbf16>
    %278 = arith.truncf %276 : vector<16x64xf32> to vector<16x64xbf16>
    %cst_115 = arith.constant dense<0.000000e+00> : vector<16x64xf32>
    %279 = tpu.matmul %277, %278, %cst_115 {dimension_numbers = #tpu.dot_dimension_numbers<[1], [0], [0], [1], [0, 0, 1, 1], [], []>} : vector<16x16xbf16>, vector<16x64xbf16>, vector<16x64xf32> -> vector<16x64xf32>
    %c288_116 = arith.constant 288 : index
    %c0_117 = arith.constant 0 : index
    %280 = vector.load %arg2[%c288_116, %c0_117] : memref<352x128xf32, #tpu.memory_space<vmem>>, vector<16x64xf32>
    %281 = arith.addf %279, %280 : vector<16x64xf32>
    %282 = arith.addf %173, %281 : vector<16x64xf32>
    %c0_118 = arith.constant 0 : index
    %c0_119 = arith.constant 0 : index
    %283 = vector.load %arg2[%c0_118, %c0_119] : memref<352x128xf32, #tpu.memory_space<vmem>>, vector<64x64xf32>
    %cst_120 = arith.constant dense<0.000000e+00> : vector<16x64xf32>
    %284 = tpu.matmul %282, %283, %cst_120 {dimension_numbers = #tpu.dot_dimension_numbers<[1], [0], [0], [1], [0, 0, 1, 1], [], []>} : vector<16x64xf32>, vector<64x64xf32>, vector<16x64xf32> -> vector<16x64xf32>
    %285 = arith.subf %282, %284 : vector<16x64xf32>
    %286 = arith.mulf %285, %285 : vector<16x64xf32>
    %cst_121 = arith.constant dense<0.000000e+00> : vector<16x64xf32>
    %287 = tpu.matmul %286, %283, %cst_121 {dimension_numbers = #tpu.dot_dimension_numbers<[1], [0], [0], [1], [0, 0, 1, 1], [], []>} : vector<16x64xf32>, vector<64x64xf32>, vector<16x64xf32> -> vector<16x64xf32>
    %cst_122 = arith.constant 9.99999997E-7 : f32
    %288 = vector.broadcast %cst_122 : f32 to vector<16x64xf32>
    %289 = arith.addf %287, %288 : vector<16x64xf32>
    %290 = math.rsqrt %289 : vector<16x64xf32>
    %291 = arith.mulf %285, %290 : vector<16x64xf32>
    %292 = arith.truncf %291 : vector<16x64xf32> to vector<16x64xbf16>
    %c608 = arith.constant 608 : index
    %c0_123 = arith.constant 0 : index
    %293 = vector.load %arg1[%c608, %c0_123] : memref<1056x128xbf16, #tpu.memory_space<vmem>>, vector<64x128xbf16>
    %cst_124 = arith.constant dense<0.000000e+00> : vector<16x128xf32>
    %294 = tpu.matmul %292, %293, %cst_124 {dimension_numbers = #tpu.dot_dimension_numbers<[1], [0], [0], [1], [0, 0, 1, 1], [], []>} : vector<16x64xbf16>, vector<64x128xbf16>, vector<16x128xf32> -> vector<16x128xf32>
    %c304 = arith.constant 304 : index
    %c0_125 = arith.constant 0 : index
    %295 = vector.load %arg2[%c304, %c0_125] : memref<352x128xf32, #tpu.memory_space<vmem>>, vector<1x128xf32>
    %296 = vector.broadcast %295 : vector<1x128xf32> to vector<16x128xf32>
    %297 = arith.addf %294, %296 : vector<16x128xf32>
    %cst_126 = arith.constant 5.000000e-01 : f32
    %298 = vector.broadcast %cst_126 : f32 to vector<16x128xf32>
    %299 = arith.mulf %298, %297 : vector<16x128xf32>
    %cst_127 = arith.constant 4.471500e-02 : f32
    %300 = vector.broadcast %cst_127 : f32 to vector<16x128xf32>
    %301 = arith.mulf %300, %297 : vector<16x128xf32>
    %302 = arith.mulf %301, %297 : vector<16x128xf32>
    %303 = arith.mulf %302, %297 : vector<16x128xf32>
    %304 = arith.addf %297, %303 : vector<16x128xf32>
    %cst_128 = arith.constant 0.797884583 : f32
    %305 = vector.broadcast %cst_128 : f32 to vector<16x128xf32>
    %306 = arith.mulf %305, %304 : vector<16x128xf32>
    %307 = math.tanh %306 : vector<16x128xf32>
    %cst_129 = arith.constant 1.000000e+00 : f32
    %308 = vector.broadcast %cst_129 : f32 to vector<16x128xf32>
    %309 = arith.addf %308, %307 : vector<16x128xf32>
    %310 = arith.mulf %299, %309 : vector<16x128xf32>
    %311 = arith.truncf %291 : vector<16x64xf32> to vector<16x64xbf16>
    %c672 = arith.constant 672 : index
    %c0_130 = arith.constant 0 : index
    %312 = vector.load %arg1[%c672, %c0_130] : memref<1056x128xbf16, #tpu.memory_space<vmem>>, vector<64x128xbf16>
    %cst_131 = arith.constant dense<0.000000e+00> : vector<16x128xf32>
    %313 = tpu.matmul %311, %312, %cst_131 {dimension_numbers = #tpu.dot_dimension_numbers<[1], [0], [0], [1], [0, 0, 1, 1], [], []>} : vector<16x64xbf16>, vector<64x128xbf16>, vector<16x128xf32> -> vector<16x128xf32>
    %c304_132 = arith.constant 304 : index
    %c0_133 = arith.constant 0 : index
    %314 = vector.load %arg2[%c304_132, %c0_133] : memref<352x128xf32, #tpu.memory_space<vmem>>, vector<1x128xf32>
    %315 = vector.broadcast %314 : vector<1x128xf32> to vector<16x128xf32>
    %316 = arith.addf %313, %315 : vector<16x128xf32>
    %cst_134 = arith.constant 5.000000e-01 : f32
    %317 = vector.broadcast %cst_134 : f32 to vector<16x128xf32>
    %318 = arith.mulf %317, %316 : vector<16x128xf32>
    %cst_135 = arith.constant 4.471500e-02 : f32
    %319 = vector.broadcast %cst_135 : f32 to vector<16x128xf32>
    %320 = arith.mulf %319, %316 : vector<16x128xf32>
    %321 = arith.mulf %320, %316 : vector<16x128xf32>
    %322 = arith.mulf %321, %316 : vector<16x128xf32>
    %323 = arith.addf %316, %322 : vector<16x128xf32>
    %cst_136 = arith.constant 0.797884583 : f32
    %324 = vector.broadcast %cst_136 : f32 to vector<16x128xf32>
    %325 = arith.mulf %324, %323 : vector<16x128xf32>
    %326 = math.tanh %325 : vector<16x128xf32>
    %cst_137 = arith.constant 1.000000e+00 : f32
    %327 = vector.broadcast %cst_137 : f32 to vector<16x128xf32>
    %328 = arith.addf %327, %326 : vector<16x128xf32>
    %329 = arith.mulf %318, %328 : vector<16x128xf32>
    %330 = arith.truncf %310 : vector<16x128xf32> to vector<16x128xbf16>
    %c736 = arith.constant 736 : index
    %c0_138 = arith.constant 0 : index
    %331 = vector.load %arg1[%c736, %c0_138] : memref<1056x128xbf16, #tpu.memory_space<vmem>>, vector<128x64xbf16>
    %cst_139 = arith.constant dense<0.000000e+00> : vector<16x64xf32>
    %332 = tpu.matmul %330, %331, %cst_139 {dimension_numbers = #tpu.dot_dimension_numbers<[1], [0], [0], [1], [0, 0, 1, 1], [], []>} : vector<16x128xbf16>, vector<128x64xbf16>, vector<16x64xf32> -> vector<16x64xf32>
    %333 = arith.addf %282, %332 : vector<16x64xf32>
    %334 = arith.truncf %329 : vector<16x128xf32> to vector<16x128xbf16>
    %c864 = arith.constant 864 : index
    %c0_140 = arith.constant 0 : index
    %335 = vector.load %arg1[%c864, %c0_140] : memref<1056x128xbf16, #tpu.memory_space<vmem>>, vector<128x64xbf16>
    %cst_141 = arith.constant dense<0.000000e+00> : vector<16x64xf32>
    %336 = tpu.matmul %334, %335, %cst_141 {dimension_numbers = #tpu.dot_dimension_numbers<[1], [0], [0], [1], [0, 0, 1, 1], [], []>} : vector<16x128xbf16>, vector<128x64xbf16>, vector<16x64xf32> -> vector<16x64xf32>
    %337 = arith.addf %333, %336 : vector<16x64xf32>
    %c320 = arith.constant 320 : index
    %c0_142 = arith.constant 0 : index
    %338 = vector.load %arg2[%c320, %c0_142] : memref<352x128xf32, #tpu.memory_space<vmem>>, vector<1x64xf32>
    %339 = vector.broadcast %338 : vector<1x64xf32> to vector<16x64xf32>
    %340 = arith.addf %337, %339 : vector<16x64xf32>
    %c0_143 = arith.constant 0 : index
    %c0_144 = arith.constant 0 : index
    %341 = vector.load %arg2[%c0_143, %c0_144] : memref<352x128xf32, #tpu.memory_space<vmem>>, vector<64x64xf32>
    %cst_145 = arith.constant dense<0.000000e+00> : vector<16x64xf32>
    %342 = tpu.matmul %340, %341, %cst_145 {dimension_numbers = #tpu.dot_dimension_numbers<[1], [0], [0], [1], [0, 0, 1, 1], [], []>} : vector<16x64xf32>, vector<64x64xf32>, vector<16x64xf32> -> vector<16x64xf32>
    %343 = arith.subf %340, %342 : vector<16x64xf32>
    %344 = arith.mulf %343, %343 : vector<16x64xf32>
    %cst_146 = arith.constant dense<0.000000e+00> : vector<16x64xf32>
    %345 = tpu.matmul %344, %341, %cst_146 {dimension_numbers = #tpu.dot_dimension_numbers<[1], [0], [0], [1], [0, 0, 1, 1], [], []>} : vector<16x64xf32>, vector<64x64xf32>, vector<16x64xf32> -> vector<16x64xf32>
    %cst_147 = arith.constant 9.99999997E-7 : f32
    %346 = vector.broadcast %cst_147 : f32 to vector<16x64xf32>
    %347 = arith.addf %345, %346 : vector<16x64xf32>
    %348 = math.rsqrt %347 : vector<16x64xf32>
    %349 = arith.mulf %343, %348 : vector<16x64xf32>
    %cst_148 = arith.constant dense<0.000000e+00> : vector<64xf32>
    %350 = vector.multi_reduction <add>, %349, %cst_148 [0] : vector<16x64xf32> to vector<64xf32>
    %351 = vector.shape_cast %350 : vector<64xf32> to vector<1x64xf32>
    %cst_149 = arith.constant 1.600000e+01 : f32
    %352 = vector.broadcast %cst_149 : f32 to vector<1x64xf32>
    %353 = arith.divf %351, %352 : vector<1x64xf32>
    %354 = arith.truncf %353 : vector<1x64xf32> to vector<1x64xbf16>
    %c992 = arith.constant 992 : index
    %c0_150 = arith.constant 0 : index
    %355 = vector.load %arg1[%c992, %c0_150] : memref<1056x128xbf16, #tpu.memory_space<vmem>>, vector<64x128xbf16>
    %cst_151 = arith.constant dense<0.000000e+00> : vector<1x128xf32>
    %356 = tpu.matmul %354, %355, %cst_151 {dimension_numbers = #tpu.dot_dimension_numbers<[1], [0], [0], [1], [0, 0, 1, 1], [], []>} : vector<1x64xbf16>, vector<64x128xbf16>, vector<1x128xf32> -> vector<1x128xf32>
    %c336 = arith.constant 336 : index
    %c0_152 = arith.constant 0 : index
    %357 = vector.load %arg2[%c336, %c0_152] : memref<352x128xf32, #tpu.memory_space<vmem>>, vector<1x128xf32>
    %358 = arith.addf %356, %357 : vector<1x128xf32>
    %359 = vector.shape_cast %358 : vector<1x128xf32> to vector<1x128xf32>
    %360 = vector.broadcast %359 : vector<1x128xf32> to vector<8x128xf32>
    %c0_153 = arith.constant 0 : index
    %c0_154 = arith.constant 0 : index
    %361 = vector.load %arg3[%c0_153, %c0_154] : memref<8x128xf32, #tpu.memory_space<vmem>>, vector<8x128xf32>
    tpu.vector_store %arg3[%c0_153, %c0_154], %360 {strides = array<i32>} : memref<8x128xf32, #tpu.memory_space<vmem>>, vector<8x128xf32>,
    return
  }
}

</mosaic_0001>

<llo_original>
// kernel: squeeze.1
$region0: #{squeeze.1}
  %s0 = inlined_call_operand.vmem [shape: f32[20], index: 0, kind: input, shape index: {}]
  %s1 = inlined_call_operand.hbm [shape: f32[2,10], index: 1, kind: output, shape index: {}]
  $region1: #{squeeze.1} parent=0
    #allocation0 [shape = 'u8[1024]{0}', space=vmem, size = 0x400, scoped, tag = 'operand span for operand 1']
    #allocation1 [shape = 's32[1]{0}', space=sflag, size = 0x4, scoped, tag = 'scoped memory for squeeze.1']
    #allocation2 [shape = 'u8[4096]{0}', space=vmem, size = 0x1000, scoped, tag = 'scoped mem for output reshape']
    #allocation3 [shape = 'u8[4096]{0}', space=vmem, size = 0x1000, scoped, tag = 'scoped mem for input reshape']
    %2 = vsyncpa [#allocation1], 0
    %s4 = sshll.u32 1, 1
    %s5 = ssub.s32 %s4, 1
    %v6 = vld [vmem:[%s0] sm:%s5]
    %7 = vst [vmem:[#allocation3] sm:%s5] %v6
    %v8 = vld [vmem:[#allocation3] sm:$0x1]
    %vm9 = vcmask 80896
    %10 = vst.msk [vmem:[#allocation2] sm:$0x1] %vm9, %v8
    %v11 = vld [vmem:[#allocation3] sm:$0x1]
    %12 = vrot.lane.b32.xlu0 %v11, 118
    %v13 = vpop.permute.xlu0 %12
    %vm14 = vcmask 80896
    %s15 = scalar_lea.vmem [#allocation2], 1
    %16 = vst.msk [vmem:[%s15] sm:$0x1] %vm14, %v13
    %s18 = sshll.u32 1, 2
    %s19 = ssub.s32 %s18, 1
    %v21 = vld [vmem:[#allocation2] sm:%s19]
    %s22 = sshll.u32 1, 2
    %s23 = ssub.s32 %s22, 1
    %24 = vst [vmem:[#allocation0] sm:%s23] %v21
    %s26 = ssub.s32 32, 32
    %27 = vsyncadd [#allocation1], %s26
    %s29 = sshll.u32 [#allocation0], 4
    %s30 = int_to_ptr.vmem [resolvable:$true] %s29
    %32 = dma.vmem_to_hbm [thread:$0]  %s30, 32, %s1, [#allocation1]
    %33 = dma.done [#allocation1], 32
    %34 = vsyncpa [#allocation1], 1

// kernel: forward.1
$region0: #{forward.1}
  #allocation0 [shape = 'u32[]', space=smem, size = 0x4, offset = 0x4, fixed_abs, tag = 'smem constant byte address 0x4 - core index']
  #allocation1 [shape = 'u32[144,128]{1,0:T(1,128)}', space=vmem, size = 0x12000, scoped, tag = 'internal scratch']
  %s0 = inlined_call_operand.vmem [shape: f32[16,96], index: 0, kind: input, shape index: {}]
  %s1 = inlined_call_operand.vmem [shape: bf16[1056,128], index: 1, kind: input, shape index: {}]
  %s2 = inlined_call_operand.vmem [shape: f32[352,128], index: 2, kind: input, shape index: {}]
  %s3 = inlined_call_operand.vmem [shape: f32[8,128], index: 3, kind: output, shape index: {}]
  %s4 = sld [smem:[#allocation0]]
  $region22: #{forward.1} parent=0
    _
  %s6 = ssub.s32 1, %s4
  %s7 = scalar_select 0, %s6, %s4
  // Predicated region
  $region2: #{forward.1} parent=0 // pred_check
    _
  $region3: #{forward.1} parent=0 // pred_check_branch
    %9 = sbr.rel (0) target = $region5
  $region4: #{forward.1} parent=0 // pred_region
    _
  $region5: #{forward.1} parent=0 // pred_fallthru
    _
  // Predicated region
  $region6: #{forward.1} parent=0 // pred_check
    _
  $region7: #{forward.1} parent=0 // pred_check_branch
    %11 = sbr.rel (0) target = $region9
  $region8: #{forward.1} parent=0 // pred_region
    _
  $region9: #{forward.1} parent=0 // pred_fallthru
    _
  // Predicated region
  $region10: #{forward.1} parent=0 // pred_check
    _
  $region11: #{forward.1} parent=0 // pred_check_branch
    %13 = sbr.rel (0) target = $region13
  $region12: #{forward.1} parent=0 // pred_region
    _
  $region13: #{forward.1} parent=0 // pred_fallthru
    _
  %v15 = vld [vmem:[%s0] sm:$0xff]
  %v16 = vld [vmem:[%s0 + $0x8] sm:$0xff]
  %v17 = vpack.c.bf16 %v16, %v15
  %v18 = vld [vmem:[%s1] sm:$0xf]
  %v19 = vld [vmem:[%s1 + $0x4] sm:$0xf]
  %v20 = vld [vmem:[%s1 + $0x8] sm:$0xf]
  %v21 = vld [vmem:[%s1 + $0xc] sm:$0xf]
  %v22 = vld [vmem:[%s1 + $0x10] sm:$0xf]
  %v23 = vld [vmem:[%s1 + $0x14] sm:$0xf]
  %v24 = vld [vmem:[%s1 + $0x18] sm:$0xf]
  %v25 = vld [vmem:[%s1 + $0x1c] sm:$0xf]
  %v26 = vld [vmem:[%s1 + $0x20] sm:$0xf]
  %v27 = vld [vmem:[%s1 + $0x24] sm:$0xf]
  %v28 = vld [vmem:[%s1 + $0x28] sm:$0xf]
  %v29 = vld [vmem:[%s1 + $0x2c] sm:$0xf]
  %v30 = vld [vmem:[%s2 + $0x40] sm:$0x1]
  %v31 = vlaneseq
  %v32 = vshrl.u32 %v31, 7
  %v33 = vsub.s32 0, %v32
  %v34 = vrot.slane %v30, %v33
  %v47 = vunpack.c.l.b16 %v18
  %v48 = vunpack.c.l.b16 %v19
  %v49 = vunpack.c.l.b16 %v20
  %v50 = vunpack.c.l.b16 %v21
  %v51 = vunpack.c.l.b16 %v22
  %v52 = vunpack.c.l.b16 %v23
  %v53 = vunpack.c.l.b16 %v24
  %v54 = vunpack.c.l.b16 %v25
  %v55 = vunpack.c.l.b16 %v26
  %v56 = vunpack.c.l.b16 %v27
  %v57 = vunpack.c.l.b16 %v28
  %v58 = vunpack.c.l.b16 %v29
  %v59 = vpack.c.b16 %v48, %v47
  %v60 = vpack.c.b16 %v50, %v49
  %v61 = vpack.c.b16 %v52, %v51
  %v62 = vpack.c.b16 %v54, %v53
  %v63 = vpack.c.b16 %v56, %v55
  %v64 = vpack.c.b16 %v58, %v57
  %vm71 = vcmask 785408
  %v73 = vsel %vm71, %v17, 0
  %75 = vmatprep.subr.bf16.mxu0 0
  %76 = vmatpush1.bf16.msra.mxu0 0
  %77 = vmatprep.subr.bf16.mxu0 0
  %78 = vmatpush1.bf16.msra.mxu0 0
  %79 = vmatprep.subr.bf16.mxu0 0
  %80 = vmatpush1.bf16.msra.mxu0 %v64
  %81 = vmatprep.subr.bf16.mxu0 0
  %82 = vmatpush1.bf16.msra.mxu0 %v63
  %83 = vmatprep.subr.bf16.mxu0 0
  %84 = vmatpush1.bf16.msra.mxu0 %v62
  %85 = vmatprep.subr.bf16.mxu0 0
  %86 = vmatpush1.bf16.msra.mxu0 %v61
  %87 = vmatprep.subr.bf16.mxu0 0
  %88 = vmatpush1.bf16.msra.mxu0 %v60
  %89 = vmatprep.subr.bf16.mxu0 0
  %90 = vmatpush1.bf16.msra.mxu0 %v59
  %91 = vmatprep.subr.bf16.mxu0 0
  %92 = vmatpush2.bf16.msra.mxu0 0
  %93 = vmatprep.subr.bf16.mxu0 0
  %94 = vmatpush2.bf16.msra.mxu0 0
  %95 = vmatprep.subr.bf16.mxu0 0
  %96 = vmatpush2.bf16.msra.mxu0 0
  %97 = vmatprep.subr.bf16.mxu0 0
  %98 = vmatpush2.bf16.msra.mxu0 0
  %99 = vmatprep.subr.bf16.mxu0 0
  %100 = vmatpush2.bf16.msra.mxu0 0
  %101 = vmatprep.subr.bf16.mxu0 0
  %102 = vmatpush2.bf16.msra.mxu0 0
  %103 = vmatprep.subr.bf16.mxu0 0
  %104 = vmatpush2.bf16.msra.mxu0 0
  %105 = vmatprep.subr.bf16.mxu0 0
  %106 = vmatpush2.bf16.msra.mxu0 0
  %107 = vmatprep.mubr.bf16.mxu0 0
  %108 = vmatmul.mubr.bf16.gmra.mxu0 %v73
  %v109 = vpop.f32.mrf.mxu0
  %v110 = vadd.f32 %v34, %v109
  %v111 = vpop.f32.mrf.mxu0
  %v112 = vpop.f32.mrf.mxu0
  %v113 = vadd.f32 %v34, %v112
  %v114 = vpop.f32.mrf.mxu0
  %115 = vdwg.mxu0
  %v116 = vld [vmem:[%s2] sm:$0xff]
  %v117 = vld [vmem:[%s2 + $0x8] sm:$0xff]
  %v118 = vld [vmem:[%s2 + $0x10] sm:$0xff]
  %v119 = vld [vmem:[%s2 + $0x18] sm:$0xff]
  %v120 = vld [vmem:[%s2 + $0x20] sm:$0xff]
  %v121 = vld [vmem:[%s2 + $0x28] sm:$0xff]
  %v122 = vld [vmem:[%s2 + $0x30] sm:$0xff]
  %v123 = vld [vmem:[%s2 + $0x38] sm:$0xff]
  %vm124 = vcmask 523264
  %v126 = vsel %vm124, %v110, 0
  %v129 = vsel %vm124, %v113, 0
  %131 = vmatprep.subr.mxu0 0.0
  %132 = vmatpush1.msra.mxu0 0.0
  %133 = vmatprep.subr.mxu0 0.0
  %134 = vmatpush1.msra.mxu0 0.0
  %135 = vmatprep.subr.mxu0 0.0
  %136 = vmatpush1.msra.mxu0 0.0
  %137 = vmatprep.subr.mxu0 0.0
  %138 = vmatpush1.msra.mxu0 0.0
  %139 = vmatprep.subr.mxu0 0.0
  %140 = vmatpush1.msra.mxu0 0.0
  %141 = vmatprep.subr.mxu0 0.0
  %142 = vmatpush1.msra.mxu0 0.0
  %143 = vmatprep.subr.mxu0 0.0
  %144 = vmatpush1.msra.mxu0 0.0
  %145 = vmatprep.subr.mxu0 0.0
  %146 = vmatpush1.msra.mxu0 0.0
  %147 = vmatprep.subr.mxu0 0.0
  %148 = vmatpush1.msra.mxu0 %v123
  %149 = vmatprep.subr.mxu0 0.0
  %150 = vmatpush1.msra.mxu0 %v122
  %151 = vmatprep.subr.mxu0 0.0
  %152 = vmatpush1.msra.mxu0 %v121
  %153 = vmatprep.subr.mxu0 0.0
  %154 = vmatpush1.msra.mxu0 %v120
  %155 = vmatprep.subr.mxu0 0.0
  %156 = vmatpush1.msra.mxu0 %v119
  %157 = vmatprep.subr.mxu0 0.0
  %158 = vmatpush1.msra.mxu0 %v118
  %159 = vmatprep.subr.mxu0 0.0
  %160 = vmatpush1.msra.mxu0 %v117
  %161 = vmatprep.subr.mxu0 0.0
  %162 = vmatpush1.msra.mxu0 %v116
  %163 = vmatprep.subr.mxu0 0.0
  %164 = vmatpush2.msra.mxu0 0.0
  %165 = vmatprep.subr.mxu0 0.0
  %166 = vmatpush2.msra.mxu0 0.0
  %167 = vmatprep.subr.mxu0 0.0
  %168 = vmatpush2.msra.mxu0 0.0
  %169 = vmatprep.subr.mxu0 0.0
  %170 = vmatpush2.msra.mxu0 0.0
  %171 = vmatprep.subr.mxu0 0.0
  %172 = vmatpush2.msra.mxu0 0.0
  %173 = vmatprep.subr.mxu0 0.0
  %174 = vmatpush2.msra.mxu0 0.0
  %175 = vmatprep.subr.mxu0 0.0
  %176 = vmatpush2.msra.mxu0 0.0
  %177 = vmatprep.subr.mxu0 0.0
  %178 = vmatpush2.msra.mxu0 0.0
  %179 = vmatprep.subr.mxu0 0.0
  %180 = vmatpush2.msra.mxu0 0.0
  %181 = vmatprep.subr.mxu0 0.0
  %182 = vmatpush2.msra.mxu0 0.0
  %183 = vmatprep.subr.mxu0 0.0
  %184 = vmatpush2.msra.mxu0 0.0
  %185 = vmatprep.subr.mxu0 0.0
  %186 = vmatpush2.msra.mxu0 0.0
  %187 = vmatprep.subr.mxu0 0.0
  %188 = vmatpush2.msra.mxu0 0.0
  %189 = vmatprep.subr.mxu0 0.0
  %190 = vmatpush2.msra.mxu0 0.0
  %191 = vmatprep.subr.mxu0 0.0
  %192 = vmatpush2.msra.mxu0 0.0
  %193 = vmatprep.subr.mxu0 0.0
  %194 = vmatpush2.msra.mxu0 0.0
  %195 = vmatprep.mubr.f32.mxu0 0.0
  %196 = vmatmul.mubr.f32.gmra.mxu0 %v126
  %v197 = vpop.f32.mrf.mxu0
  %v198 = vadd.f32 0.0, %v197
  %v199 = vpop.f32.mrf.mxu0
  %200 = vmatprep.mubr.f32.mxu0 0.0
  %201 = vmatmul.mubr.f32.gmra.mxu0 %v129
  %v202 = vpop.f32.mrf.mxu0
  %v203 = vadd.f32 0.0, %v202
  %v204 = vpop.f32.mrf.mxu0
  %205 = vdwg.mxu0
  %v206 = vsub.f32 %v110, %v198
  %v207 = vsub.f32 %v113, %v203
  %v208 = vmul.f32 %v206, %v206
  %v209 = vmul.f32 %v207, %v207
  %v211 = vsel %vm124, %v208, 0
  %v214 = vsel %vm124, %v209, 0
  %216 = vmatprep.subr.mxu0 0.0
  %217 = vmatpush1.msra.mxu0 0.0
  %218 = vmatprep.subr.mxu0 0.0
  %219 = vmatpush1.msra.mxu0 0.0
  %220 = vmatprep.subr.mxu0 0.0
  %221 = vmatpush1.msra.mxu0 0.0
  %222 = vmatprep.subr.mxu0 0.0
  %223 = vmatpush1.msra.mxu0 0.0
  %224 = vmatprep.subr.mxu0 0.0
  %225 = vmatpush1.msra.mxu0 0.0
  %226 = vmatprep.subr.mxu0 0.0
  %227 = vmatpush1.msra.mxu0 0.0
  %228 = vmatprep.subr.mxu0 0.0
  %229 = vmatpush1.msra.mxu0 0.0
  %230 = vmatprep.subr.mxu0 0.0
  %231 = vmatpush1.msra.mxu0 0.0
  %232 = vmatprep.subr.mxu0 0.0
  %233 = vmatpush1.msra.mxu0 %v123
  %234 = vmatprep.subr.mxu0 0.0
  %235 = vmatpush1.msra.mxu0 %v122
  %236 = vmatprep.subr.mxu0 0.0
  %237 = vmatpush1.msra.mxu0 %v121
  %238 = vmatprep.subr.mxu0 0.0
  %239 = vmatpush1.msra.mxu0 %v120
  %240 = vmatprep.subr.mxu0 0.0
  %241 = vmatpush1.msra.mxu0 %v119
  %242 = vmatprep.subr.mxu0 0.0
  %243 = vmatpush1.msra.mxu0 %v118
  %244 = vmatprep.subr.mxu0 0.0
  %245 = vmatpush1.msra.mxu0 %v117
  %246 = vmatprep.subr.mxu0 0.0
  %247 = vmatpush1.msra.mxu0 %v116
  %248 = vmatprep.subr.mxu0 0.0
  %249 = vmatpush2.msra.mxu0 0.0
  %250 = vmatprep.subr.mxu0 0.0
  %251 = vmatpush2.msra.mxu0 0.0
  %252 = vmatprep.subr.mxu0 0.0
  %253 = vmatpush2.msra.mxu0 0.0
  %254 = vmatprep.subr.mxu0 0.0
  %255 = vmatpush2.msra.mxu0 0.0
  %256 = vmatprep.subr.mxu0 0.0
  %257 = vmatpush2.msra.mxu0 0.0
  %258 = vmatprep.subr.mxu0 0.0
  %259 = vmatpush2.msra.mxu0 0.0
  %260 = vmatprep.subr.mxu0 0.0
  %261 = vmatpush2.msra.mxu0 0.0
  %262 = vmatprep.subr.mxu0 0.0
  %263 = vmatpush2.msra.mxu0 0.0
  %264 = vmatprep.subr.mxu0 0.0
  %265 = vmatpush2.msra.mxu0 0.0
  %266 = vmatprep.subr.mxu0 0.0
  %267 = vmatpush2.msra.mxu0 0.0
  %268 = vmatprep.subr.mxu0 0.0
  %269 = vmatpush2.msra.mxu0 0.0
  %270 = vmatprep.subr.mxu0 0.0
  %271 = vmatpush2.msra.mxu0 0.0
  %272 = vmatprep.subr.mxu0 0.0
  %273 = vmatpush2.msra.mxu0 0.0
  %274 = vmatprep.subr.mxu0 0.0
  %275 = vmatpush2.msra.mxu0 0.0
  %276 = vmatprep.subr.mxu0 0.0
  %277 = vmatpush2.msra.mxu0 0.0
  %278 = vmatprep.subr.mxu0 0.0
  %279 = vmatpush2.msra.mxu0 0.0
  %280 = vmatprep.mubr.f32.mxu0 0.0
  %281 = vmatmul.mubr.f32.gmra.mxu0 %v211
  %v282 = vpop.f32.mrf.mxu0
  %v283 = vadd.f32 1e-06, %v282
  %v284 = vpop.f32.mrf.mxu0
  %285 = vmatprep.mubr.f32.mxu0 0.0
  %286 = vmatmul.mubr.f32.gmra.mxu0 %v214
  %v287 = vpop.f32.mrf.mxu0
  %v288 = vadd.f32 1e-06, %v287
  %v289 = vpop.f32.mrf.mxu0
  %290 = vdwg.mxu0
  %v291 = vrsqrt.pop %v283
  %v292 = vrsqrt.pop %v288
  %v293 = vmul.f32 %v206, %v291
  %v294 = vmul.f32 %v207, %v292
  %v295 = vld [vmem:[%s2 + $0x50] sm:$0x1]
  %v296 = vlaneseq
  %v297 = vshrl.u32 %v296, 7
  %v298 = vsub.s32 0, %v297
  %v299 = vrot.slane %v295, %v298
  %v300 = vmul.f32 %v293, %v299
  %v301 = vmul.f32 %v294, %v299
  %v302 = vld [vmem:[%s2 + $0x60] sm:$0x1]
  %v303 = vlaneseq
  %v304 = vshrl.u32 %v303, 7
  %v305 = vsub.s32 0, %v304
  %v306 = vrot.slane %v302, %v305
  %v307 = vadd.f32 %v300, %v306
  %v308 = vadd.f32 %v301, %v306
  %v309 = vld [vmem:[%s1 + $0x30] sm:$0xf]
  %v310 = vld [vmem:[%s1 + $0x34] sm:$0xf]
  %v311 = vpack.c.bf16 %v308, %v307
  %v312 = vld [vmem:[%s2 + $0x70] sm:$0xff]
  %v313 = vld [vmem:[%s2 + $0x78] sm:$0xff]
  %v316 = vunpack.c.l.b16 %v309
  %v317 = vunpack.c.l.b16 %v310
  %v318 = vpack.c.b16 %v317, %v316
  %vm319 = vcmask 130048
  %v321 = vsel %vm319, %v318, 0
  %323 = vmatprep.subr.bf16.mxu0 0
  %324 = vmatpush1.bf16.msra.mxu0 0
  %325 = vmatprep.subr.bf16.mxu0 0
  %326 = vmatpush1.bf16.msra.mxu0 0
  %327 = vmatprep.subr.bf16.mxu0 0
  %328 = vmatpush1.bf16.msra.mxu0 0
  %329 = vmatprep.subr.bf16.mxu0 0
  %330 = vmatpush1.bf16.msra.mxu0 0
  %331 = vmatprep.subr.bf16.mxu0 0
  %332 = vmatpush1.bf16.msra.mxu0 0
  %333 = vmatprep.subr.bf16.mxu0 0
  %334 = vmatpush1.bf16.msra.mxu0 0
  %335 = vmatprep.subr.bf16.mxu0 0
  %336 = vmatpush1.bf16.msra.mxu0 0
  %337 = vmatprep.subr.bf16.mxu0 0
  %338 = vmatpush1.bf16.msra.mxu0 %v311
  %339 = vmatprep.subr.bf16.mxu0 0
  %340 = vmatpush2.bf16.msra.mxu0 0
  %341 = vmatprep.subr.bf16.mxu0 0
  %342 = vmatpush2.bf16.msra.mxu0 0
  %343 = vmatprep.subr.bf16.mxu0 0
  %344 = vmatpush2.bf16.msra.mxu0 0
  %345 = vmatprep.subr.bf16.mxu0 0
  %346 = vmatpush2.bf16.msra.mxu0 0
  %347 = vmatprep.subr.bf16.mxu0 0
  %348 = vmatpush2.bf16.msra.mxu0 0
  %349 = vmatprep.subr.bf16.mxu0 0
  %350 = vmatpush2.bf16.msra.mxu0 0
  %351 = vmatprep.subr.bf16.mxu0 0
  %352 = vmatpush2.bf16.msra.mxu0 0
  %353 = vmatprep.subr.bf16.mxu0 0
  %354 = vmatpush2.bf16.msra.mxu0 0
  %355 = vmatprep.mubr.bf16.mxu0 0
  %356 = vmatmul.mubr.bf16.gmra.mxu0 %v321
  %v357 = vpop.f32.mrf.mxu0
  %v358 = vadd.f32 %v312, %v357
  %v359 = vpop.f32.mrf.mxu0
  %v360 = vpop.f32.mrf.mxu0
  %v361 = vadd.f32 %v313, %v360
  %v362 = vpop.f32.mrf.mxu0
  %363 = vdwg.mxu0
  %v364 = vld [vmem:[%s1 + $0x38] sm:$0xf]
  %v365 = vld [vmem:[%s1 + $0x3c] sm:$0xf]
  %v366 = vld [vmem:[%s1 + $0x40] sm:$0xf]
  %v367 = vld [vmem:[%s1 + $0x44] sm:$0xf]
  %v368 = vld [vmem:[%s2 + $0x80] sm:$0xff]
  %v369 = vld [vmem:[%s2 + $0x88] sm:$0xff]
  %v370 = vld [vmem:[%s2 + $0x90] sm:$0xff]
  %v371 = vld [vmem:[%s2 + $0x98] sm:$0xff]
  %v372 = vmul.f32 %v358, 0.5
  %v373 = vmul.f32 %v361, 0.5
  %v374 = vmul.f32 %v358, 0.044715
  %v375 = vmul.f32 %v361, 0.044715
  %v376 = vmul.f32 %v374, %v358
  %v377 = vmul.f32 %v375, %v361
  %v378 = vmul.f32 %v376, %v358
  %v379 = vmul.f32 %v377, %v361
  %v380 = vadd.f32 %v358, %v378
  %v381 = vadd.f32 %v361, %v379
  %v382 = vmul.f32 %v380, 0.7978846
  %v383 = vmul.f32 %v381, 0.7978846
  %v384 = vtanh.pop %v382
  %v385 = vtanh.pop %v383
  %v386 = vadd.f32 %v384, 1.0
  %v387 = vadd.f32 %v385, 1.0
  %v388 = vmul.f32 %v372, %v386
  %v389 = vmul.f32 %v373, %v387
  %v390 = vpack.c.bf16 %v389, %v388
  %v393 = vunpack.c.l.b16 %v364
  %v394 = vunpack.c.l.b16 %v365
  %v395 = vpack.c.b16 %v394, %v393
  %v397 = vsel %vm319, %v395, 0
  %399 = vmatprep.subr.bf16.mxu0 0
  %400 = vmatpush1.bf16.msra.mxu0 0
  %401 = vmatprep.subr.bf16.mxu0 0
  %402 = vmatpush1.bf16.msra.mxu0 0
  %403 = vmatprep.subr.bf16.mxu0 0
  %404 = vmatpush1.bf16.msra.mxu0 0
  %405 = vmatprep.subr.bf16.mxu0 0
  %406 = vmatpush1.bf16.msra.mxu0 0
  %407 = vmatprep.subr.bf16.mxu0 0
  %408 = vmatpush1.bf16.msra.mxu0 0
  %409 = vmatprep.subr.bf16.mxu0 0
  %410 = vmatpush1.bf16.msra.mxu0 0
  %411 = vmatprep.subr.bf16.mxu0 0
  %412 = vmatpush1.bf16.msra.mxu0 0
  %413 = vmatprep.subr.bf16.mxu0 0
  %414 = vmatpush1.bf16.msra.mxu0 %v390
  %415 = vmatprep.subr.bf16.mxu0 0
  %416 = vmatpush2.bf16.msra.mxu0 0
  %417 = vmatprep.subr.bf16.mxu0 0
  %418 = vmatpush2.bf16.msra.mxu0 0
  %419 = vmatprep.subr.bf16.mxu0 0
  %420 = vmatpush2.bf16.msra.mxu0 0
  %421 = vmatprep.subr.bf16.mxu0 0
  %422 = vmatpush2.bf16.msra.mxu0 0
  %423 = vmatprep.subr.bf16.mxu0 0
  %424 = vmatpush2.bf16.msra.mxu0 0
  %425 = vmatprep.subr.bf16.mxu0 0
  %426 = vmatpush2.bf16.msra.mxu0 0
  %427 = vmatprep.subr.bf16.mxu0 0
  %428 = vmatpush2.bf16.msra.mxu0 0
  %429 = vmatprep.subr.bf16.mxu0 0
  %430 = vmatpush2.bf16.msra.mxu0 0
  %431 = vmatprep.mubr.bf16.mxu0 0
  %432 = vmatmul.mubr.bf16.gmra.mxu0 %v397
  %v433 = vpop.f32.mrf.mxu0
  %v434 = vadd.f32 %v368, %v433
  %v435 = vpop.f32.mrf.mxu0
  %v436 = vpop.f32.mrf.mxu0
  %v437 = vadd.f32 %v369, %v436
  %v438 = vpop.f32.mrf.mxu0
  %439 = vdwg.mxu0
  %v440 = vmul.f32 %v434, 0.5
  %v441 = vmul.f32 %v437, 0.5
  %v442 = vmul.f32 %v434, 0.044715
  %v443 = vmul.f32 %v437, 0.044715
  %v444 = vmul.f32 %v442, %v434
  %v445 = vmul.f32 %v443, %v437
  %v446 = vmul.f32 %v444, %v434
  %v447 = vmul.f32 %v445, %v437
  %v448 = vadd.f32 %v434, %v446
  %v449 = vadd.f32 %v437, %v447
  %v450 = vmul.f32 %v448, 0.7978846
  %v451 = vmul.f32 %v449, 0.7978846
  %v452 = vtanh.pop %v450
  %v453 = vtanh.pop %v451
  %v454 = vadd.f32 %v452, 1.0
  %v455 = vadd.f32 %v453, 1.0
  %v456 = vmul.f32 %v440, %v454
  %v457 = vmul.f32 %v441, %v455
  %v458 = vpack.c.bf16 %v457, %v456
  %v461 = vunpack.c.l.b16 %v366
  %v462 = vunpack.c.l.b16 %v367
  %v463 = vpack.c.b16 %v462, %v461
  %v465 = vsel %vm319, %v463, 0
  %467 = vmatprep.subr.bf16.mxu0 0
  %468 = vmatpush1.bf16.msra.mxu0 0
  %469 = vmatprep.subr.bf16.mxu0 0
  %470 = vmatpush1.bf16.msra.mxu0 0
  %471 = vmatprep.subr.bf16.mxu0 0
  %472 = vmatpush1.bf16.msra.mxu0 0
  %473 = vmatprep.subr.bf16.mxu0 0
  %474 = vmatpush1.bf16.msra.mxu0 0
  %475 = vmatprep.subr.bf16.mxu0 0
  %476 = vmatpush1.bf16.msra.mxu0 0
  %477 = vmatprep.subr.bf16.mxu0 0
  %478 = vmatpush1.bf16.msra.mxu0 0
  %479 = vmatprep.subr.bf16.mxu0 0
  %480 = vmatpush1.bf16.msra.mxu0 0
  %481 = vmatprep.subr.bf16.mxu0 0
  %482 = vmatpush1.bf16.msra.mxu0 %v458
  %483 = vmatprep.subr.bf16.mxu0 0
  %484 = vmatpush2.bf16.msra.mxu0 0
  %485 = vmatprep.subr.bf16.mxu0 0
  %486 = vmatpush2.bf16.msra.mxu0 0
  %487 = vmatprep.subr.bf16.mxu0 0
  %488 = vmatpush2.bf16.msra.mxu0 0
  %489 = vmatprep.subr.bf16.mxu0 0
  %490 = vmatpush2.bf16.msra.mxu0 0
  %491 = vmatprep.subr.bf16.mxu0 0
  %492 = vmatpush2.bf16.msra.mxu0 0
  %493 = vmatprep.subr.bf16.mxu0 0
  %494 = vmatpush2.bf16.msra.mxu0 0
  %495 = vmatprep.subr.bf16.mxu0 0
  %496 = vmatpush2.bf16.msra.mxu0 0
  %497 = vmatprep.subr.bf16.mxu0 0
  %498 = vmatpush2.bf16.msra.mxu0 0
  %499 = vmatprep.mubr.bf16.mxu0 0
  %500 = vmatmul.mubr.bf16.gmra.mxu0 %v465
  %v501 = vpop.f32.mrf.mxu0
  %v502 = vadd.f32 %v370, %v501
  %v503 = vpop.f32.mrf.mxu0
  %v504 = vpop.f32.mrf.mxu0
  %v505 = vadd.f32 %v371, %v504
  %v506 = vpop.f32.mrf.mxu0
  %507 = vdwg.mxu0
  %v508 = vadd.f32 %v502, %v358
  %v509 = vadd.f32 %v505, %v361
  %v510 = vmul.f32 %v508, 0.5
  %v511 = vmul.f32 %v509, 0.5
  %v512 = vmul.f32 %v508, 0.044715
  %v513 = vmul.f32 %v509, 0.044715
  %v514 = vmul.f32 %v512, %v508
  %v515 = vmul.f32 %v513, %v509
  %v516 = vmul.f32 %v514, %v508
  %v517 = vmul.f32 %v515, %v509
  %v518 = vadd.f32 %v508, %v516
  %v519 = vadd.f32 %v509, %v517
  %v520 = vmul.f32 %v518, 0.7978846
  %v521 = vmul.f32 %v519, 0.7978846
  %v522 = vtanh.pop %v520
  %v523 = vtanh.pop %v521
  %v524 = vadd.f32 %v522, 1.0
  %v525 = vadd.f32 %v523, 1.0
  %v526 = vmul.f32 %v510, %v524
  %v527 = vmul.f32 %v511, %v525
  %v528 = vpack.c.bf16 %v527, %v526
  %529 = vmatprep.subr.bf16.mxu0 0
  %530 = vmatpush1.bf16.msra.mxu0 0
  %531 = vmatprep.subr.bf16.mxu0 0
  %532 = vmatpush1.bf16.msra.mxu0 0
  %533 = vmatprep.subr.bf16.mxu0 0
  %534 = vmatpush1.bf16.msra.mxu0 0
  %535 = vmatprep.subr.bf16.mxu0 0
  %536 = vmatpush1.bf16.msra.mxu0 0
  %537 = vmatprep.subr.bf16.mxu0 0
  %538 = vmatpush1.bf16.msra.mxu0 0
  %539 = vmatprep.subr.bf16.mxu0 0
  %540 = vmatpush1.bf16.msra.mxu0 0
  %541 = vmatprep.subr.bf16.mxu0 0
  %542 = vmatpush1.bf16.msra.mxu0 0
  %543 = vmatprep.subr.bf16.mxu0 0
  %544 = vmatpush1.bf16.msra.mxu0 %v528
  %545 = vmatprep.subr.bf16.mxu0 0
  %546 = vmatpush2.bf16.msra.mxu0 0
  %547 = vmatprep.subr.bf16.mxu0 0
  %548 = vmatpush2.bf16.msra.mxu0 0
  %549 = vmatprep.subr.bf16.mxu0 0
  %550 = vmatpush2.bf16.msra.mxu0 0
  %551 = vmatprep.subr.bf16.mxu0 0
  %552 = vmatpush2.bf16.msra.mxu0 0
  %553 = vmatprep.subr.bf16.mxu0 0
  %554 = vmatpush2.bf16.msra.mxu0 0
  %555 = vmatprep.subr.bf16.mxu0 0
  %556 = vmatpush2.bf16.msra.mxu0 0
  %557 = vmatprep.subr.bf16.mxu0 0
  %558 = vmatpush2.bf16.msra.mxu0 0
  %559 = vmatprep.subr.bf16.mxu0 0
  %560 = vmatpush2.bf16.msra.mxu0 0
  %561 = vmatprep.mubr.bf16.mxu0 0
  %562 = vmatmul.mubr.bf16.gmra.mxu0 %v397
  %v563 = vpop.f32.mrf.mxu0
  %v564 = vadd.f32 %v368, %v563
  %v565 = vpop.f32.mrf.mxu0
  %v566 = vpop.f32.mrf.mxu0
  %v567 = vadd.f32 %v369, %v566
  %v568 = vpop.f32.mrf.mxu0
  %569 = vdwg.mxu0
  %v570 = vmul.f32 %v564, 0.5
  %v571 = vmul.f32 %v567, 0.5
  %v572 = vmul.f32 %v564, 0.044715
  %v573 = vmul.f32 %v567, 0.044715
  %v574 = vmul.f32 %v572, %v564
  %v575 = vmul.f32 %v573, %v567
  %v576 = vmul.f32 %v574, %v564
  %v577 = vmul.f32 %v575, %v567
  %v578 = vadd.f32 %v564, %v576
  %v579 = vadd.f32 %v567, %v577
  %v580 = vmul.f32 %v578, 0.7978846
  %v581 = vmul.f32 %v579, 0.7978846
  %v582 = vtanh.pop %v580
  %v583 = vtanh.pop %v581
  %v584 = vadd.f32 %v582, 1.0
  %v585 = vadd.f32 %v583, 1.0
  %v586 = vmul.f32 %v570, %v584
  %v587 = vmul.f32 %v571, %v585
  %v588 = vpack.c.bf16 %v587, %v586
  %589 = vmatprep.subr.bf16.mxu0 0
  %590 = vmatpush1.bf16.msra.mxu0 0
  %591 = vmatprep.subr.bf16.mxu0 0
  %592 = vmatpush1.bf16.msra.mxu0 0
  %593 = vmatprep.subr.bf16.mxu0 0
  %594 = vmatpush1.bf16.msra.mxu0 0
  %595 = vmatprep.subr.bf16.mxu0 0
  %596 = vmatpush1.bf16.msra.mxu0 0
  %597 = vmatprep.subr.bf16.mxu0 0
  %598 = vmatpush1.bf16.msra.mxu0 0
  %599 = vmatprep.subr.bf16.mxu0 0
  %600 = vmatpush1.bf16.msra.mxu0 0
  %601 = vmatprep.subr.bf16.mxu0 0
  %602 = vmatpush1.bf16.msra.mxu0 0
  %603 = vmatprep.subr.bf16.mxu0 0
  %604 = vmatpush1.bf16.msra.mxu0 %v588
  %605 = vmatprep.subr.bf16.mxu0 0
  %606 = vmatpush2.bf16.msra.mxu0 0
  %607 = vmatprep.subr.bf16.mxu0 0
  %608 = vmatpush2.bf16.msra.mxu0 0
  %609 = vmatprep.subr.bf16.mxu0 0
  %610 = vmatpush2.bf16.msra.mxu0 0
  %611 = vmatprep.subr.bf16.mxu0 0
  %612 = vmatpush2.bf16.msra.mxu0 0
  %613 = vmatprep.subr.bf16.mxu0 0
  %614 = vmatpush2.bf16.msra.mxu0 0
  %615 = vmatprep.subr.bf16.mxu0 0
  %616 = vmatpush2.bf16.msra.mxu0 0
  %617 = vmatprep.subr.bf16.mxu0 0
  %618 = vmatpush2.bf16.msra.mxu0 0
  %619 = vmatprep.subr.bf16.mxu0 0
  %620 = vmatpush2.bf16.msra.mxu0 0
  %621 = vmatprep.mubr.bf16.mxu0 0
  %622 = vmatmul.mubr.bf16.gmra.mxu0 %v465
  %v623 = vpop.f32.mrf.mxu0
  %v624 = vadd.f32 %v370, %v623
  %v625 = vpop.f32.mrf.mxu0
  %v626 = vpop.f32.mrf.mxu0
  %v627 = vadd.f32 %v371, %v626
  %v628 = vpop.f32.mrf.mxu0
  %629 = vdwg.mxu0
  %v630 = vadd.f32 %v624, %v358
  %v631 = vadd.f32 %v627, %v361
  %v632 = vmul.f32 %v630, 0.5
  %v633 = vmul.f32 %v631, 0.5
  %v634 = vmul.f32 %v630, 0.044715
  %v635 = vmul.f32 %v631, 0.044715
  %v636 = vmul.f32 %v634, %v630
  %v637 = vmul.f32 %v635, %v631
  %v638 = vmul.f32 %v636, %v630
  %v639 = vmul.f32 %v637, %v631
  %v640 = vadd.f32 %v630, %v638
  %v641 = vadd.f32 %v631, %v639
  %v642 = vmul.f32 %v640, 0.7978846
  %v643 = vmul.f32 %v641, 0.7978846
  %v644 = vtanh.pop %v642
  %v645 = vtanh.pop %v643
  %v646 = vadd.f32 %v644, 1.0
  %v647 = vadd.f32 %v645, 1.0
  %v648 = vmul.f32 %v632, %v646
  %v649 = vmul.f32 %v633, %v647
  %v650 = vld [vmem:[%s1 + $0x48] sm:$0xf]
  %v651 = vld [vmem:[%s1 + $0x4c] sm:$0xf]
  %v652 = vpack.c.bf16 %v649, %v648
  %v653 = vld [vmem:[%s2 + $0xa0] sm:$0xff]
  %v654 = vld [vmem:[%s2 + $0xa8] sm:$0xff]
  %v657 = vunpack.c.l.b16 %v650
  %v658 = vunpack.c.l.b16 %v651
  %v659 = vpack.c.b16 %v658, %v657
  %v661 = vsel %vm319, %v659, 0
  %663 = vmatprep.subr.bf16.mxu0 0
  %664 = vmatpush1.bf16.msra.mxu0 0
  %665 = vmatprep.subr.bf16.mxu0 0
  %666 = vmatpush1.bf16.msra.mxu0 0
  %667 = vmatprep.subr.bf16.mxu0 0
  %668 = vmatpush1.bf16.msra.mxu0 0
  %669 = vmatprep.subr.bf16.mxu0 0
  %670 = vmatpush1.bf16.msra.mxu0 0
  %671 = vmatprep.subr.bf16.mxu0 0
  %672 = vmatpush1.bf16.msra.mxu0 0
  %673 = vmatprep.subr.bf16.mxu0 0
  %674 = vmatpush1.bf16.msra.mxu0 0
  %675 = vmatprep.subr.bf16.mxu0 0
  %676 = vmatpush1.bf16.msra.mxu0 0
  %677 = vmatprep.subr.bf16.mxu0 0
  %678 = vmatpush1.bf16.msra.mxu0 %v652
  %679 = vmatprep.subr.bf16.mxu0 0
  %680 = vmatpush2.bf16.msra.mxu0 0
  %681 = vmatprep.subr.bf16.mxu0 0
  %682 = vmatpush2.bf16.msra.mxu0 0
  %683 = vmatprep.subr.bf16.mxu0 0
  %684 = vmatpush2.bf16.msra.mxu0 0
  %685 = vmatprep.subr.bf16.mxu0 0
  %686 = vmatpush2.bf16.msra.mxu0 0
  %687 = vmatprep.subr.bf16.mxu0 0
  %688 = vmatpush2.bf16.msra.mxu0 0
  %689 = vmatprep.subr.bf16.mxu0 0
  %690 = vmatpush2.bf16.msra.mxu0 0
  %691 = vmatprep.subr.bf16.mxu0 0
  %692 = vmatpush2.bf16.msra.mxu0 0
  %693 = vmatprep.subr.bf16.mxu0 0
  %694 = vmatpush2.bf16.msra.mxu0 0
  %695 = vmatprep.mubr.bf16.mxu0 0
  %696 = vmatmul.mubr.bf16.gmra.mxu0 %v661
  %v697 = vpop.f32.mrf.mxu0
  %v698 = vadd.f32 %v653, %v697
  %v699 = vpop.f32.mrf.mxu0
  %v700 = vpop.f32.mrf.mxu0
  %v701 = vadd.f32 %v654, %v700
  %v702 = vpop.f32.mrf.mxu0
  %703 = vdwg.mxu0
  %v704 = vadd.f32 %v110, %v698
  %v705 = vadd.f32 %v113, %v701
  %v707 = vsel %vm124, %v704, 0
  %v710 = vsel %vm124, %v705, 0
  %712 = vmatprep.subr.mxu0 0.0
  %713 = vmatpush1.msra.mxu0 0.0
  %714 = vmatprep.subr.mxu0 0.0
  %715 = vmatpush1.msra.mxu0 0.0
  %716 = vmatprep.subr.mxu0 0.0
  %717 = vmatpush1.msra.mxu0 0.0
  %718 = vmatprep.subr.mxu0 0.0
  %719 = vmatpush1.msra.mxu0 0.0
  %720 = vmatprep.subr.mxu0 0.0
  %721 = vmatpush1.msra.mxu0 0.0
  %722 = vmatprep.subr.mxu0 0.0
  %723 = vmatpush1.msra.mxu0 0.0
  %724 = vmatprep.subr.mxu0 0.0
  %725 = vmatpush1.msra.mxu0 0.0
  %726 = vmatprep.subr.mxu0 0.0
  %727 = vmatpush1.msra.mxu0 0.0
  %728 = vmatprep.subr.mxu0 0.0
  %729 = vmatpush1.msra.mxu0 %v123
  %730 = vmatprep.subr.mxu0 0.0
  %731 = vmatpush1.msra.mxu0 %v122
  %732 = vmatprep.subr.mxu0 0.0
  %733 = vmatpush1.msra.mxu0 %v121
  %734 = vmatprep.subr.mxu0 0.0
  %735 = vmatpush1.msra.mxu0 %v120
  %736 = vmatprep.subr.mxu0 0.0
  %737 = vmatpush1.msra.mxu0 %v119
  %738 = vmatprep.subr.mxu0 0.0
  %739 = vmatpush1.msra.mxu0 %v118
  %740 = vmatprep.subr.mxu0 0.0
  %741 = vmatpush1.msra.mxu0 %v117
  %742 = vmatprep.subr.mxu0 0.0
  %743 = vmatpush1.msra.mxu0 %v116
  %744 = vmatprep.subr.mxu0 0.0
  %745 = vmatpush2.msra.mxu0 0.0
  %746 = vmatprep.subr.mxu0 0.0
  %747 = vmatpush2.msra.mxu0 0.0
  %748 = vmatprep.subr.mxu0 0.0
  %749 = vmatpush2.msra.mxu0 0.0
  %750 = vmatprep.subr.mxu0 0.0
  %751 = vmatpush2.msra.mxu0 0.0
  %752 = vmatprep.subr.mxu0 0.0
  %753 = vmatpush2.msra.mxu0 0.0
  %754 = vmatprep.subr.mxu0 0.0
  %755 = vmatpush2.msra.mxu0 0.0
  %756 = vmatprep.subr.mxu0 0.0
  %757 = vmatpush2.msra.mxu0 0.0
  %758 = vmatprep.subr.mxu0 0.0
  %759 = vmatpush2.msra.mxu0 0.0
  %760 = vmatprep.subr.mxu0 0.0
  %761 = vmatpush2.msra.mxu0 0.0
  %762 = vmatprep.subr.mxu0 0.0
  %763 = vmatpush2.msra.mxu0 0.0
  %764 = vmatprep.subr.mxu0 0.0
  %765 = vmatpush2.msra.mxu0 0.0
  %766 = vmatprep.subr.mxu0 0.0
  %767 = vmatpush2.msra.mxu0 0.0
  %768 = vmatprep.subr.mxu0 0.0
  %769 = vmatpush2.msra.mxu0 0.0
  %770 = vmatprep.subr.mxu0 0.0
  %771 = vmatpush2.msra.mxu0 0.0
  %772 = vmatprep.subr.mxu0 0.0
  %773 = vmatpush2.msra.mxu0 0.0
  %774 = vmatprep.subr.mxu0 0.0
  %775 = vmatpush2.msra.mxu0 0.0
  %776 = vmatprep.mubr.f32.mxu0 0.0
  %777 = vmatmul.mubr.f32.gmra.mxu0 %v707
  %v778 = vpop.f32.mrf.mxu0
  %v779 = vadd.f32 0.0, %v778
  %v780 = vpop.f32.mrf.mxu0
  %781 = vmatprep.mubr.f32.mxu0 0.0
  %782 = vmatmul.mubr.f32.gmra.mxu0 %v710
  %v783 = vpop.f32.mrf.mxu0
  %v784 = vadd.f32 0.0, %v783
  %v785 = vpop.f32.mrf.mxu0
  %786 = vdwg.mxu0
  %v787 = vsub.f32 %v704, %v779
  %v788 = vsub.f32 %v705, %v784
  %v789 = vmul.f32 %v787, %v787
  %v790 = vmul.f32 %v788, %v788
  %v792 = vsel %vm124, %v789, 0
  %v795 = vsel %vm124, %v790, 0
  %797 = vmatprep.subr.mxu0 0.0
  %798 = vmatpush1.msra.mxu0 0.0
  %799 = vmatprep.subr.mxu0 0.0
  %800 = vmatpush1.msra.mxu0 0.0
  %801 = vmatprep.subr.mxu0 0.0
  %802 = vmatpush1.msra.mxu0 0.0
  %803 = vmatprep.subr.mxu0 0.0
  %804 = vmatpush1.msra.mxu0 0.0
  %805 = vmatprep.subr.mxu0 0.0
  %806 = vmatpush1.msra.mxu0 0.0
  %807 = vmatprep.subr.mxu0 0.0
  %808 = vmatpush1.msra.mxu0 0.0
  %809 = vmatprep.subr.mxu0 0.0
  %810 = vmatpush1.msra.mxu0 0.0
  %811 = vmatprep.subr.mxu0 0.0
  %812 = vmatpush1.msra.mxu0 0.0
  %813 = vmatprep.subr.mxu0 0.0
  %814 = vmatpush1.msra.mxu0 %v123
  %815 = vmatprep.subr.mxu0 0.0
  %816 = vmatpush1.msra.mxu0 %v122
  %817 = vmatprep.subr.mxu0 0.0
  %818 = vmatpush1.msra.mxu0 %v121
  %819 = vmatprep.subr.mxu0 0.0
  %820 = vmatpush1.msra.mxu0 %v120
  %821 = vmatprep.subr.mxu0 0.0
  %822 = vmatpush1.msra.mxu0 %v119
  %823 = vmatprep.subr.mxu0 0.0
  %824 = vmatpush1.msra.mxu0 %v118
  %825 = vmatprep.subr.mxu0 0.0
  %826 = vmatpush1.msra.mxu0 %v117
  %827 = vmatprep.subr.mxu0 0.0
  %828 = vmatpush1.msra.mxu0 %v116
  %829 = vmatprep.subr.mxu0 0.0
  %830 = vmatpush2.msra.mxu0 0.0
  %831 = vmatprep.subr.mxu0 0.0
  %832 = vmatpush2.msra.mxu0 0.0
  %833 = vmatprep.subr.mxu0 0.0
  %834 = vmatpush2.msra.mxu0 0.0
  %835 = vmatprep.subr.mxu0 0.0
  %836 = vmatpush2.msra.mxu0 0.0
  %837 = vmatprep.subr.mxu0 0.0
  %838 = vmatpush2.msra.mxu0 0.0
  %839 = vmatprep.subr.mxu0 0.0
  %840 = vmatpush2.msra.mxu0 0.0
  %841 = vmatprep.subr.mxu0 0.0
  %842 = vmatpush2.msra.mxu0 0.0
  %843 = vmatprep.subr.mxu0 0.0
  %844 = vmatpush2.msra.mxu0 0.0
  %845 = vmatprep.subr.mxu0 0.0
  %846 = vmatpush2.msra.mxu0 0.0
  %847 = vmatprep.subr.mxu0 0.0
  %848 = vmatpush2.msra.mxu0 0.0
  %849 = vmatprep.subr.mxu0 0.0
  %850 = vmatpush2.msra.mxu0 0.0
  %851 = vmatprep.subr.mxu0 0.0
  %852 = vmatpush2.msra.mxu0 0.0
  %853 = vmatprep.subr.mxu0 0.0
  %854 = vmatpush2.msra.mxu0 0.0
  %855 = vmatprep.subr.mxu0 0.0
  %856 = vmatpush2.msra.mxu0 0.0
  %857 = vmatprep.subr.mxu0 0.0
  %858 = vmatpush2.msra.mxu0 0.0
  %859 = vmatprep.subr.mxu0 0.0
  %860 = vmatpush2.msra.mxu0 0.0
  %861 = vmatprep.mubr.f32.mxu0 0.0
  %862 = vmatmul.mubr.f32.gmra.mxu0 %v792
  %v863 = vpop.f32.mrf.mxu0
  %v864 = vadd.f32 1e-06, %v863
  %v865 = vpop.f32.mrf.mxu0
  %866 = vmatprep.mubr.f32.mxu0 0.0
  %867 = vmatmul.mubr.f32.gmra.mxu0 %v795
  %v868 = vpop.f32.mrf.mxu0
  %v869 = vadd.f32 1e-06, %v868
  %v870 = vpop.f32.mrf.mxu0
  %871 = vdwg.mxu0
  %v872 = vrsqrt.pop %v864
  %v873 = vrsqrt.pop %v869
  %v874 = vmul.f32 %v787, %v872
  %v875 = vmul.f32 %v788, %v873
  %v876 = vpack.c.bf16 %v875, %v874
  %v877 = vld [vmem:[%s1 + $0x50] sm:$0xf]
  %v878 = vld [vmem:[%s1 + $0x54] sm:$0xf]
  %v879 = vld [vmem:[%s1 + $0x58] sm:$0xf]
  %v880 = vld [vmem:[%s1 + $0x5c] sm:$0xf]
  %v881 = vld [vmem:[%s1 + $0x60] sm:$0xf]
  %v882 = vld [vmem:[%s1 + $0x64] sm:$0xf]
  %v883 = vld [vmem:[%s1 + $0x68] sm:$0xf]
  %v884 = vld [vmem:[%s1 + $0x6c] sm:$0xf]
  %v885 = vld [vmem:[%s2 + $0xb0] sm:$0x1]
  %v886 = vlaneseq
  %v887 = vshrl.u32 %v886, 7
  %v888 = vsub.s32 0, %v887
  %v889 = vrot.slane %v885, %v888
  %v898 = vunpack.c.l.b16 %v877
  %v899 = vunpack.c.l.b16 %v878
  %v900 = vunpack.c.l.b16 %v879
  %v901 = vunpack.c.l.b16 %v880
  %v902 = vunpack.c.l.b16 %v881
  %v903 = vunpack.c.l.b16 %v882
  %v904 = vunpack.c.l.b16 %v883
  %v905 = vunpack.c.l.b16 %v884
  %v906 = vpack.c.b16 %v899, %v898
  %v907 = vpack.c.b16 %v901, %v900
  %v908 = vpack.c.b16 %v903, %v902
  %v909 = vpack.c.b16 %v905, %v904
  %v915 = vsel %vm124, %v876, 0
  %917 = vmatprep.subr.bf16.mxu0 0
  %918 = vmatpush1.bf16.msra.mxu0 0
  %919 = vmatprep.subr.bf16.mxu0 0
  %920 = vmatpush1.bf16.msra.mxu0 0
  %921 = vmatprep.subr.bf16.mxu0 0
  %922 = vmatpush1.bf16.msra.mxu0 0
  %923 = vmatprep.subr.bf16.mxu0 0
  %924 = vmatpush1.bf16.msra.mxu0 0
  %925 = vmatprep.subr.bf16.mxu0 0
  %926 = vmatpush1.bf16.msra.mxu0 %v909
  %927 = vmatprep.subr.bf16.mxu0 0
  %928 = vmatpush1.bf16.msra.mxu0 %v908
  %929 = vmatprep.subr.bf16.mxu0 0
  %930 = vmatpush1.bf16.msra.mxu0 %v907
  %931 = vmatprep.subr.bf16.mxu0 0
  %932 = vmatpush1.bf16.msra.mxu0 %v906
  %933 = vmatprep.subr.bf16.mxu0 0
  %934 = vmatpush2.bf16.msra.mxu0 0
  %935 = vmatprep.subr.bf16.mxu0 0
  %936 = vmatpush2.bf16.msra.mxu0 0
  %937 = vmatprep.subr.bf16.mxu0 0
  %938 = vmatpush2.bf16.msra.mxu0 0
  %939 = vmatprep.subr.bf16.mxu0 0
  %940 = vmatpush2.bf16.msra.mxu0 0
  %941 = vmatprep.subr.bf16.mxu0 0
  %942 = vmatpush2.bf16.msra.mxu0 0
  %943 = vmatprep.subr.bf16.mxu0 0
  %944 = vmatpush2.bf16.msra.mxu0 0
  %945 = vmatprep.subr.bf16.mxu0 0
  %946 = vmatpush2.bf16.msra.mxu0 0
  %947 = vmatprep.subr.bf16.mxu0 0
  %948 = vmatpush2.bf16.msra.mxu0 0
  %949 = vmatprep.mubr.bf16.mxu0 0
  %950 = vmatmul.mubr.bf16.gmra.mxu0 %v915
  %v951 = vpop.f32.mrf.mxu0
  %v952 = vadd.f32 %v889, %v951
  %v953 = vpop.f32.mrf.mxu0
  %v954 = vpop.f32.mrf.mxu0
  %v955 = vadd.f32 %v889, %v954
  %v956 = vpop.f32.mrf.mxu0
  %957 = vdwg.mxu0
  %v958 = vmul.f32 %v952, 0.5
  %v959 = vmul.f32 %v955, 0.5
  %v960 = vmul.f32 %v952, 0.044715
  %v961 = vmul.f32 %v955, 0.044715
  %v962 = vmul.f32 %v960, %v952
  %v963 = vmul.f32 %v961, %v955
  %v964 = vmul.f32 %v962, %v952
  %v965 = vmul.f32 %v963, %v955
  %v966 = vadd.f32 %v952, %v964
  %v967 = vadd.f32 %v955, %v965
  %v968 = vmul.f32 %v966, 0.7978846
  %v969 = vmul.f32 %v967, 0.7978846
  %v970 = vtanh.pop %v968
  %v971 = vtanh.pop %v969
  %v972 = vadd.f32 %v970, 1.0
  %v973 = vadd.f32 %v971, 1.0
  %v974 = vmul.f32 %v958, %v972
  %v975 = vmul.f32 %v959, %v973
  %v976 = vld [vmem:[%s1 + $0x70] sm:$0xf]
  %v977 = vld [vmem:[%s1 + $0x74] sm:$0xf]
  %v978 = vld [vmem:[%s1 + $0x78] sm:$0xf]
  %v979 = vld [vmem:[%s1 + $0x7c] sm:$0xf]
  %v980 = vld [vmem:[%s1 + $0x80] sm:$0xf]
  %v981 = vld [vmem:[%s1 + $0x84] sm:$0xf]
  %v982 = vld [vmem:[%s1 + $0x88] sm:$0xf]
  %v983 = vld [vmem:[%s1 + $0x8c] sm:$0xf]
  %v992 = vunpack.c.l.b16 %v976
  %v993 = vunpack.c.l.b16 %v977
  %v994 = vunpack.c.l.b16 %v978
  %v995 = vunpack.c.l.b16 %v979
  %v996 = vunpack.c.l.b16 %v980
  %v997 = vunpack.c.l.b16 %v981
  %v998 = vunpack.c.l.b16 %v982
  %v999 = vunpack.c.l.b16 %v983
  %v1000 = vpack.c.b16 %v993, %v992
  %v1001 = vpack.c.b16 %v995, %v994
  %v1002 = vpack.c.b16 %v997, %v996
  %v1003 = vpack.c.b16 %v999, %v998
  %1008 = vmatprep.subr.bf16.mxu0 0
  %1009 = vmatpush1.bf16.msra.mxu0 0
  %1010 = vmatprep.subr.bf16.mxu0 0
  %1011 = vmatpush1.bf16.msra.mxu0 0
  %1012 = vmatprep.subr.bf16.mxu0 0
  %1013 = vmatpush1.bf16.msra.mxu0 0
  %1014 = vmatprep.subr.bf16.mxu0 0
  %1015 = vmatpush1.bf16.msra.mxu0 0
  %1016 = vmatprep.subr.bf16.mxu0 0
  %1017 = vmatpush1.bf16.msra.mxu0 %v1003
  %1018 = vmatprep.subr.bf16.mxu0 0
  %1019 = vmatpush1.bf16.msra.mxu0 %v1002
  %1020 = vmatprep.subr.bf16.mxu0 0
  %1021 = vmatpush1.bf16.msra.mxu0 %v1001
  %1022 = vmatprep.subr.bf16.mxu0 0
  %1023 = vmatpush1.bf16.msra.mxu0 %v1000
  %1024 = vmatprep.subr.bf16.mxu0 0
  %1025 = vmatpush2.bf16.msra.mxu0 0
  %1026 = vmatprep.subr.bf16.mxu0 0
  %1027 = vmatpush2.bf16.msra.mxu0 0
  %1028 = vmatprep.subr.bf16.mxu0 0
  %1029 = vmatpush2.bf16.msra.mxu0 0
  %1030 = vmatprep.subr.bf16.mxu0 0
  %1031 = vmatpush2.bf16.msra.mxu0 0
  %1032 = vmatprep.subr.bf16.mxu0 0
  %1033 = vmatpush2.bf16.msra.mxu0 0
  %1034 = vmatprep.subr.bf16.mxu0 0
  %1035 = vmatpush2.bf16.msra.mxu0 0
  %1036 = vmatprep.subr.bf16.mxu0 0
  %1037 = vmatpush2.bf16.msra.mxu0 0
  %1038 = vmatprep.subr.bf16.mxu0 0
  %1039 = vmatpush2.bf16.msra.mxu0 0
  %1040 = vmatprep.mubr.bf16.mxu0 0
  %1041 = vmatmul.mubr.bf16.gmra.mxu0 %v915
  %v1042 = vpop.f32.mrf.mxu0
  %v1043 = vadd.f32 %v889, %v1042
  %v1044 = vpop.f32.mrf.mxu0
  %v1045 = vpop.f32.mrf.mxu0
  %v1046 = vadd.f32 %v889, %v1045
  %v1047 = vpop.f32.mrf.mxu0
  %1048 = vdwg.mxu0
  %v1049 = vmul.f32 %v1043, 0.5
  %v1050 = vmul.f32 %v1046, 0.5
  %v1051 = vmul.f32 %v1043, 0.044715
  %v1052 = vmul.f32 %v1046, 0.044715
  %v1053 = vmul.f32 %v1051, %v1043
  %v1054 = vmul.f32 %v1052, %v1046
  %v1055 = vmul.f32 %v1053, %v1043
  %v1056 = vmul.f32 %v1054, %v1046
  %v1057 = vadd.f32 %v1043, %v1055
  %v1058 = vadd.f32 %v1046, %v1056
  %v1059 = vmul.f32 %v1057, 0.7978846
  %v1060 = vmul.f32 %v1058, 0.7978846
  %v1061 = vtanh.pop %v1059
  %v1062 = vtanh.pop %v1060
  %v1063 = vadd.f32 %v1061, 1.0
  %v1064 = vadd.f32 %v1062, 1.0
  %v1065 = vmul.f32 %v1049, %v1063
  %v1066 = vmul.f32 %v1050, %v1064
  %v1067 = vpack.c.bf16 %v975, %v974
  %v1068 = vld [vmem:[%s1 + $0x90] sm:$0xf]
  %v1069 = vld [vmem:[%s1 + $0x94] sm:$0xf]
  %v1070 = vld [vmem:[%s1 + $0x98] sm:$0xf]
  %v1071 = vld [vmem:[%s1 + $0x9c] sm:$0xf]
  %v1072 = vld [vmem:[%s1 + $0xa0] sm:$0xf]
  %v1073 = vld [vmem:[%s1 + $0xa4] sm:$0xf]
  %v1074 = vld [vmem:[%s1 + $0xa8] sm:$0xf]
  %v1075 = vld [vmem:[%s1 + $0xac] sm:$0xf]
  %v1076 = vld [vmem:[%s1 + $0xb0] sm:$0xf]
  %v1077 = vld [vmem:[%s1 + $0xb4] sm:$0xf]
  %v1078 = vld [vmem:[%s1 + $0xb8] sm:$0xf]
  %v1079 = vld [vmem:[%s1 + $0xbc] sm:$0xf]
  %v1080 = vld [vmem:[%s1 + $0xc0] sm:$0xf]
  %v1081 = vld [vmem:[%s1 + $0xc4] sm:$0xf]
  %v1082 = vld [vmem:[%s1 + $0xc8] sm:$0xf]
  %v1083 = vld [vmem:[%s1 + $0xcc] sm:$0xf]
  %v1100 = vunpack.c.l.b16 %v1068
  %v1101 = vunpack.c.l.b16 %v1069
  %v1102 = vunpack.c.l.b16 %v1070
  %v1103 = vunpack.c.l.b16 %v1071
  %v1104 = vunpack.c.l.b16 %v1072
  %v1105 = vunpack.c.l.b16 %v1073
  %v1106 = vunpack.c.l.b16 %v1074
  %v1107 = vunpack.c.l.b16 %v1075
  %v1108 = vunpack.c.l.b16 %v1076
  %v1109 = vunpack.c.l.b16 %v1077
  %v1110 = vunpack.c.l.b16 %v1078
  %v1111 = vunpack.c.l.b16 %v1079
  %v1112 = vunpack.c.l.b16 %v1080
  %v1113 = vunpack.c.l.b16 %v1081
  %v1114 = vunpack.c.l.b16 %v1082
  %v1115 = vunpack.c.l.b16 %v1083
  %v1116 = vpack.c.b16 %v1101, %v1100
  %v1117 = vpack.c.b16 %v1103, %v1102
  %v1118 = vpack.c.b16 %v1105, %v1104
  %v1119 = vpack.c.b16 %v1107, %v1106
  %v1120 = vpack.c.b16 %v1109, %v1108
  %v1121 = vpack.c.b16 %v1111, %v1110
  %v1122 = vpack.c.b16 %v1113, %v1112
  %v1123 = vpack.c.b16 %v1115, %v1114
  %1132 = vmatprep.subr.bf16.mxu0 0
  %1133 = vmatpush1.bf16.msra.mxu0 %v1123
  %1134 = vmatprep.subr.bf16.mxu0 0
  %1135 = vmatpush1.bf16.msra.mxu0 %v1122
  %1136 = vmatprep.subr.bf16.mxu0 0
  %1137 = vmatpush1.bf16.msra.mxu0 %v1121
  %1138 = vmatprep.subr.bf16.mxu0 0
  %1139 = vmatpush1.bf16.msra.mxu0 %v1120
  %1140 = vmatprep.subr.bf16.mxu0 0
  %1141 = vmatpush1.bf16.msra.mxu0 %v1119
  %1142 = vmatprep.subr.bf16.mxu0 0
  %1143 = vmatpush1.bf16.msra.mxu0 %v1118
  %1144 = vmatprep.subr.bf16.mxu0 0
  %1145 = vmatpush1.bf16.msra.mxu0 %v1117
  %1146 = vmatprep.subr.bf16.mxu0 0
  %1147 = vmatpush1.bf16.msra.mxu0 %v1116
  %1148 = vmatprep.subr.bf16.mxu0 0
  %1149 = vmatpush2.bf16.msra.mxu0 0
  %1150 = vmatprep.subr.bf16.mxu0 0
  %1151 = vmatpush2.bf16.msra.mxu0 0
  %1152 = vmatprep.subr.bf16.mxu0 0
  %1153 = vmatpush2.bf16.msra.mxu0 0
  %1154 = vmatprep.subr.bf16.mxu0 0
  %1155 = vmatpush2.bf16.msra.mxu0 0
  %1156 = vmatprep.subr.bf16.mxu0 0
  %1157 = vmatpush2.bf16.msra.mxu0 0
  %1158 = vmatprep.subr.bf16.mxu0 0
  %1159 = vmatpush2.bf16.msra.mxu0 0
  %1160 = vmatprep.subr.bf16.mxu0 0
  %1161 = vmatpush2.bf16.msra.mxu0 0
  %1162 = vmatprep.subr.bf16.mxu0 0
  %1163 = vmatpush2.bf16.msra.mxu0 0
  %1164 = vmatprep.mubr.bf16.mxu0 0
  %1165 = vmatmul.mubr.bf16.gmra.mxu0 %v1067
  %v1166 = vpop.f32.mrf.mxu0
  %v1167 = vadd.f32 0.0, %v1166
  %v1168 = vpop.f32.mrf.mxu0
  %v1169 = vpop.f32.mrf.mxu0
  %v1170 = vadd.f32 0.0, %v1169
  %v1171 = vpop.f32.mrf.mxu0
  %1172 = vdwg.mxu0
  %v1173 = vadd.f32 %v704, %v1167
  %v1174 = vadd.f32 %v705, %v1170
  %v1175 = vpack.c.bf16 %v1066, %v1065
  %v1176 = vld [vmem:[%s1 + $0xd0] sm:$0xf]
  %v1177 = vld [vmem:[%s1 + $0xd4] sm:$0xf]
  %v1178 = vld [vmem:[%s1 + $0xd8] sm:$0xf]
  %v1179 = vld [vmem:[%s1 + $0xdc] sm:$0xf]
  %v1180 = vld [vmem:[%s1 + $0xe0] sm:$0xf]
  %v1181 = vld [vmem:[%s1 + $0xe4] sm:$0xf]
  %v1182 = vld [vmem:[%s1 + $0xe8] sm:$0xf]
  %v1183 = vld [vmem:[%s1 + $0xec] sm:$0xf]
  %v1184 = vld [vmem:[%s1 + $0xf0] sm:$0xf]
  %v1185 = vld [vmem:[%s1 + $0xf4] sm:$0xf]
  %v1186 = vld [vmem:[%s1 + $0xf8] sm:$0xf]
  %v1187 = vld [vmem:[%s1 + $0xfc] sm:$0xf]
  %v1188 = vld [vmem:[%s1 + $0x100] sm:$0xf]
  %v1189 = vld [vmem:[%s1 + $0x104] sm:$0xf]
  %v1190 = vld [vmem:[%s1 + $0x108] sm:$0xf]
  %v1191 = vld [vmem:[%s1 + $0x10c] sm:$0xf]
  %v1208 = vunpack.c.l.b16 %v1176
  %v1209 = vunpack.c.l.b16 %v1177
  %v1210 = vunpack.c.l.b16 %v1178
  %v1211 = vunpack.c.l.b16 %v1179
  %v1212 = vunpack.c.l.b16 %v1180
  %v1213 = vunpack.c.l.b16 %v1181
  %v1214 = vunpack.c.l.b16 %v1182
  %v1215 = vunpack.c.l.b16 %v1183
  %v1216 = vunpack.c.l.b16 %v1184
  %v1217 = vunpack.c.l.b16 %v1185
  %v1218 = vunpack.c.l.b16 %v1186
  %v1219 = vunpack.c.l.b16 %v1187
  %v1220 = vunpack.c.l.b16 %v1188
  %v1221 = vunpack.c.l.b16 %v1189
  %v1222 = vunpack.c.l.b16 %v1190
  %v1223 = vunpack.c.l.b16 %v1191
  %v1224 = vpack.c.b16 %v1209, %v1208
  %v1225 = vpack.c.b16 %v1211, %v1210
  %v1226 = vpack.c.b16 %v1213, %v1212
  %v1227 = vpack.c.b16 %v1215, %v1214
  %v1228 = vpack.c.b16 %v1217, %v1216
  %v1229 = vpack.c.b16 %v1219, %v1218
  %v1230 = vpack.c.b16 %v1221, %v1220
  %v1231 = vpack.c.b16 %v1223, %v1222
  %1240 = vmatprep.subr.bf16.mxu0 0
  %1241 = vmatpush1.bf16.msra.mxu0 %v1231
  %1242 = vmatprep.subr.bf16.mxu0 0
  %1243 = vmatpush1.bf16.msra.mxu0 %v1230
  %1244 = vmatprep.subr.bf16.mxu0 0
  %1245 = vmatpush1.bf16.msra.mxu0 %v1229
  %1246 = vmatprep.subr.bf16.mxu0 0
  %1247 = vmatpush1.bf16.msra.mxu0 %v1228
  %1248 = vmatprep.subr.bf16.mxu0 0
  %1249 = vmatpush1.bf16.msra.mxu0 %v1227
  %1250 = vmatprep.subr.bf16.mxu0 0
  %1251 = vmatpush1.bf16.msra.mxu0 %v1226
  %1252 = vmatprep.subr.bf16.mxu0 0
  %1253 = vmatpush1.bf16.msra.mxu0 %v1225
  %1254 = vmatprep.subr.bf16.mxu0 0
  %1255 = vmatpush1.bf16.msra.mxu0 %v1224
  %1256 = vmatprep.subr.bf16.mxu0 0
  %1257 = vmatpush2.bf16.msra.mxu0 0
  %1258 = vmatprep.subr.bf16.mxu0 0
  %1259 = vmatpush2.bf16.msra.mxu0 0
  %1260 = vmatprep.subr.bf16.mxu0 0
  %1261 = vmatpush2.bf16.msra.mxu0 0
  %1262 = vmatprep.subr.bf16.mxu0 0
  %1263 = vmatpush2.bf16.msra.mxu0 0
  %1264 = vmatprep.subr.bf16.mxu0 0
  %1265 = vmatpush2.bf16.msra.mxu0 0
  %1266 = vmatprep.subr.bf16.mxu0 0
  %1267 = vmatpush2.bf16.msra.mxu0 0
  %1268 = vmatprep.subr.bf16.mxu0 0
  %1269 = vmatpush2.bf16.msra.mxu0 0
  %1270 = vmatprep.subr.bf16.mxu0 0
  %1271 = vmatpush2.bf16.msra.mxu0 0
  %1272 = vmatprep.mubr.bf16.mxu0 0
  %1273 = vmatmul.mubr.bf16.gmra.mxu0 %v1175
  %v1274 = vpop.f32.mrf.mxu0
  %v1275 = vadd.f32 0.0, %v1274
  %v1276 = vpop.f32.mrf.mxu0
  %v1277 = vpop.f32.mrf.mxu0
  %v1278 = vadd.f32 0.0, %v1277
  %v1279 = vpop.f32.mrf.mxu0
  %1280 = vdwg.mxu0
  %v1281 = vadd.f32 %v1173, %v1275
  %v1282 = vadd.f32 %v1174, %v1278
  %v1283 = vld [vmem:[%s2 + $0xc0] sm:$0x1]
  %v1284 = vlaneseq
  %v1285 = vshrl.u32 %v1284, 7
  %v1286 = vsub.s32 0, %v1285
  %v1287 = vrot.slane %v1283, %v1286
  %v1288 = vadd.f32 %v1281, %v1287
  %v1289 = vadd.f32 %v1282, %v1287
  %v1291 = vsel %vm124, %v1288, 0
  %v1294 = vsel %vm124, %v1289, 0
  %1296 = vmatprep.subr.mxu0 0.0
  %1297 = vmatpush1.msra.mxu0 0.0
  %1298 = vmatprep.subr.mxu0 0.0
  %1299 = vmatpush1.msra.mxu0 0.0
  %1300 = vmatprep.subr.mxu0 0.0
  %1301 = vmatpush1.msra.mxu0 0.0
  %1302 = vmatprep.subr.mxu0 0.0
  %1303 = vmatpush1.msra.mxu0 0.0
  %1304 = vmatprep.subr.mxu0 0.0
  %1305 = vmatpush1.msra.mxu0 0.0
  %1306 = vmatprep.subr.mxu0 0.0
  %1307 = vmatpush1.msra.mxu0 0.0
  %1308 = vmatprep.subr.mxu0 0.0
  %1309 = vmatpush1.msra.mxu0 0.0
  %1310 = vmatprep.subr.mxu0 0.0
  %1311 = vmatpush1.msra.mxu0 0.0
  %1312 = vmatprep.subr.mxu0 0.0
  %1313 = vmatpush1.msra.mxu0 %v123
  %1314 = vmatprep.subr.mxu0 0.0
  %1315 = vmatpush1.msra.mxu0 %v122
  %1316 = vmatprep.subr.mxu0 0.0
  %1317 = vmatpush1.msra.mxu0 %v121
  %1318 = vmatprep.subr.mxu0 0.0
  %1319 = vmatpush1.msra.mxu0 %v120
  %1320 = vmatprep.subr.mxu0 0.0
  %1321 = vmatpush1.msra.mxu0 %v119
  %1322 = vmatprep.subr.mxu0 0.0
  %1323 = vmatpush1.msra.mxu0 %v118
  %1324 = vmatprep.subr.mxu0 0.0
  %1325 = vmatpush1.msra.mxu0 %v117
  %1326 = vmatprep.subr.mxu0 0.0
  %1327 = vmatpush1.msra.mxu0 %v116
  %1328 = vmatprep.subr.mxu0 0.0
  %1329 = vmatpush2.msra.mxu0 0.0
  %1330 = vmatprep.subr.mxu0 0.0
  %1331 = vmatpush2.msra.mxu0 0.0
  %1332 = vmatprep.subr.mxu0 0.0
  %1333 = vmatpush2.msra.mxu0 0.0
  %1334 = vmatprep.subr.mxu0 0.0
  %1335 = vmatpush2.msra.mxu0 0.0
  %1336 = vmatprep.subr.mxu0 0.0
  %1337 = vmatpush2.msra.mxu0 0.0
  %1338 = vmatprep.subr.mxu0 0.0
  %1339 = vmatpush2.msra.mxu0 0.0
  %1340 = vmatprep.subr.mxu0 0.0
  %1341 = vmatpush2.msra.mxu0 0.0
  %1342 = vmatprep.subr.mxu0 0.0
  %1343 = vmatpush2.msra.mxu0 0.0
  %1344 = vmatprep.subr.mxu0 0.0
  %1345 = vmatpush2.msra.mxu0 0.0
  %1346 = vmatprep.subr.mxu0 0.0
  %1347 = vmatpush2.msra.mxu0 0.0
  %1348 = vmatprep.subr.mxu0 0.0
  %1349 = vmatpush2.msra.mxu0 0.0
  %1350 = vmatprep.subr.mxu0 0.0
  %1351 = vmatpush2.msra.mxu0 0.0
  %1352 = vmatprep.subr.mxu0 0.0
  %1353 = vmatpush2.msra.mxu0 0.0
  %1354 = vmatprep.subr.mxu0 0.0
  %1355 = vmatpush2.msra.mxu0 0.0
  %1356 = vmatprep.subr.mxu0 0.0
  %1357 = vmatpush2.msra.mxu0 0.0
  %1358 = vmatprep.subr.mxu0 0.0
  %1359 = vmatpush2.msra.mxu0 0.0
  %1360 = vmatprep.mubr.f32.mxu0 0.0
  %1361 = vmatmul.mubr.f32.gmra.mxu0 %v1291
  %v1362 = vpop.f32.mrf.mxu0
  %v1363 = vadd.f32 0.0, %v1362
  %v1364 = vpop.f32.mrf.mxu0
  %1365 = vmatprep.mubr.f32.mxu0 0.0
  %1366 = vmatmul.mubr.f32.gmra.mxu0 %v1294
  %v1367 = vpop.f32.mrf.mxu0
  %v1368 = vadd.f32 0.0, %v1367
  %v1369 = vpop.f32.mrf.mxu0
  %1370 = vdwg.mxu0
  %v1371 = vsub.f32 %v1288, %v1363
  %v1372 = vsub.f32 %v1289, %v1368
  %v1373 = vmul.f32 %v1371, %v1371
  %v1374 = vmul.f32 %v1372, %v1372
  %v1376 = vsel %vm124, %v1373, 0
  %v1379 = vsel %vm124, %v1374, 0
  %1381 = vmatprep.subr.mxu0 0.0
  %1382 = vmatpush1.msra.mxu0 0.0
  %1383 = vmatprep.subr.mxu0 0.0
  %1384 = vmatpush1.msra.mxu0 0.0
  %1385 = vmatprep.subr.mxu0 0.0
  %1386 = vmatpush1.msra.mxu0 0.0
  %1387 = vmatprep.subr.mxu0 0.0
  %1388 = vmatpush1.msra.mxu0 0.0
  %1389 = vmatprep.subr.mxu0 0.0
  %1390 = vmatpush1.msra.mxu0 0.0
  %1391 = vmatprep.subr.mxu0 0.0
  %1392 = vmatpush1.msra.mxu0 0.0
  %1393 = vmatprep.subr.mxu0 0.0
  %1394 = vmatpush1.msra.mxu0 0.0
  %1395 = vmatprep.subr.mxu0 0.0
  %1396 = vmatpush1.msra.mxu0 0.0
  %1397 = vmatprep.subr.mxu0 0.0
  %1398 = vmatpush1.msra.mxu0 %v123
  %1399 = vmatprep.subr.mxu0 0.0
  %1400 = vmatpush1.msra.mxu0 %v122
  %1401 = vmatprep.subr.mxu0 0.0
  %1402 = vmatpush1.msra.mxu0 %v121
  %1403 = vmatprep.subr.mxu0 0.0
  %1404 = vmatpush1.msra.mxu0 %v120
  %1405 = vmatprep.subr.mxu0 0.0
  %1406 = vmatpush1.msra.mxu0 %v119
  %1407 = vmatprep.subr.mxu0 0.0
  %1408 = vmatpush1.msra.mxu0 %v118
  %1409 = vmatprep.subr.mxu0 0.0
  %1410 = vmatpush1.msra.mxu0 %v117
  %1411 = vmatprep.subr.mxu0 0.0
  %1412 = vmatpush1.msra.mxu0 %v116
  %1413 = vmatprep.subr.mxu0 0.0
  %1414 = vmatpush2.msra.mxu0 0.0
  %1415 = vmatprep.subr.mxu0 0.0
  %1416 = vmatpush2.msra.mxu0 0.0
  %1417 = vmatprep.subr.mxu0 0.0
  %1418 = vmatpush2.msra.mxu0 0.0
  %1419 = vmatprep.subr.mxu0 0.0
  %1420 = vmatpush2.msra.mxu0 0.0
  %1421 = vmatprep.subr.mxu0 0.0
  %1422 = vmatpush2.msra.mxu0 0.0
  %1423 = vmatprep.subr.mxu0 0.0
  %1424 = vmatpush2.msra.mxu0 0.0
  %1425 = vmatprep.subr.mxu0 0.0
  %1426 = vmatpush2.msra.mxu0 0.0
  %1427 = vmatprep.subr.mxu0 0.0
  %1428 = vmatpush2.msra.mxu0 0.0
  %1429 = vmatprep.subr.mxu0 0.0
  %1430 = vmatpush2.msra.mxu0 0.0
  %1431 = vmatprep.subr.mxu0 0.0
  %1432 = vmatpush2.msra.mxu0 0.0
  %1433 = vmatprep.subr.mxu0 0.0
  %1434 = vmatpush2.msra.mxu0 0.0
  %1435 = vmatprep.subr.mxu0 0.0
  %1436 = vmatpush2.msra.mxu0 0.0
  %1437 = vmatprep.subr.mxu0 0.0
  %1438 = vmatpush2.msra.mxu0 0.0
  %1439 = vmatprep.subr.mxu0 0.0
  %1440 = vmatpush2.msra.mxu0 0.0
  %1441 = vmatprep.subr.mxu0 0.0
  %1442 = vmatpush2.msra.mxu0 0.0
  %1443 = vmatprep.subr.mxu0 0.0
  %1444 = vmatpush2.msra.mxu0 0.0
  %1445 = vmatprep.mubr.f32.mxu0 0.0
  %1446 = vmatmul.mubr.f32.gmra.mxu0 %v1376
  %v1447 = vpop.f32.mrf.mxu0
  %v1448 = vadd.f32 1e-06, %v1447
  %v1449 = vpop.f32.mrf.mxu0
  %1450 = vmatprep.mubr.f32.mxu0 0.0
  %1451 = vmatmul.mubr.f32.gmra.mxu0 %v1379
  %v1452 = vpop.f32.mrf.mxu0
  %v1453 = vadd.f32 1e-06, %v1452
  %v1454 = vpop.f32.mrf.mxu0
  %1455 = vdwg.mxu0
  %v1456 = vrsqrt.pop %v1448
  %v1457 = vrsqrt.pop %v1453
  %v1458 = vmul.f32 %v1371, %v1456
  %v1459 = vmul.f32 %v1372, %v1457
  %v1460 = vld [vmem:[%s2 + $0xd0] sm:$0x1]
  %v1461 = vlaneseq
  %v1462 = vshrl.u32 %v1461, 7
  %v1463 = vsub.s32 0, %v1462
  %v1464 = vrot.slane %v1460, %v1463
  %v1465 = vmul.f32 %v1458, %v1464
  %v1466 = vmul.f32 %v1459, %v1464
  %v1467 = vld [vmem:[%s2 + $0xe0] sm:$0x1]
  %v1468 = vlaneseq
  %v1469 = vshrl.u32 %v1468, 7
  %v1470 = vsub.s32 0, %v1469
  %v1471 = vrot.slane %v1467, %v1470
  %v1472 = vadd.f32 %v1465, %v1471
  %v1473 = vadd.f32 %v1466, %v1471
  %v1474 = vld [vmem:[%s1 + $0x110] sm:$0xf]
  %v1475 = vld [vmem:[%s1 + $0x114] sm:$0xf]
  %v1476 = vpack.c.bf16 %v1473, %v1472
  %v1477 = vld [vmem:[%s2 + $0xf0] sm:$0xff]
  %v1478 = vld [vmem:[%s2 + $0xf8] sm:$0xff]
  %v1481 = vunpack.c.l.b16 %v1474
  %v1482 = vunpack.c.l.b16 %v1475
  %v1483 = vpack.c.b16 %v1482, %v1481
  %v1485 = vsel %vm319, %v1483, 0
  %1487 = vmatprep.subr.bf16.mxu0 0
  %1488 = vmatpush1.bf16.msra.mxu0 0
  %1489 = vmatprep.subr.bf16.mxu0 0
  %1490 = vmatpush1.bf16.msra.mxu0 0
  %1491 = vmatprep.subr.bf16.mxu0 0
  %1492 = vmatpush1.bf16.msra.mxu0 0
  %1493 = vmatprep.subr.bf16.mxu0 0
  %1494 = vmatpush1.bf16.msra.mxu0 0
  %1495 = vmatprep.subr.bf16.mxu0 0
  %1496 = vmatpush1.bf16.msra.mxu0 0
  %1497 = vmatprep.subr.bf16.mxu0 0
  %1498 = vmatpush1.bf16.msra.mxu0 0
  %1499 = vmatprep.subr.bf16.mxu0 0
  %1500 = vmatpush1.bf16.msra.mxu0 0
  %1501 = vmatprep.subr.bf16.mxu0 0
  %1502 = vmatpush1.bf16.msra.mxu0 %v1476
  %1503 = vmatprep.subr.bf16.mxu0 0
  %1504 = vmatpush2.bf16.msra.mxu0 0
  %1505 = vmatprep.subr.bf16.mxu0 0
  %1506 = vmatpush2.bf16.msra.mxu0 0
  %1507 = vmatprep.subr.bf16.mxu0 0
  %1508 = vmatpush2.bf16.msra.mxu0 0
  %1509 = vmatprep.subr.bf16.mxu0 0
  %1510 = vmatpush2.bf16.msra.mxu0 0
  %1511 = vmatprep.subr.bf16.mxu0 0
  %1512 = vmatpush2.bf16.msra.mxu0 0
  %1513 = vmatprep.subr.bf16.mxu0 0
  %1514 = vmatpush2.bf16.msra.mxu0 0
  %1515 = vmatprep.subr.bf16.mxu0 0
  %1516 = vmatpush2.bf16.msra.mxu0 0
  %1517 = vmatprep.subr.bf16.mxu0 0
  %1518 = vmatpush2.bf16.msra.mxu0 0
  %1519 = vmatprep.mubr.bf16.mxu0 0
  %1520 = vmatmul.mubr.bf16.gmra.mxu0 %v1485
  %v1521 = vpop.f32.mrf.mxu0
  %v1522 = vadd.f32 %v1477, %v1521
  %v1523 = vpop.f32.mrf.mxu0
  %v1524 = vpop.f32.mrf.mxu0
  %v1525 = vadd.f32 %v1478, %v1524
  %v1526 = vpop.f32.mrf.mxu0
  %1527 = vdwg.mxu0
  %v1528 = vld [vmem:[%s1 + $0x118] sm:$0xf]
  %v1529 = vld [vmem:[%s1 + $0x11c] sm:$0xf]
  %v1530 = vld [vmem:[%s1 + $0x120] sm:$0xf]
  %v1531 = vld [vmem:[%s1 + $0x124] sm:$0xf]
  %v1532 = vld [vmem:[%s2 + $0x100] sm:$0xff]
  %v1533 = vld [vmem:[%s2 + $0x108] sm:$0xff]
  %v1534 = vld [vmem:[%s2 + $0x110] sm:$0xff]
  %v1535 = vld [vmem:[%s2 + $0x118] sm:$0xff]
  %v1536 = vmul.f32 %v1522, 0.5
  %v1537 = vmul.f32 %v1525, 0.5
  %v1538 = vmul.f32 %v1522, 0.044715
  %v1539 = vmul.f32 %v1525, 0.044715
  %v1540 = vmul.f32 %v1538, %v1522
  %v1541 = vmul.f32 %v1539, %v1525
  %v1542 = vmul.f32 %v1540, %v1522
  %v1543 = vmul.f32 %v1541, %v1525
  %v1544 = vadd.f32 %v1522, %v1542
  %v1545 = vadd.f32 %v1525, %v1543
  %v1546 = vmul.f32 %v1544, 0.7978846
  %v1547 = vmul.f32 %v1545, 0.7978846
  %v1548 = vtanh.pop %v1546
  %v1549 = vtanh.pop %v1547
  %v1550 = vadd.f32 %v1548, 1.0
  %v1551 = vadd.f32 %v1549, 1.0
  %v1552 = vmul.f32 %v1536, %v1550
  %v1553 = vmul.f32 %v1537, %v1551
  %v1554 = vpack.c.bf16 %v1553, %v1552
  %v1557 = vunpack.c.l.b16 %v1528
  %v1558 = vunpack.c.l.b16 %v1529
  %v1559 = vpack.c.b16 %v1558, %v1557
  %v1561 = vsel %vm319, %v1559, 0
  %1563 = vmatprep.subr.bf16.mxu0 0
  %1564 = vmatpush1.bf16.msra.mxu0 0
  %1565 = vmatprep.subr.bf16.mxu0 0
  %1566 = vmatpush1.bf16.msra.mxu0 0
  %1567 = vmatprep.subr.bf16.mxu0 0
  %1568 = vmatpush1.bf16.msra.mxu0 0
  %1569 = vmatprep.subr.bf16.mxu0 0
  %1570 = vmatpush1.bf16.msra.mxu0 0
  %1571 = vmatprep.subr.bf16.mxu0 0
  %1572 = vmatpush1.bf16.msra.mxu0 0
  %1573 = vmatprep.subr.bf16.mxu0 0
  %1574 = vmatpush1.bf16.msra.mxu0 0
  %1575 = vmatprep.subr.bf16.mxu0 0
  %1576 = vmatpush1.bf16.msra.mxu0 0
  %1577 = vmatprep.subr.bf16.mxu0 0
  %1578 = vmatpush1.bf16.msra.mxu0 %v1554
  %1579 = vmatprep.subr.bf16.mxu0 0
  %1580 = vmatpush2.bf16.msra.mxu0 0
  %1581 = vmatprep.subr.bf16.mxu0 0
  %1582 = vmatpush2.bf16.msra.mxu0 0
  %1583 = vmatprep.subr.bf16.mxu0 0
  %1584 = vmatpush2.bf16.msra.mxu0 0
  %1585 = vmatprep.subr.bf16.mxu0 0
  %1586 = vmatpush2.bf16.msra.mxu0 0
  %1587 = vmatprep.subr.bf16.mxu0 0
  %1588 = vmatpush2.bf16.msra.mxu0 0
  %1589 = vmatprep.subr.bf16.mxu0 0
  %1590 = vmatpush2.bf16.msra.mxu0 0
  %1591 = vmatprep.subr.bf16.mxu0 0
  %1592 = vmatpush2.bf16.msra.mxu0 0
  %1593 = vmatprep.subr.bf16.mxu0 0
  %1594 = vmatpush2.bf16.msra.mxu0 0
  %1595 = vmatprep.mubr.bf16.mxu0 0
  %1596 = vmatmul.mubr.bf16.gmra.mxu0 %v1561
  %v1597 = vpop.f32.mrf.mxu0
  %v1598 = vadd.f32 %v1532, %v1597
  %v1599 = vpop.f32.mrf.mxu0
  %v1600 = vpop.f32.mrf.mxu0
  %v1601 = vadd.f32 %v1533, %v1600
  %v1602 = vpop.f32.mrf.mxu0
  %1603 = vdwg.mxu0
  %v1604 = vmul.f32 %v1598, 0.5
  %v1605 = vmul.f32 %v1601, 0.5
  %v1606 = vmul.f32 %v1598, 0.044715
  %v1607 = vmul.f32 %v1601, 0.044715
  %v1608 = vmul.f32 %v1606, %v1598
  %v1609 = vmul.f32 %v1607, %v1601
  %v1610 = vmul.f32 %v1608, %v1598
  %v1611 = vmul.f32 %v1609, %v1601
  %v1612 = vadd.f32 %v1598, %v1610
  %v1613 = vadd.f32 %v1601, %v1611
  %v1614 = vmul.f32 %v1612, 0.7978846
  %v1615 = vmul.f32 %v1613, 0.7978846
  %v1616 = vtanh.pop %v1614
  %v1617 = vtanh.pop %v1615
  %v1618 = vadd.f32 %v1616, 1.0
  %v1619 = vadd.f32 %v1617, 1.0
  %v1620 = vmul.f32 %v1604, %v1618
  %v1621 = vmul.f32 %v1605, %v1619
  %v1622 = vpack.c.bf16 %v1621, %v1620
  %v1625 = vunpack.c.l.b16 %v1530
  %v1626 = vunpack.c.l.b16 %v1531
  %v1627 = vpack.c.b16 %v1626, %v1625
  %v1629 = vsel %vm319, %v1627, 0
  %1631 = vmatprep.subr.bf16.mxu0 0
  %1632 = vmatpush1.bf16.msra.mxu0 0
  %1633 = vmatprep.subr.bf16.mxu0 0
  %1634 = vmatpush1.bf16.msra.mxu0 0
  %1635 = vmatprep.subr.bf16.mxu0 0
  %1636 = vmatpush1.bf16.msra.mxu0 0
  %1637 = vmatprep.subr.bf16.mxu0 0
  %1638 = vmatpush1.bf16.msra.mxu0 0
  %1639 = vmatprep.subr.bf16.mxu0 0
  %1640 = vmatpush1.bf16.msra.mxu0 0
  %1641 = vmatprep.subr.bf16.mxu0 0
  %1642 = vmatpush1.bf16.msra.mxu0 0
  %1643 = vmatprep.subr.bf16.mxu0 0
  %1644 = vmatpush1.bf16.msra.mxu0 0
  %1645 = vmatprep.subr.bf16.mxu0 0
  %1646 = vmatpush1.bf16.msra.mxu0 %v1622
  %1647 = vmatprep.subr.bf16.mxu0 0
  %1648 = vmatpush2.bf16.msra.mxu0 0
  %1649 = vmatprep.subr.bf16.mxu0 0
  %1650 = vmatpush2.bf16.msra.mxu0 0
  %1651 = vmatprep.subr.bf16.mxu0 0
  %1652 = vmatpush2.bf16.msra.mxu0 0
  %1653 = vmatprep.subr.bf16.mxu0 0
  %1654 = vmatpush2.bf16.msra.mxu0 0
  %1655 = vmatprep.subr.bf16.mxu0 0
  %1656 = vmatpush2.bf16.msra.mxu0 0
  %1657 = vmatprep.subr.bf16.mxu0 0
  %1658 = vmatpush2.bf16.msra.mxu0 0
  %1659 = vmatprep.subr.bf16.mxu0 0
  %1660 = vmatpush2.bf16.msra.mxu0 0
  %1661 = vmatprep.subr.bf16.mxu0 0
  %1662 = vmatpush2.bf16.msra.mxu0 0
  %1663 = vmatprep.mubr.bf16.mxu0 0
  %1664 = vmatmul.mubr.bf16.gmra.mxu0 %v1629
  %v1665 = vpop.f32.mrf.mxu0
  %v1666 = vadd.f32 %v1534, %v1665
  %v1667 = vpop.f32.mrf.mxu0
  %v1668 = vpop.f32.mrf.mxu0
  %v1669 = vadd.f32 %v1535, %v1668
  %v1670 = vpop.f32.mrf.mxu0
  %1671 = vdwg.mxu0
  %v1672 = vadd.f32 %v1666, %v1522
  %v1673 = vadd.f32 %v1669, %v1525
  %v1674 = vmul.f32 %v1672, 0.5
  %v1675 = vmul.f32 %v1673, 0.5
  %v1676 = vmul.f32 %v1672, 0.044715
  %v1677 = vmul.f32 %v1673, 0.044715
  %v1678 = vmul.f32 %v1676, %v1672
  %v1679 = vmul.f32 %v1677, %v1673
  %v1680 = vmul.f32 %v1678, %v1672
  %v1681 = vmul.f32 %v1679, %v1673
  %v1682 = vadd.f32 %v1672, %v1680
  %v1683 = vadd.f32 %v1673, %v1681
  %v1684 = vmul.f32 %v1682, 0.7978846
  %v1685 = vmul.f32 %v1683, 0.7978846
  %v1686 = vtanh.pop %v1684
  %v1687 = vtanh.pop %v1685
  %v1688 = vadd.f32 %v1686, 1.0
  %v1689 = vadd.f32 %v1687, 1.0
  %v1690 = vmul.f32 %v1674, %v1688
  %v1691 = vmul.f32 %v1675, %v1689
  %v1692 = vpack.c.bf16 %v1691, %v1690
  %1693 = vmatprep.subr.bf16.mxu0 0
  %1694 = vmatpush1.bf16.msra.mxu0 0
  %1695 = vmatprep.subr.bf16.mxu0 0
  %1696 = vmatpush1.bf16.msra.mxu0 0
  %1697 = vmatprep.subr.bf16.mxu0 0
  %1698 = vmatpush1.bf16.msra.mxu0 0
  %1699 = vmatprep.subr.bf16.mxu0 0
  %1700 = vmatpush1.bf16.msra.mxu0 0
  %1701 = vmatprep.subr.bf16.mxu0 0
  %1702 = vmatpush1.bf16.msra.mxu0 0
  %1703 = vmatprep.subr.bf16.mxu0 0
  %1704 = vmatpush1.bf16.msra.mxu0 0
  %1705 = vmatprep.subr.bf16.mxu0 0
  %1706 = vmatpush1.bf16.msra.mxu0 0
  %1707 = vmatprep.subr.bf16.mxu0 0
  %1708 = vmatpush1.bf16.msra.mxu0 %v1692
  %1709 = vmatprep.subr.bf16.mxu0 0
  %1710 = vmatpush2.bf16.msra.mxu0 0
  %1711 = vmatprep.subr.bf16.mxu0 0
  %1712 = vmatpush2.bf16.msra.mxu0 0
  %1713 = vmatprep.subr.bf16.mxu0 0
  %1714 = vmatpush2.bf16.msra.mxu0 0
  %1715 = vmatprep.subr.bf16.mxu0 0
  %1716 = vmatpush2.bf16.msra.mxu0 0
  %1717 = vmatprep.subr.bf16.mxu0 0
  %1718 = vmatpush2.bf16.msra.mxu0 0
  %1719 = vmatprep.subr.bf16.mxu0 0
  %1720 = vmatpush2.bf16.msra.mxu0 0
  %1721 = vmatprep.subr.bf16.mxu0 0
  %1722 = vmatpush2.bf16.msra.mxu0 0
  %1723 = vmatprep.subr.bf16.mxu0 0
  %1724 = vmatpush2.bf16.msra.mxu0 0
  %1725 = vmatprep.mubr.bf16.mxu0 0
  %1726 = vmatmul.mubr.bf16.gmra.mxu0 %v1561
  %v1727 = vpop.f32.mrf.mxu0
  %v1728 = vadd.f32 %v1532, %v1727
  %v1729 = vpop.f32.mrf.mxu0
  %v1730 = vpop.f32.mrf.mxu0
  %v1731 = vadd.f32 %v1533, %v1730
  %v1732 = vpop.f32.mrf.mxu0
  %1733 = vdwg.mxu0
  %v1734 = vmul.f32 %v1728, 0.5
  %v1735 = vmul.f32 %v1731, 0.5
  %v1736 = vmul.f32 %v1728, 0.044715
  %v1737 = vmul.f32 %v1731, 0.044715
  %v1738 = vmul.f32 %v1736, %v1728
  %v1739 = vmul.f32 %v1737, %v1731
  %v1740 = vmul.f32 %v1738, %v1728
  %v1741 = vmul.f32 %v1739, %v1731
  %v1742 = vadd.f32 %v1728, %v1740
  %v1743 = vadd.f32 %v1731, %v1741
  %v1744 = vmul.f32 %v1742, 0.7978846
  %v1745 = vmul.f32 %v1743, 0.7978846
  %v1746 = vtanh.pop %v1744
  %v1747 = vtanh.pop %v1745
  %v1748 = vadd.f32 %v1746, 1.0
  %v1749 = vadd.f32 %v1747, 1.0
  %v1750 = vmul.f32 %v1734, %v1748
  %v1751 = vmul.f32 %v1735, %v1749
  %v1752 = vpack.c.bf16 %v1751, %v1750
  %1753 = vmatprep.subr.bf16.mxu0 0
  %1754 = vmatpush1.bf16.msra.mxu0 0
  %1755 = vmatprep.subr.bf16.mxu0 0
  %1756 = vmatpush1.bf16.msra.mxu0 0
  %1757 = vmatprep.subr.bf16.mxu0 0
  %1758 = vmatpush1.bf16.msra.mxu0 0
  %1759 = vmatprep.subr.bf16.mxu0 0
  %1760 = vmatpush1.bf16.msra.mxu0 0
  %1761 = vmatprep.subr.bf16.mxu0 0
  %1762 = vmatpush1.bf16.msra.mxu0 0
  %1763 = vmatprep.subr.bf16.mxu0 0
  %1764 = vmatpush1.bf16.msra.mxu0 0
  %1765 = vmatprep.subr.bf16.mxu0 0
  %1766 = vmatpush1.bf16.msra.mxu0 0
  %1767 = vmatprep.subr.bf16.mxu0 0
  %1768 = vmatpush1.bf16.msra.mxu0 %v1752
  %1769 = vmatprep.subr.bf16.mxu0 0
  %1770 = vmatpush2.bf16.msra.mxu0 0
  %1771 = vmatprep.subr.bf16.mxu0 0
  %1772 = vmatpush2.bf16.msra.mxu0 0
  %1773 = vmatprep.subr.bf16.mxu0 0
  %1774 = vmatpush2.bf16.msra.mxu0 0
  %1775 = vmatprep.subr.bf16.mxu0 0
  %1776 = vmatpush2.bf16.msra.mxu0 0
  %1777 = vmatprep.subr.bf16.mxu0 0
  %1778 = vmatpush2.bf16.msra.mxu0 0
  %1779 = vmatprep.subr.bf16.mxu0 0
  %1780 = vmatpush2.bf16.msra.mxu0 0
  %1781 = vmatprep.subr.bf16.mxu0 0
  %1782 = vmatpush2.bf16.msra.mxu0 0
  %1783 = vmatprep.subr.bf16.mxu0 0
  %1784 = vmatpush2.bf16.msra.mxu0 0
  %1785 = vmatprep.mubr.bf16.mxu0 0
  %1786 = vmatmul.mubr.bf16.gmra.mxu0 %v1629
  %v1787 = vpop.f32.mrf.mxu0
  %v1788 = vadd.f32 %v1534, %v1787
  %v1789 = vpop.f32.mrf.mxu0
  %v1790 = vpop.f32.mrf.mxu0
  %v1791 = vadd.f32 %v1535, %v1790
  %v1792 = vpop.f32.mrf.mxu0
  %1793 = vdwg.mxu0
  %v1794 = vadd.f32 %v1788, %v1522
  %v1795 = vadd.f32 %v1791, %v1525
  %v1796 = vmul.f32 %v1794, 0.5
  %v1797 = vmul.f32 %v1795, 0.5
  %v1798 = vmul.f32 %v1794, 0.044715
  %v1799 = vmul.f32 %v1795, 0.044715
  %v1800 = vmul.f32 %v1798, %v1794
  %v1801 = vmul.f32 %v1799, %v1795
  %v1802 = vmul.f32 %v1800, %v1794
  %v1803 = vmul.f32 %v1801, %v1795
  %v1804 = vadd.f32 %v1794, %v1802
  %v1805 = vadd.f32 %v1795, %v1803
  %v1806 = vmul.f32 %v1804, 0.7978846
  %v1807 = vmul.f32 %v1805, 0.7978846
  %v1808 = vtanh.pop %v1806
  %v1809 = vtanh.pop %v1807
  %v1810 = vadd.f32 %v1808, 1.0
  %v1811 = vadd.f32 %v1809, 1.0
  %v1812 = vmul.f32 %v1796, %v1810
  %v1813 = vmul.f32 %v1797, %v1811
  %v1814 = vld [vmem:[%s1 + $0x128] sm:$0xf]
  %v1815 = vld [vmem:[%s1 + $0x12c] sm:$0xf]
  %v1816 = vpack.c.bf16 %v1813, %v1812
  %v1817 = vld [vmem:[%s2 + $0x120] sm:$0xff]
  %v1818 = vld [vmem:[%s2 + $0x128] sm:$0xff]
  %v1821 = vunpack.c.l.b16 %v1814
  %v1822 = vunpack.c.l.b16 %v1815
  %v1823 = vpack.c.b16 %v1822, %v1821
  %v1825 = vsel %vm319, %v1823, 0
  %1827 = vmatprep.subr.bf16.mxu0 0
  %1828 = vmatpush1.bf16.msra.mxu0 0
  %1829 = vmatprep.subr.bf16.mxu0 0
  %1830 = vmatpush1.bf16.msra.mxu0 0
  %1831 = vmatprep.subr.bf16.mxu0 0
  %1832 = vmatpush1.bf16.msra.mxu0 0
  %1833 = vmatprep.subr.bf16.mxu0 0
  %1834 = vmatpush1.bf16.msra.mxu0 0
  %1835 = vmatprep.subr.bf16.mxu0 0
  %1836 = vmatpush1.bf16.msra.mxu0 0
  %1837 = vmatprep.subr.bf16.mxu0 0
  %1838 = vmatpush1.bf16.msra.mxu0 0
  %1839 = vmatprep.subr.bf16.mxu0 0
  %1840 = vmatpush1.bf16.msra.mxu0 0
  %1841 = vmatprep.subr.bf16.mxu0 0
  %1842 = vmatpush1.bf16.msra.mxu0 %v1816
  %1843 = vmatprep.subr.bf16.mxu0 0
  %1844 = vmatpush2.bf16.msra.mxu0 0
  %1845 = vmatprep.subr.bf16.mxu0 0
  %1846 = vmatpush2.bf16.msra.mxu0 0
  %1847 = vmatprep.subr.bf16.mxu0 0
  %1848 = vmatpush2.bf16.msra.mxu0 0
  %1849 = vmatprep.subr.bf16.mxu0 0
  %1850 = vmatpush2.bf16.msra.mxu0 0
  %1851 = vmatprep.subr.bf16.mxu0 0
  %1852 = vmatpush2.bf16.msra.mxu0 0
  %1853 = vmatprep.subr.bf16.mxu0 0
  %1854 = vmatpush2.bf16.msra.mxu0 0
  %1855 = vmatprep.subr.bf16.mxu0 0
  %1856 = vmatpush2.bf16.msra.mxu0 0
  %1857 = vmatprep.subr.bf16.mxu0 0
  %1858 = vmatpush2.bf16.msra.mxu0 0
  %1859 = vmatprep.mubr.bf16.mxu0 0
  %1860 = vmatmul.mubr.bf16.gmra.mxu0 %v1825
  %v1861 = vpop.f32.mrf.mxu0
  %v1862 = vadd.f32 %v1817, %v1861
  %v1863 = vpop.f32.mrf.mxu0
  %v1864 = vpop.f32.mrf.mxu0
  %v1865 = vadd.f32 %v1818, %v1864
  %v1866 = vpop.f32.mrf.mxu0
  %1867 = vdwg.mxu0
  %v1868 = vadd.f32 %v1288, %v1862
  %v1869 = vadd.f32 %v1289, %v1865
  %v1871 = vsel %vm124, %v1868, 0
  %v1874 = vsel %vm124, %v1869, 0
  %1876 = vmatprep.subr.mxu0 0.0
  %1877 = vmatpush1.msra.mxu0 0.0
  %1878 = vmatprep.subr.mxu0 0.0
  %1879 = vmatpush1.msra.mxu0 0.0
  %1880 = vmatprep.subr.mxu0 0.0
  %1881 = vmatpush1.msra.mxu0 0.0
  %1882 = vmatprep.subr.mxu0 0.0
  %1883 = vmatpush1.msra.mxu0 0.0
  %1884 = vmatprep.subr.mxu0 0.0
  %1885 = vmatpush1.msra.mxu0 0.0
  %1886 = vmatprep.subr.mxu0 0.0
  %1887 = vmatpush1.msra.mxu0 0.0
  %1888 = vmatprep.subr.mxu0 0.0
  %1889 = vmatpush1.msra.mxu0 0.0
  %1890 = vmatprep.subr.mxu0 0.0
  %1891 = vmatpush1.msra.mxu0 0.0
  %1892 = vmatprep.subr.mxu0 0.0
  %1893 = vmatpush1.msra.mxu0 %v123
  %1894 = vmatprep.subr.mxu0 0.0
  %1895 = vmatpush1.msra.mxu0 %v122
  %1896 = vmatprep.subr.mxu0 0.0
  %1897 = vmatpush1.msra.mxu0 %v121
  %1898 = vmatprep.subr.mxu0 0.0
  %1899 = vmatpush1.msra.mxu0 %v120
  %1900 = vmatprep.subr.mxu0 0.0
  %1901 = vmatpush1.msra.mxu0 %v119
  %1902 = vmatprep.subr.mxu0 0.0
  %1903 = vmatpush1.msra.mxu0 %v118
  %1904 = vmatprep.subr.mxu0 0.0
  %1905 = vmatpush1.msra.mxu0 %v117
  %1906 = vmatprep.subr.mxu0 0.0
  %1907 = vmatpush1.msra.mxu0 %v116
  %1908 = vmatprep.subr.mxu0 0.0
  %1909 = vmatpush2.msra.mxu0 0.0
  %1910 = vmatprep.subr.mxu0 0.0
  %1911 = vmatpush2.msra.mxu0 0.0
  %1912 = vmatprep.subr.mxu0 0.0
  %1913 = vmatpush2.msra.mxu0 0.0
  %1914 = vmatprep.subr.mxu0 0.0
  %1915 = vmatpush2.msra.mxu0 0.0
  %1916 = vmatprep.subr.mxu0 0.0
  %1917 = vmatpush2.msra.mxu0 0.0
  %1918 = vmatprep.subr.mxu0 0.0
  %1919 = vmatpush2.msra.mxu0 0.0
  %1920 = vmatprep.subr.mxu0 0.0
  %1921 = vmatpush2.msra.mxu0 0.0
  %1922 = vmatprep.subr.mxu0 0.0
  %1923 = vmatpush2.msra.mxu0 0.0
  %1924 = vmatprep.subr.mxu0 0.0
  %1925 = vmatpush2.msra.mxu0 0.0
  %1926 = vmatprep.subr.mxu0 0.0
  %1927 = vmatpush2.msra.mxu0 0.0
  %1928 = vmatprep.subr.mxu0 0.0
  %1929 = vmatpush2.msra.mxu0 0.0
  %1930 = vmatprep.subr.mxu0 0.0
  %1931 = vmatpush2.msra.mxu0 0.0
  %1932 = vmatprep.subr.mxu0 0.0
  %1933 = vmatpush2.msra.mxu0 0.0
  %1934 = vmatprep.subr.mxu0 0.0
  %1935 = vmatpush2.msra.mxu0 0.0
  %1936 = vmatprep.subr.mxu0 0.0
  %1937 = vmatpush2.msra.mxu0 0.0
  %1938 = vmatprep.subr.mxu0 0.0
  %1939 = vmatpush2.msra.mxu0 0.0
  %1940 = vmatprep.mubr.f32.mxu0 0.0
  %1941 = vmatmul.mubr.f32.gmra.mxu0 %v1871
  %v1942 = vpop.f32.mrf.mxu0
  %v1943 = vadd.f32 0.0, %v1942
  %v1944 = vpop.f32.mrf.mxu0
  %1945 = vmatprep.mubr.f32.mxu0 0.0
  %1946 = vmatmul.mubr.f32.gmra.mxu0 %v1874
  %v1947 = vpop.f32.mrf.mxu0
  %v1948 = vadd.f32 0.0, %v1947
  %v1949 = vpop.f32.mrf.mxu0
  %1950 = vdwg.mxu0
  %v1951 = vsub.f32 %v1868, %v1943
  %v1952 = vsub.f32 %v1869, %v1948
  %v1953 = vmul.f32 %v1951, %v1951
  %v1954 = vmul.f32 %v1952, %v1952
  %v1956 = vsel %vm124, %v1953, 0
  %v1959 = vsel %vm124, %v1954, 0
  %1961 = vmatprep.subr.mxu0 0.0
  %1962 = vmatpush1.msra.mxu0 0.0
  %1963 = vmatprep.subr.mxu0 0.0
  %1964 = vmatpush1.msra.mxu0 0.0
  %1965 = vmatprep.subr.mxu0 0.0
  %1966 = vmatpush1.msra.mxu0 0.0
  %1967 = vmatprep.subr.mxu0 0.0
  %1968 = vmatpush1.msra.mxu0 0.0
  %1969 = vmatprep.subr.mxu0 0.0
  %1970 = vmatpush1.msra.mxu0 0.0
  %1971 = vmatprep.subr.mxu0 0.0
  %1972 = vmatpush1.msra.mxu0 0.0
  %1973 = vmatprep.subr.mxu0 0.0
  %1974 = vmatpush1.msra.mxu0 0.0
  %1975 = vmatprep.subr.mxu0 0.0
  %1976 = vmatpush1.msra.mxu0 0.0
  %1977 = vmatprep.subr.mxu0 0.0
  %1978 = vmatpush1.msra.mxu0 %v123
  %1979 = vmatprep.subr.mxu0 0.0
  %1980 = vmatpush1.msra.mxu0 %v122
  %1981 = vmatprep.subr.mxu0 0.0
  %1982 = vmatpush1.msra.mxu0 %v121
  %1983 = vmatprep.subr.mxu0 0.0
  %1984 = vmatpush1.msra.mxu0 %v120
  %1985 = vmatprep.subr.mxu0 0.0
  %1986 = vmatpush1.msra.mxu0 %v119
  %1987 = vmatprep.subr.mxu0 0.0
  %1988 = vmatpush1.msra.mxu0 %v118
  %1989 = vmatprep.subr.mxu0 0.0
  %1990 = vmatpush1.msra.mxu0 %v117
  %1991 = vmatprep.subr.mxu0 0.0
  %1992 = vmatpush1.msra.mxu0 %v116
  %1993 = vmatprep.subr.mxu0 0.0
  %1994 = vmatpush2.msra.mxu0 0.0
  %1995 = vmatprep.subr.mxu0 0.0
  %1996 = vmatpush2.msra.mxu0 0.0
  %1997 = vmatprep.subr.mxu0 0.0
  %1998 = vmatpush2.msra.mxu0 0.0
  %1999 = vmatprep.subr.mxu0 0.0
  %2000 = vmatpush2.msra.mxu0 0.0
  %2001 = vmatprep.subr.mxu0 0.0
  %2002 = vmatpush2.msra.mxu0 0.0
  %2003 = vmatprep.subr.mxu0 0.0
  %2004 = vmatpush2.msra.mxu0 0.0
  %2005 = vmatprep.subr.mxu0 0.0
  %2006 = vmatpush2.msra.mxu0 0.0
  %2007 = vmatprep.subr.mxu0 0.0
  %2008 = vmatpush2.msra.mxu0 0.0
  %2009 = vmatprep.subr.mxu0 0.0
  %2010 = vmatpush2.msra.mxu0 0.0
  %2011 = vmatprep.subr.mxu0 0.0
  %2012 = vmatpush2.msra.mxu0 0.0
  %2013 = vmatprep.subr.mxu0 0.0
  %2014 = vmatpush2.msra.mxu0 0.0
  %2015 = vmatprep.subr.mxu0 0.0
  %2016 = vmatpush2.msra.mxu0 0.0
  %2017 = vmatprep.subr.mxu0 0.0
  %2018 = vmatpush2.msra.mxu0 0.0
  %2019 = vmatprep.subr.mxu0 0.0
  %2020 = vmatpush2.msra.mxu0 0.0
  %2021 = vmatprep.subr.mxu0 0.0
  %2022 = vmatpush2.msra.mxu0 0.0
  %2023 = vmatprep.subr.mxu0 0.0
  %2024 = vmatpush2.msra.mxu0 0.0
  %2025 = vmatprep.mubr.f32.mxu0 0.0
  %2026 = vmatmul.mubr.f32.gmra.mxu0 %v1956
  %v2027 = vpop.f32.mrf.mxu0
  %v2028 = vadd.f32 1e-06, %v2027
  %v2029 = vpop.f32.mrf.mxu0
  %2030 = vmatprep.mubr.f32.mxu0 0.0
  %2031 = vmatmul.mubr.f32.gmra.mxu0 %v1959
  %v2032 = vpop.f32.mrf.mxu0
  %v2033 = vadd.f32 1e-06, %v2032
  %v2034 = vpop.f32.mrf.mxu0
  %2035 = vdwg.mxu0
  %v2036 = vrsqrt.pop %v2028
  %v2037 = vrsqrt.pop %v2033
  %v2038 = vmul.f32 %v1951, %v2036
  %v2039 = vmul.f32 %v1952, %v2037
  %v2040 = vpack.c.bf16 %v2039, %v2038
  %v2041 = vld [vmem:[%s1 + $0x130] sm:$0xf]
  %v2042 = vld [vmem:[%s1 + $0x134] sm:$0xf]
  %v2043 = vld [vmem:[%s1 + $0x138] sm:$0xf]
  %v2044 = vld [vmem:[%s1 + $0x13c] sm:$0xf]
  %v2045 = vld [vmem:[%s1 + $0x140] sm:$0xf]
  %v2046 = vld [vmem:[%s1 + $0x144] sm:$0xf]
  %v2047 = vld [vmem:[%s1 + $0x148] sm:$0xf]
  %v2048 = vld [vmem:[%s1 + $0x14c] sm:$0xf]
  %v2049 = vld [vmem:[%s2 + $0x130] sm:$0x1]
  %v2050 = vlaneseq
  %v2051 = vshrl.u32 %v2050, 7
  %v2052 = vsub.s32 0, %v2051
  %v2053 = vrot.slane %v2049, %v2052
  %v2062 = vunpack.c.l.b16 %v2041
  %v2063 = vunpack.c.l.b16 %v2042
  %v2064 = vunpack.c.l.b16 %v2043
  %v2065 = vunpack.c.l.b16 %v2044
  %v2066 = vunpack.c.l.b16 %v2045
  %v2067 = vunpack.c.l.b16 %v2046
  %v2068 = vunpack.c.l.b16 %v2047
  %v2069 = vunpack.c.l.b16 %v2048
  %v2070 = vpack.c.b16 %v2063, %v2062
  %v2071 = vpack.c.b16 %v2065, %v2064
  %v2072 = vpack.c.b16 %v2067, %v2066
  %v2073 = vpack.c.b16 %v2069, %v2068
  %v2079 = vsel %vm124, %v2040, 0
  %2081 = vmatprep.subr.bf16.mxu0 0
  %2082 = vmatpush1.bf16.msra.mxu0 0
  %2083 = vmatprep.subr.bf16.mxu0 0
  %2084 = vmatpush1.bf16.msra.mxu0 0
  %2085 = vmatprep.subr.bf16.mxu0 0
  %2086 = vmatpush1.bf16.msra.mxu0 0
  %2087 = vmatprep.subr.bf16.mxu0 0
  %2088 = vmatpush1.bf16.msra.mxu0 0
  %2089 = vmatprep.subr.bf16.mxu0 0
  %2090 = vmatpush1.bf16.msra.mxu0 %v2073
  %2091 = vmatprep.subr.bf16.mxu0 0
  %2092 = vmatpush1.bf16.msra.mxu0 %v2072
  %2093 = vmatprep.subr.bf16.mxu0 0
  %2094 = vmatpush1.bf16.msra.mxu0 %v2071
  %2095 = vmatprep.subr.bf16.mxu0 0
  %2096 = vmatpush1.bf16.msra.mxu0 %v2070
  %2097 = vmatprep.subr.bf16.mxu0 0
  %2098 = vmatpush2.bf16.msra.mxu0 0
  %2099 = vmatprep.subr.bf16.mxu0 0
  %2100 = vmatpush2.bf16.msra.mxu0 0
  %2101 = vmatprep.subr.bf16.mxu0 0
  %2102 = vmatpush2.bf16.msra.mxu0 0
  %2103 = vmatprep.subr.bf16.mxu0 0
  %2104 = vmatpush2.bf16.msra.mxu0 0
  %2105 = vmatprep.subr.bf16.mxu0 0
  %2106 = vmatpush2.bf16.msra.mxu0 0
  %2107 = vmatprep.subr.bf16.mxu0 0
  %2108 = vmatpush2.bf16.msra.mxu0 0
  %2109 = vmatprep.subr.bf16.mxu0 0
  %2110 = vmatpush2.bf16.msra.mxu0 0
  %2111 = vmatprep.subr.bf16.mxu0 0
  %2112 = vmatpush2.bf16.msra.mxu0 0
  %2113 = vmatprep.mubr.bf16.mxu0 0
  %2114 = vmatmul.mubr.bf16.gmra.mxu0 %v2079
  %v2115 = vpop.f32.mrf.mxu0
  %v2116 = vadd.f32 %v2053, %v2115
  %v2117 = vpop.f32.mrf.mxu0
  %v2118 = vpop.f32.mrf.mxu0
  %v2119 = vadd.f32 %v2053, %v2118
  %v2120 = vpop.f32.mrf.mxu0
  %2121 = vdwg.mxu0
  %v2122 = vmul.f32 %v2116, 0.5
  %v2123 = vmul.f32 %v2119, 0.5
  %v2124 = vmul.f32 %v2116, 0.044715
  %v2125 = vmul.f32 %v2119, 0.044715
  %v2126 = vmul.f32 %v2124, %v2116
  %v2127 = vmul.f32 %v2125, %v2119
  %v2128 = vmul.f32 %v2126, %v2116
  %v2129 = vmul.f32 %v2127, %v2119
  %v2130 = vadd.f32 %v2116, %v2128
  %v2131 = vadd.f32 %v2119, %v2129
  %v2132 = vmul.f32 %v2130, 0.7978846
  %v2133 = vmul.f32 %v2131, 0.7978846
  %v2134 = vtanh.pop %v2132
  %v2135 = vtanh.pop %v2133
  %v2136 = vadd.f32 %v2134, 1.0
  %v2137 = vadd.f32 %v2135, 1.0
  %v2138 = vmul.f32 %v2122, %v2136
  %v2139 = vmul.f32 %v2123, %v2137
  %v2140 = vld [vmem:[%s1 + $0x150] sm:$0xf]
  %v2141 = vld [vmem:[%s1 + $0x154] sm:$0xf]
  %v2142 = vld [vmem:[%s1 + $0x158] sm:$0xf]
  %v2143 = vld [vmem:[%s1 + $0x15c] sm:$0xf]
  %v2144 = vld [vmem:[%s1 + $0x160] sm:$0xf]
  %v2145 = vld [vmem:[%s1 + $0x164] sm:$0xf]
  %v2146 = vld [vmem:[%s1 + $0x168] sm:$0xf]
  %v2147 = vld [vmem:[%s1 + $0x16c] sm:$0xf]
  %v2156 = vunpack.c.l.b16 %v2140
  %v2157 = vunpack.c.l.b16 %v2141
  %v2158 = vunpack.c.l.b16 %v2142
  %v2159 = vunpack.c.l.b16 %v2143
  %v2160 = vunpack.c.l.b16 %v2144
  %v2161 = vunpack.c.l.b16 %v2145
  %v2162 = vunpack.c.l.b16 %v2146
  %v2163 = vunpack.c.l.b16 %v2147
  %v2164 = vpack.c.b16 %v2157, %v2156
  %v2165 = vpack.c.b16 %v2159, %v2158
  %v2166 = vpack.c.b16 %v2161, %v2160
  %v2167 = vpack.c.b16 %v2163, %v2162
  %2172 = vmatprep.subr.bf16.mxu0 0
  %2173 = vmatpush1.bf16.msra.mxu0 0
  %2174 = vmatprep.subr.bf16.mxu0 0
  %2175 = vmatpush1.bf16.msra.mxu0 0
  %2176 = vmatprep.subr.bf16.mxu0 0
  %2177 = vmatpush1.bf16.msra.mxu0 0
  %2178 = vmatprep.subr.bf16.mxu0 0
  %2179 = vmatpush1.bf16.msra.mxu0 0
  %2180 = vmatprep.subr.bf16.mxu0 0
  %2181 = vmatpush1.bf16.msra.mxu0 %v2167
  %2182 = vmatprep.subr.bf16.mxu0 0
  %2183 = vmatpush1.bf16.msra.mxu0 %v2166
  %2184 = vmatprep.subr.bf16.mxu0 0
  %2185 = vmatpush1.bf16.msra.mxu0 %v2165
  %2186 = vmatprep.subr.bf16.mxu0 0
  %2187 = vmatpush1.bf16.msra.mxu0 %v2164
  %2188 = vmatprep.subr.bf16.mxu0 0
  %2189 = vmatpush2.bf16.msra.mxu0 0
  %2190 = vmatprep.subr.bf16.mxu0 0
  %2191 = vmatpush2.bf16.msra.mxu0 0
  %2192 = vmatprep.subr.bf16.mxu0 0
  %2193 = vmatpush2.bf16.msra.mxu0 0
  %2194 = vmatprep.subr.bf16.mxu0 0
  %2195 = vmatpush2.bf16.msra.mxu0 0
  %2196 = vmatprep.subr.bf16.mxu0 0
  %2197 = vmatpush2.bf16.msra.mxu0 0
  %2198 = vmatprep.subr.bf16.mxu0 0
  %2199 = vmatpush2.bf16.msra.mxu0 0
  %2200 = vmatprep.subr.bf16.mxu0 0
  %2201 = vmatpush2.bf16.msra.mxu0 0
  %2202 = vmatprep.subr.bf16.mxu0 0
  %2203 = vmatpush2.bf16.msra.mxu0 0
  %2204 = vmatprep.mubr.bf16.mxu0 0
  %2205 = vmatmul.mubr.bf16.gmra.mxu0 %v2079
  %v2206 = vpop.f32.mrf.mxu0
  %v2207 = vadd.f32 %v2053, %v2206
  %v2208 = vpop.f32.mrf.mxu0
  %v2209 = vpop.f32.mrf.mxu0
  %v2210 = vadd.f32 %v2053, %v2209
  %v2211 = vpop.f32.mrf.mxu0
  %2212 = vdwg.mxu0
  %v2213 = vmul.f32 %v2207, 0.5
  %v2214 = vmul.f32 %v2210, 0.5
  %v2215 = vmul.f32 %v2207, 0.044715
  %v2216 = vmul.f32 %v2210, 0.044715
  %v2217 = vmul.f32 %v2215, %v2207
  %v2218 = vmul.f32 %v2216, %v2210
  %v2219 = vmul.f32 %v2217, %v2207
  %v2220 = vmul.f32 %v2218, %v2210
  %v2221 = vadd.f32 %v2207, %v2219
  %v2222 = vadd.f32 %v2210, %v2220
  %v2223 = vmul.f32 %v2221, 0.7978846
  %v2224 = vmul.f32 %v2222, 0.7978846
  %v2225 = vtanh.pop %v2223
  %v2226 = vtanh.pop %v2224
  %v2227 = vadd.f32 %v2225, 1.0
  %v2228 = vadd.f32 %v2226, 1.0
  %v2229 = vmul.f32 %v2213, %v2227
  %v2230 = vmul.f32 %v2214, %v2228
  %v2231 = vpack.c.bf16 %v2139, %v2138
  %v2232 = vld [vmem:[%s1 + $0x170] sm:$0xf]
  %v2233 = vld [vmem:[%s1 + $0x174] sm:$0xf]
  %v2234 = vld [vmem:[%s1 + $0x178] sm:$0xf]
  %v2235 = vld [vmem:[%s1 + $0x17c] sm:$0xf]
  %v2236 = vld [vmem:[%s1 + $0x180] sm:$0xf]
  %v2237 = vld [vmem:[%s1 + $0x184] sm:$0xf]
  %v2238 = vld [vmem:[%s1 + $0x188] sm:$0xf]
  %v2239 = vld [vmem:[%s1 + $0x18c] sm:$0xf]
  %v2240 = vld [vmem:[%s1 + $0x190] sm:$0xf]
  %v2241 = vld [vmem:[%s1 + $0x194] sm:$0xf]
  %v2242 = vld [vmem:[%s1 + $0x198] sm:$0xf]
  %v2243 = vld [vmem:[%s1 + $0x19c] sm:$0xf]
  %v2244 = vld [vmem:[%s1 + $0x1a0] sm:$0xf]
  %v2245 = vld [vmem:[%s1 + $0x1a4] sm:$0xf]
  %v2246 = vld [vmem:[%s1 + $0x1a8] sm:$0xf]
  %v2247 = vld [vmem:[%s1 + $0x1ac] sm:$0xf]
  %v2264 = vunpack.c.l.b16 %v2232
  %v2265 = vunpack.c.l.b16 %v2233
  %v2266 = vunpack.c.l.b16 %v2234
  %v2267 = vunpack.c.l.b16 %v2235
  %v2268 = vunpack.c.l.b16 %v2236
  %v2269 = vunpack.c.l.b16 %v2237
  %v2270 = vunpack.c.l.b16 %v2238
  %v2271 = vunpack.c.l.b16 %v2239
  %v2272 = vunpack.c.l.b16 %v2240
  %v2273 = vunpack.c.l.b16 %v2241
  %v2274 = vunpack.c.l.b16 %v2242
  %v2275 = vunpack.c.l.b16 %v2243
  %v2276 = vunpack.c.l.b16 %v2244
  %v2277 = vunpack.c.l.b16 %v2245
  %v2278 = vunpack.c.l.b16 %v2246
  %v2279 = vunpack.c.l.b16 %v2247
  %v2280 = vpack.c.b16 %v2265, %v2264
  %v2281 = vpack.c.b16 %v2267, %v2266
  %v2282 = vpack.c.b16 %v2269, %v2268
  %v2283 = vpack.c.b16 %v2271, %v2270
  %v2284 = vpack.c.b16 %v2273, %v2272
  %v2285 = vpack.c.b16 %v2275, %v2274
  %v2286 = vpack.c.b16 %v2277, %v2276
  %v2287 = vpack.c.b16 %v2279, %v2278
  %2296 = vmatprep.subr.bf16.mxu0 0
  %2297 = vmatpush1.bf16.msra.mxu0 %v2287
  %2298 = vmatprep.subr.bf16.mxu0 0
  %2299 = vmatpush1.bf16.msra.mxu0 %v2286
  %2300 = vmatprep.subr.bf16.mxu0 0
  %2301 = vmatpush1.bf16.msra.mxu0 %v2285
  %2302 = vmatprep.subr.bf16.mxu0 0
  %2303 = vmatpush1.bf16.msra.mxu0 %v2284
  %2304 = vmatprep.subr.bf16.mxu0 0
  %2305 = vmatpush1.bf16.msra.mxu0 %v2283
  %2306 = vmatprep.subr.bf16.mxu0 0
  %2307 = vmatpush1.bf16.msra.mxu0 %v2282
  %2308 = vmatprep.subr.bf16.mxu0 0
  %2309 = vmatpush1.bf16.msra.mxu0 %v2281
  %2310 = vmatprep.subr.bf16.mxu0 0
  %2311 = vmatpush1.bf16.msra.mxu0 %v2280
  %2312 = vmatprep.subr.bf16.mxu0 0
  %2313 = vmatpush2.bf16.msra.mxu0 0
  %2314 = vmatprep.subr.bf16.mxu0 0
  %2315 = vmatpush2.bf16.msra.mxu0 0
  %2316 = vmatprep.subr.bf16.mxu0 0
  %2317 = vmatpush2.bf16.msra.mxu0 0
  %2318 = vmatprep.subr.bf16.mxu0 0
  %2319 = vmatpush2.bf16.msra.mxu0 0
  %2320 = vmatprep.subr.bf16.mxu0 0
  %2321 = vmatpush2.bf16.msra.mxu0 0
  %2322 = vmatprep.subr.bf16.mxu0 0
  %2323 = vmatpush2.bf16.msra.mxu0 0
  %2324 = vmatprep.subr.bf16.mxu0 0
  %2325 = vmatpush2.bf16.msra.mxu0 0
  %2326 = vmatprep.subr.bf16.mxu0 0
  %2327 = vmatpush2.bf16.msra.mxu0 0
  %2328 = vmatprep.mubr.bf16.mxu0 0
  %2329 = vmatmul.mubr.bf16.gmra.mxu0 %v2231
  %v2330 = vpop.f32.mrf.mxu0
  %v2331 = vadd.f32 0.0, %v2330
  %v2332 = vpop.f32.mrf.mxu0
  %v2333 = vpop.f32.mrf.mxu0
  %v2334 = vadd.f32 0.0, %v2333
  %v2335 = vpop.f32.mrf.mxu0
  %2336 = vdwg.mxu0
  %v2337 = vadd.f32 %v1868, %v2331
  %v2338 = vadd.f32 %v1869, %v2334
  %v2339 = vpack.c.bf16 %v2230, %v2229
  %v2340 = vld [vmem:[%s1 + $0x1b0] sm:$0xf]
  %v2341 = vld [vmem:[%s1 + $0x1b4] sm:$0xf]
  %v2342 = vld [vmem:[%s1 + $0x1b8] sm:$0xf]
  %v2343 = vld [vmem:[%s1 + $0x1bc] sm:$0xf]
  %v2344 = vld [vmem:[%s1 + $0x1c0] sm:$0xf]
  %v2345 = vld [vmem:[%s1 + $0x1c4] sm:$0xf]
  %v2346 = vld [vmem:[%s1 + $0x1c8] sm:$0xf]
  %v2347 = vld [vmem:[%s1 + $0x1cc] sm:$0xf]
  %v2348 = vld [vmem:[%s1 + $0x1d0] sm:$0xf]
  %v2349 = vld [vmem:[%s1 + $0x1d4] sm:$0xf]
  %v2350 = vld [vmem:[%s1 + $0x1d8] sm:$0xf]
  %v2351 = vld [vmem:[%s1 + $0x1dc] sm:$0xf]
  %v2352 = vld [vmem:[%s1 + $0x1e0] sm:$0xf]
  %v2353 = vld [vmem:[%s1 + $0x1e4] sm:$0xf]
  %v2354 = vld [vmem:[%s1 + $0x1e8] sm:$0xf]
  %v2355 = vld [vmem:[%s1 + $0x1ec] sm:$0xf]
  %v2372 = vunpack.c.l.b16 %v2340
  %v2373 = vunpack.c.l.b16 %v2341
  %v2374 = vunpack.c.l.b16 %v2342
  %v2375 = vunpack.c.l.b16 %v2343
  %v2376 = vunpack.c.l.b16 %v2344
  %v2377 = vunpack.c.l.b16 %v2345
  %v2378 = vunpack.c.l.b16 %v2346
  %v2379 = vunpack.c.l.b16 %v2347
  %v2380 = vunpack.c.l.b16 %v2348
  %v2381 = vunpack.c.l.b16 %v2349
  %v2382 = vunpack.c.l.b16 %v2350
  %v2383 = vunpack.c.l.b16 %v2351
  %v2384 = vunpack.c.l.b16 %v2352
  %v2385 = vunpack.c.l.b16 %v2353
  %v2386 = vunpack.c.l.b16 %v2354
  %v2387 = vunpack.c.l.b16 %v2355
  %v2388 = vpack.c.b16 %v2373, %v2372
  %v2389 = vpack.c.b16 %v2375, %v2374
  %v2390 = vpack.c.b16 %v2377, %v2376
  %v2391 = vpack.c.b16 %v2379, %v2378
  %v2392 = vpack.c.b16 %v2381, %v2380
  %v2393 = vpack.c.b16 %v2383, %v2382
  %v2394 = vpack.c.b16 %v2385, %v2384
  %v2395 = vpack.c.b16 %v2387, %v2386
  %2404 = vmatprep.subr.bf16.mxu0 0
  %2405 = vmatpush1.bf16.msra.mxu0 %v2395
  %2406 = vmatprep.subr.bf16.mxu0 0
  %2407 = vmatpush1.bf16.msra.mxu0 %v2394
  %2408 = vmatprep.subr.bf16.mxu0 0
  %2409 = vmatpush1.bf16.msra.mxu0 %v2393
  %2410 = vmatprep.subr.bf16.mxu0 0
  %2411 = vmatpush1.bf16.msra.mxu0 %v2392
  %2412 = vmatprep.subr.bf16.mxu0 0
  %2413 = vmatpush1.bf16.msra.mxu0 %v2391
  %2414 = vmatprep.subr.bf16.mxu0 0
  %2415 = vmatpush1.bf16.msra.mxu0 %v2390
  %2416 = vmatprep.subr.bf16.mxu0 0
  %2417 = vmatpush1.bf16.msra.mxu0 %v2389
  %2418 = vmatprep.subr.bf16.mxu0 0
  %2419 = vmatpush1.bf16.msra.mxu0 %v2388
  %2420 = vmatprep.subr.bf16.mxu0 0
  %2421 = vmatpush2.bf16.msra.mxu0 0
  %2422 = vmatprep.subr.bf16.mxu0 0
  %2423 = vmatpush2.bf16.msra.mxu0 0
  %2424 = vmatprep.subr.bf16.mxu0 0
  %2425 = vmatpush2.bf16.msra.mxu0 0
  %2426 = vmatprep.subr.bf16.mxu0 0
  %2427 = vmatpush2.bf16.msra.mxu0 0
  %2428 = vmatprep.subr.bf16.mxu0 0
  %2429 = vmatpush2.bf16.msra.mxu0 0
  %2430 = vmatprep.subr.bf16.mxu0 0
  %2431 = vmatpush2.bf16.msra.mxu0 0
  %2432 = vmatprep.subr.bf16.mxu0 0
  %2433 = vmatpush2.bf16.msra.mxu0 0
  %2434 = vmatprep.subr.bf16.mxu0 0
  %2435 = vmatpush2.bf16.msra.mxu0 0
  %2436 = vmatprep.mubr.bf16.mxu0 0
  %2437 = vmatmul.mubr.bf16.gmra.mxu0 %v2339
  %v2438 = vpop.f32.mrf.mxu0
  %v2439 = vadd.f32 0.0, %v2438
  %v2440 = vpop.f32.mrf.mxu0
  %v2441 = vpop.f32.mrf.mxu0
  %v2442 = vadd.f32 0.0, %v2441
  %v2443 = vpop.f32.mrf.mxu0
  %2444 = vdwg.mxu0
  %v2445 = vadd.f32 %v2337, %v2439
  %v2446 = vadd.f32 %v2338, %v2442
  %v2447 = vld [vmem:[%s2 + $0x140] sm:$0x1]
  %v2448 = vlaneseq
  %v2449 = vshrl.u32 %v2448, 7
  %v2450 = vsub.s32 0, %v2449
  %v2451 = vrot.slane %v2447, %v2450
  %v2452 = vadd.f32 %v2445, %v2451
  %v2453 = vadd.f32 %v2446, %v2451
  %v2455 = vsel %vm124, %v2452, 0
  %v2458 = vsel %vm124, %v2453, 0
  %2460 = vmatprep.subr.mxu0 0.0
  %2461 = vmatpush1.msra.mxu0 0.0
  %2462 = vmatprep.subr.mxu0 0.0
  %2463 = vmatpush1.msra.mxu0 0.0
  %2464 = vmatprep.subr.mxu0 0.0
  %2465 = vmatpush1.msra.mxu0 0.0
  %2466 = vmatprep.subr.mxu0 0.0
  %2467 = vmatpush1.msra.mxu0 0.0
  %2468 = vmatprep.subr.mxu0 0.0
  %2469 = vmatpush1.msra.mxu0 0.0
  %2470 = vmatprep.subr.mxu0 0.0
  %2471 = vmatpush1.msra.mxu0 0.0
  %2472 = vmatprep.subr.mxu0 0.0
  %2473 = vmatpush1.msra.mxu0 0.0
  %2474 = vmatprep.subr.mxu0 0.0
  %2475 = vmatpush1.msra.mxu0 0.0
  %2476 = vmatprep.subr.mxu0 0.0
  %2477 = vmatpush1.msra.mxu0 %v123
  %2478 = vmatprep.subr.mxu0 0.0
  %2479 = vmatpush1.msra.mxu0 %v122
  %2480 = vmatprep.subr.mxu0 0.0
  %2481 = vmatpush1.msra.mxu0 %v121
  %2482 = vmatprep.subr.mxu0 0.0
  %2483 = vmatpush1.msra.mxu0 %v120
  %2484 = vmatprep.subr.mxu0 0.0
  %2485 = vmatpush1.msra.mxu0 %v119
  %2486 = vmatprep.subr.mxu0 0.0
  %2487 = vmatpush1.msra.mxu0 %v118
  %2488 = vmatprep.subr.mxu0 0.0
  %2489 = vmatpush1.msra.mxu0 %v117
  %2490 = vmatprep.subr.mxu0 0.0
  %2491 = vmatpush1.msra.mxu0 %v116
  %2492 = vmatprep.subr.mxu0 0.0
  %2493 = vmatpush2.msra.mxu0 0.0
  %2494 = vmatprep.subr.mxu0 0.0
  %2495 = vmatpush2.msra.mxu0 0.0
  %2496 = vmatprep.subr.mxu0 0.0
  %2497 = vmatpush2.msra.mxu0 0.0
  %2498 = vmatprep.subr.mxu0 0.0
  %2499 = vmatpush2.msra.mxu0 0.0
  %2500 = vmatprep.subr.mxu0 0.0
  %2501 = vmatpush2.msra.mxu0 0.0
  %2502 = vmatprep.subr.mxu0 0.0
  %2503 = vmatpush2.msra.mxu0 0.0
  %2504 = vmatprep.subr.mxu0 0.0
  %2505 = vmatpush2.msra.mxu0 0.0
  %2506 = vmatprep.subr.mxu0 0.0
  %2507 = vmatpush2.msra.mxu0 0.0
  %2508 = vmatprep.subr.mxu0 0.0
  %2509 = vmatpush2.msra.mxu0 0.0
  %2510 = vmatprep.subr.mxu0 0.0
  %2511 = vmatpush2.msra.mxu0 0.0
  %2512 = vmatprep.subr.mxu0 0.0
  %2513 = vmatpush2.msra.mxu0 0.0
  %2514 = vmatprep.subr.mxu0 0.0
  %2515 = vmatpush2.msra.mxu0 0.0
  %2516 = vmatprep.subr.mxu0 0.0
  %2517 = vmatpush2.msra.mxu0 0.0
  %2518 = vmatprep.subr.mxu0 0.0
  %2519 = vmatpush2.msra.mxu0 0.0
  %2520 = vmatprep.subr.mxu0 0.0
  %2521 = vmatpush2.msra.mxu0 0.0
  %2522 = vmatprep.subr.mxu0 0.0
  %2523 = vmatpush2.msra.mxu0 0.0
  %2524 = vmatprep.mubr.f32.mxu0 0.0
  %2525 = vmatmul.mubr.f32.gmra.mxu0 %v2455
  %v2526 = vpop.f32.mrf.mxu0
  %v2527 = vadd.f32 0.0, %v2526
  %v2528 = vpop.f32.mrf.mxu0
  %2529 = vmatprep.mubr.f32.mxu0 0.0
  %2530 = vmatmul.mubr.f32.gmra.mxu0 %v2458
  %v2531 = vpop.f32.mrf.mxu0
  %v2532 = vadd.f32 0.0, %v2531
  %v2533 = vpop.f32.mrf.mxu0
  %2534 = vdwg.mxu0
  %v2535 = vsub.f32 %v2452, %v2527
  %v2536 = vsub.f32 %v2453, %v2532
  %v2537 = vmul.f32 %v2535, %v2535
  %v2538 = vmul.f32 %v2536, %v2536
  %v2540 = vsel %vm124, %v2537, 0
  %v2543 = vsel %vm124, %v2538, 0
  %2545 = vmatprep.subr.mxu0 0.0
  %2546 = vmatpush1.msra.mxu0 0.0
  %2547 = vmatprep.subr.mxu0 0.0
  %2548 = vmatpush1.msra.mxu0 0.0
  %2549 = vmatprep.subr.mxu0 0.0
  %2550 = vmatpush1.msra.mxu0 0.0
  %2551 = vmatprep.subr.mxu0 0.0
  %2552 = vmatpush1.msra.mxu0 0.0
  %2553 = vmatprep.subr.mxu0 0.0
  %2554 = vmatpush1.msra.mxu0 0.0
  %2555 = vmatprep.subr.mxu0 0.0
  %2556 = vmatpush1.msra.mxu0 0.0
  %2557 = vmatprep.subr.mxu0 0.0
  %2558 = vmatpush1.msra.mxu0 0.0
  %2559 = vmatprep.subr.mxu0 0.0
  %2560 = vmatpush1.msra.mxu0 0.0
  %2561 = vmatprep.subr.mxu0 0.0
  %2562 = vmatpush1.msra.mxu0 %v123
  %2563 = vmatprep.subr.mxu0 0.0
  %2564 = vmatpush1.msra.mxu0 %v122
  %2565 = vmatprep.subr.mxu0 0.0
  %2566 = vmatpush1.msra.mxu0 %v121
  %2567 = vmatprep.subr.mxu0 0.0
  %2568 = vmatpush1.msra.mxu0 %v120
  %2569 = vmatprep.subr.mxu0 0.0
  %2570 = vmatpush1.msra.mxu0 %v119
  %2571 = vmatprep.subr.mxu0 0.0
  %2572 = vmatpush1.msra.mxu0 %v118
  %2573 = vmatprep.subr.mxu0 0.0
  %2574 = vmatpush1.msra.mxu0 %v117
  %2575 = vmatprep.subr.mxu0 0.0
  %2576 = vmatpush1.msra.mxu0 %v116
  %2577 = vmatprep.subr.mxu0 0.0
  %2578 = vmatpush2.msra.mxu0 0.0
  %2579 = vmatprep.subr.mxu0 0.0
  %2580 = vmatpush2.msra.mxu0 0.0
  %2581 = vmatprep.subr.mxu0 0.0
  %2582 = vmatpush2.msra.mxu0 0.0
  %2583 = vmatprep.subr.mxu0 0.0
  %2584 = vmatpush2.msra.mxu0 0.0
  %2585 = vmatprep.subr.mxu0 0.0
  %2586 = vmatpush2.msra.mxu0 0.0
  %2587 = vmatprep.subr.mxu0 0.0
  %2588 = vmatpush2.msra.mxu0 0.0
  %2589 = vmatprep.subr.mxu0 0.0
  %2590 = vmatpush2.msra.mxu0 0.0
  %2591 = vmatprep.subr.mxu0 0.0
  %2592 = vmatpush2.msra.mxu0 0.0
  %2593 = vmatprep.subr.mxu0 0.0
  %2594 = vmatpush2.msra.mxu0 0.0
  %2595 = vmatprep.subr.mxu0 0.0
  %2596 = vmatpush2.msra.mxu0 0.0
  %2597 = vmatprep.subr.mxu0 0.0
  %2598 = vmatpush2.msra.mxu0 0.0
  %2599 = vmatprep.subr.mxu0 0.0
  %2600 = vmatpush2.msra.mxu0 0.0
  %2601 = vmatprep.subr.mxu0 0.0
  %2602 = vmatpush2.msra.mxu0 0.0
  %2603 = vmatprep.subr.mxu0 0.0
  %2604 = vmatpush2.msra.mxu0 0.0
  %2605 = vmatprep.subr.mxu0 0.0
  %2606 = vmatpush2.msra.mxu0 0.0
  %2607 = vmatprep.subr.mxu0 0.0
  %2608 = vmatpush2.msra.mxu0 0.0
  %2609 = vmatprep.mubr.f32.mxu0 0.0
  %2610 = vmatmul.mubr.f32.gmra.mxu0 %v2540
  %v2611 = vpop.f32.mrf.mxu0
  %v2612 = vadd.f32 1e-06, %v2611
  %v2613 = vpop.f32.mrf.mxu0
  %2614 = vmatprep.mubr.f32.mxu0 0.0
  %2615 = vmatmul.mubr.f32.gmra.mxu0 %v2543
  %v2616 = vpop.f32.mrf.mxu0
  %v2617 = vadd.f32 1e-06, %v2616
  %v2618 = vpop.f32.mrf.mxu0
  %2619 = vdwg.mxu0
  %v2620 = vrsqrt.pop %v2612
  %v2621 = vrsqrt.pop %v2617
  %v2622 = vmul.f32 %v2535, %v2620
  %v2623 = vmul.f32 %v2536, %v2621
  %v2624 = vsel %vm124, %v2622, 0.0
  %v2625 = vsel %vm124, %v2623, 0.0
  %v2626 = vadd.f32 %v2624, %v2625
  %v2627 = vrot.slane %v2626, 4
  %v2628 = vadd.f32 %v2626, %v2627
  %v2629 = vrot.slane %v2628, 2
  %v2630 = vadd.f32 %v2628, %v2629
  %v2631 = vrot.slane %v2630, 1
  %v2632 = vadd.f32 %v2630, %v2631
  %v2633 = vrcp.pop 16.0
  %v2634 = vmul.f32 %v2632, %v2633
  %v2635 = vpack.c.bf16 %v2634, %v2634
  %v2636 = vld [vmem:[%s1 + $0x1f0] sm:$0xf]
  %v2637 = vld [vmem:[%s1 + $0x1f4] sm:$0xf]
  %v2638 = vld [vmem:[%s1 + $0x1f8] sm:$0xf]
  %v2639 = vld [vmem:[%s1 + $0x1fc] sm:$0xf]
  %v2640 = vld [vmem:[%s1 + $0x200] sm:$0xf]
  %v2641 = vld [vmem:[%s1 + $0x204] sm:$0xf]
  %v2642 = vld [vmem:[%s1 + $0x208] sm:$0xf]
  %v2643 = vld [vmem:[%s1 + $0x20c] sm:$0xf]
  %v2644 = vld [vmem:[%s2 + $0x150] sm:$0x1]
  %v2653 = vunpack.c.l.b16 %v2636
  %v2654 = vunpack.c.l.b16 %v2637
  %v2655 = vunpack.c.l.b16 %v2638
  %v2656 = vunpack.c.l.b16 %v2639
  %v2657 = vunpack.c.l.b16 %v2640
  %v2658 = vunpack.c.l.b16 %v2641
  %v2659 = vunpack.c.l.b16 %v2642
  %v2660 = vunpack.c.l.b16 %v2643
  %v2661 = vpack.c.b16 %v2654, %v2653
  %v2662 = vpack.c.b16 %v2656, %v2655
  %v2663 = vpack.c.b16 %v2658, %v2657
  %v2664 = vpack.c.b16 %v2660, %v2659
  %v2670 = vsel %vm124, %v2635, 0
  %2672 = vmatprep.subr.bf16.mxu0 0
  %2673 = vmatpush1.bf16.msra.mxu0 0
  %2674 = vmatprep.subr.bf16.mxu0 0
  %2675 = vmatpush1.bf16.msra.mxu0 0
  %2676 = vmatprep.subr.bf16.mxu0 0
  %2677 = vmatpush1.bf16.msra.mxu0 0
  %2678 = vmatprep.subr.bf16.mxu0 0
  %2679 = vmatpush1.bf16.msra.mxu0 0
  %2680 = vmatprep.subr.bf16.mxu0 0
  %2681 = vmatpush1.bf16.msra.mxu0 %v2664
  %2682 = vmatprep.subr.bf16.mxu0 0
  %2683 = vmatpush1.bf16.msra.mxu0 %v2663
  %2684 = vmatprep.subr.bf16.mxu0 0
  %2685 = vmatpush1.bf16.msra.mxu0 %v2662
  %2686 = vmatprep.subr.bf16.mxu0 0
  %2687 = vmatpush1.bf16.msra.mxu0 %v2661
  %2688 = vmatprep.subr.bf16.mxu0 0
  %2689 = vmatpush2.bf16.msra.mxu0 0
  %2690 = vmatprep.subr.bf16.mxu0 0
  %2691 = vmatpush2.bf16.msra.mxu0 0
  %2692 = vmatprep.subr.bf16.mxu0 0
  %2693 = vmatpush2.bf16.msra.mxu0 0
  %2694 = vmatprep.subr.bf16.mxu0 0
  %2695 = vmatpush2.bf16.msra.mxu0 0
  %2696 = vmatprep.subr.bf16.mxu0 0
  %2697 = vmatpush2.bf16.msra.mxu0 0
  %2698 = vmatprep.subr.bf16.mxu0 0
  %2699 = vmatpush2.bf16.msra.mxu0 0
  %2700 = vmatprep.subr.bf16.mxu0 0
  %2701 = vmatpush2.bf16.msra.mxu0 0
  %2702 = vmatprep.subr.bf16.mxu0 0
  %2703 = vmatpush2.bf16.msra.mxu0 0
  %2704 = vmatprep.mubr.bf16.mxu0 0
  %2705 = vmatmul.mubr.bf16.gmra.mxu0 %v2670
  %v2706 = vpop.f32.mrf.mxu0
  %v2707 = vadd.f32 %v2644, %v2706
  %v2708 = vpop.f32.mrf.mxu0
  %v2709 = vpop.f32.mrf.mxu0
  %v2710 = vpop.f32.mrf.mxu0
  %2711 = vdwg.mxu0
  %v2712 = vlaneseq
  %v2713 = vshrl.u32 %v2712, 7
  %v2714 = vsub.s32 0, %v2713
  %v2715 = vrot.slane %v2707, %v2714
  %2716 = vst [vmem:[%s3] sm:$0xff] %v2715
  // Predicated region
  $region14: #{forward.1} parent=0 // pred_check
    _
  $region15: #{forward.1} parent=0 // pred_check_branch
    %2718 = sbr.rel (0) target = $region17
  $region16: #{forward.1} parent=0 // pred_region
    _
  $region17: #{forward.1} parent=0 // pred_fallthru
    _
  // Predicated region
  $region18: #{forward.1} parent=0 // pred_check
    _
  $region19: #{forward.1} parent=0 // pred_check_branch
    %2720 = sbr.rel (0) target = $region21
  $region20: #{forward.1} parent=0 // pred_region
    _
  $region21: #{forward.1} parent=0 // pred_fallthru
    _

</llo_original>
